<compile_context>
chip_gen: v7x
topology: tpu7x:2x2x1
jax: 0.10.0
libtpu: 0.0.40
codegen_flags: <defaults>
</compile_context>

<pallas_src>
import jax
import jax.numpy as jnp
from jax import lax
from jax.experimental import pallas as pl
from jax.experimental.pallas import tpu as pltpu

HEADS = 9
LN_EPS = 1e-5


def _transformer_kernel(x_ref, wqkv_ref, wu_ref, g1_ref, b1_ref,
                        wf1_ref, bf1_ref, wf2_ref, bf2_ref, g2_ref, b2_ref,
                        o_ref):
    t, k = x_ref.shape                 # leading batch dim is pl.Squeezed()
    hk = wu_ref.shape[0]               # heads * k
    h = hk // k

    x = x_ref[...]                                                     # (t, k)

    # ---- fused Q/K/V projection: one lane-dense matmul ----
    qkv = jnp.dot(x, wqkv_ref[...], preferred_element_type=jnp.float32)  # (t, 3*h*k)

    # ---- per-head attention (heads unrolled in-kernel; no head grid axis) ----
    att_heads = []
    for hh in range(h):
        q = qkv[:, hh * k:(hh + 1) * k]                                # (t, k)
        ky = qkv[:, hk + hh * k: hk + (hh + 1) * k]                    # (t, k)
        v = qkv[:, 2 * hk + hh * k: 2 * hk + (hh + 1) * k]             # (t, k)
        # q @ k^T without materializing a transpose (contraction on last dims).
        s = lax.dot_general(q, ky, (((1,), (1,)), ((), ())),
                            preferred_element_type=jnp.float32)        # (t, t)
        # softmax over last axis (no 1/sqrt(k) scaling, matching the module).
        m = jnp.max(s, axis=-1, keepdims=True)
        e = jnp.exp(s - m)
        denom = jnp.sum(e, axis=-1, keepdims=True)
        p = e * pl.reciprocal(denom, approx=True)                      # EUP slot
        att_heads.append(jnp.dot(p, v, preferred_element_type=jnp.float32))
    att = jnp.concatenate(att_heads, axis=-1)                          # (t, h*k)

    # ---- unified projection: one lane-dense matmul ----
    attn_out = jnp.dot(att, wu_ref[...], preferred_element_type=jnp.float32)  # (t,k)

    # ---- residual + LayerNorm1 ----
    r1 = attn_out + x
    mu1 = jnp.mean(r1, axis=-1, keepdims=True)
    c1 = r1 - mu1
    var1 = jnp.mean(c1 * c1, axis=-1, keepdims=True)
    n1 = c1 * lax.rsqrt(var1 + LN_EPS) * g1_ref[...] + b1_ref[...]

    # TODO(synk): nn.Dropout(0.5) is identity in eval mode; train-mode random
    # masking is not reproduced here.

    # ---- feed-forward: Linear(k,5k) + ReLU + Linear(5k,k) ----
    h1 = jnp.dot(n1, wf1_ref[...], preferred_element_type=jnp.float32) + bf1_ref[...]
    h1 = jnp.maximum(h1, 0.0)
    ffn = jnp.dot(h1, wf2_ref[...], preferred_element_type=jnp.float32) + bf2_ref[...]

    # ---- residual + LayerNorm2 ----
    r2 = ffn + n1
    mu2 = jnp.mean(r2, axis=-1, keepdims=True)
    c2 = r2 - mu2
    var2 = jnp.mean(c2 * c2, axis=-1, keepdims=True)
    n2 = c2 * lax.rsqrt(var2 + LN_EPS) * g2_ref[...] + b2_ref[...]

    # single (t, k) store per batch element
    o_ref[...] = n2


def transformer_block_pallas(x, p):
    """x: (b, t, k). p: pre-fused/transposed params from prepare_params()."""
    b, t, k = x.shape
    hk = p["w_u"].shape[0]
    kf = p["w_ff1"].shape[1]

    def full_spec(shape):
        # full-array, VMEM-resident for the whole call (constant index_map)
        return pl.BlockSpec(shape, lambda i: (0,) * len(shape))

    return pl.pallas_call(
        _transformer_kernel,
        out_shape=jax.ShapeDtypeStruct((b, t, k), jnp.float32),
        grid_spec=pltpu.PrefetchScalarGridSpec(
            num_scalar_prefetch=0,
            grid=(b,),
            in_specs=[
                pl.BlockSpec((pl.Squeezed(), t, k), lambda i: (i, 0, 0)),  # x
                full_spec((k, 3 * hk)),          # fused [Wq^T | Wk^T | Wv^T]
                full_spec((hk, k)),              # Wu^T
                full_spec((1, k)),               # LN1 gamma
                full_spec((1, k)),               # LN1 beta
                full_spec((k, kf)),              # W_ff1^T
                full_spec((1, kf)),              # b_ff1
                full_spec((kf, k)),              # W_ff2^T
                full_spec((1, k)),               # b_ff2
                full_spec((1, k)),               # LN2 gamma
                full_spec((1, k)),               # LN2 beta
            ],
            out_specs=pl.BlockSpec((pl.Squeezed(), t, k), lambda i: (i, 0, 0)),
        ),
        compiler_params=pltpu.CompilerParams(
            dimension_semantics=("parallel",)),   # batch axis -> v7x megacore
    )(x, p["w_qkv"], p["w_u"], p["g1"], p["b1"],
      p["w_ff1"], p["b_ff1"], p["w_ff2"], p["b_ff2"], p["g2"], p["b2"])


def init_raw_params(key, k, heads):
    """PyTorch-style parameter shapes/init (Linear weight = (out, in))."""
    hk, kf = heads * k, 5 * k
    ks = jax.random.split(key, 12)
    s_k, s_hk, s_kf = 1.0 / jnp.sqrt(k), 1.0 / jnp.sqrt(hk), 1.0 / jnp.sqrt(kf)
    u = lambda kk, shape, s: jax.random.uniform(kk, shape, jnp.float32, -s, s)
    return dict(
        wq=u(ks[0], (hk, k), s_k),      # toqueries.weight
        wk=u(ks[1], (hk, k), s_k),      # tokeys.weight
        wv=u(ks[2], (hk, k), s_k),      # tovalues.weight
        wu=u(ks[3], (k, hk), s_hk),     # unified.weight
        w1=u(ks[4], (kf, k), s_k),      # ff[0].weight
        bias1=u(ks[5], (kf,), s_k),     # ff[0].bias
        w2=u(ks[6], (k, kf), s_kf),     # ff[2].weight
        bias2=u(ks[7], (k,), s_kf),     # ff[2].bias
        # LayerNorm params randomized (instead of ones/zeros) to exercise the path.
        g1=1.0 + 0.2 * jax.random.normal(ks[8], (k,), jnp.float32),
        b1=0.1 * jax.random.normal(ks[9], (k,), jnp.float32),
        g2=1.0 + 0.2 * jax.random.normal(ks[10], (k,), jnp.float32),
        b2=0.1 * jax.random.normal(ks[11], (k,), jnp.float32),
    )


def prepare_params(raw):
    """Host-side weight fusion/transposition, done ONCE at init (not per call)."""
    return dict(
        w_qkv=jnp.concatenate([raw["wq"].T, raw["wk"].T, raw["wv"].T], axis=1),
        w_u=raw["wu"].T,
        g1=raw["g1"].reshape(1, -1), b1=raw["b1"].reshape(1, -1),
        w_ff1=raw["w1"].T, b_ff1=raw["bias1"].reshape(1, -1),
        w_ff2=raw["w2"].T, b_ff2=raw["bias2"].reshape(1, -1),
        g2=raw["g2"].reshape(1, -1), b2=raw["b2"].reshape(1, -1),
    )


def _layernorm_ref(x, g, b):
    mu = jnp.mean(x, axis=-1, keepdims=True)
    var = jnp.mean((x - mu) ** 2, axis=-1, keepdims=True)
    return (x - mu) * lax.rsqrt(var + LN_EPS) * g + b


def transformer_ref(x, raw, heads):
    """Pure-JAX reference mirroring the PyTorch `transformer.forward` (eval mode)."""
    b, t, k = x.shape
    h = heads
    queries = (x @ raw["wq"].T).reshape(b, t, h, k)
    keys = (x @ raw["wk"].T).reshape(b, t, h, k)
    values = (x @ raw["wv"].T).reshape(b, t, h, k)
    queries = queries.transpose(0, 2, 1, 3).reshape(b * h, t, k)
    keys = keys.transpose(0, 2, 1, 3).reshape(b * h, t, k)
    values = values.transpose(0, 2, 1, 3).reshape(b * h, t, k)
    dot = jnp.einsum("bik,bjk->bij", queries, keys)
    dot = jax.nn.softmax(dot, axis=2)
    out = jnp.einsum("bij,bjk->bik", dot, values).reshape(b, h, t, k)
    out = out.transpose(0, 2, 1, 3).reshape(b, t, h * k)
    attn = out @ raw["wu"].T
    n1 = _layernorm_ref(attn + x, raw["g1"], raw["b1"])
    # dropout: identity (eval)
    ff = jnp.maximum(n1 @ raw["w1"].T + raw["bias1"], 0.0) @ raw["w2"].T + raw["bias2"]
    n2 = _layernorm_ref(ff + n1, raw["g2"], raw["b2"])
    return n2


if __name__ == "__main__":
    # Small shapes consistent with the module: batch=2, seq=8, hidden k=32, heads=9.
    b, t, k = 2, 8, 32

    key = jax.random.PRNGKey(0)
    kx, kp = jax.random.split(key)
    x = jax.random.normal(kx, (b, t, k), dtype=jnp.float32)

    raw = init_raw_params(kp, k, HEADS)
    params = prepare_params(raw)          # once, outside the per-call path

    out = transformer_block_pallas(x, params)
    out = jax.block_until_ready(out)

    ref = transformer_ref(x, raw, HEADS)
    assert out.shape == (b, t, k)
    max_err = float(jnp.max(jnp.abs(out - ref)))
    # Tolerance accounts for the approximate (EUP) reciprocal in the softmax.
    assert max_err < 1e-2, max_err

    print("KERNEL_OK")
</pallas_src>

<mosaic_0001>
module attributes {stable_mosaic.version = 11 : i64} {
  func.func @_transformer_kernel(%arg0: i32, %arg1: memref<1x8x32xf32, #tpu.memory_space<vmem>>, %arg2: memref<32x864xf32, #tpu.memory_space<vmem>>, %arg3: memref<288x32xf32, #tpu.memory_space<vmem>>, %arg4: memref<1x32xf32, #tpu.memory_space<vmem>>, %arg5: memref<1x32xf32, #tpu.memory_space<vmem>>, %arg6: memref<32x160xf32, #tpu.memory_space<vmem>>, %arg7: memref<1x160xf32, #tpu.memory_space<vmem>>, %arg8: memref<160x32xf32, #tpu.memory_space<vmem>>, %arg9: memref<1x32xf32, #tpu.memory_space<vmem>>, %arg10: memref<1x32xf32, #tpu.memory_space<vmem>>, %arg11: memref<1x32xf32, #tpu.memory_space<vmem>>, %arg12: memref<1x8x32xf32, #tpu.memory_space<vmem>>) attributes {dimension_semantics = [#tpu.dimension_semantics<parallel>], iteration_bounds = array<i64: 2>, scalar_prefetch = 0 : i64, scratch_operands = 0 : i64, tpu.core_type = #tpu.core_type<tc>, window_params = [{transform_indices = @transform_0, window_bounds = array<i64: 1, 8, 32>}, {pipeline_mode = #tpu.pipeline_mode<synchronous>, transform_indices = @transform_1, window_bounds = array<i64: 32, 864>}, {pipeline_mode = #tpu.pipeline_mode<synchronous>, transform_indices = @transform_2, window_bounds = array<i64: 288, 32>}, {pipeline_mode = #tpu.pipeline_mode<synchronous>, transform_indices = @transform_3, window_bounds = array<i64: 1, 32>}, {pipeline_mode = #tpu.pipeline_mode<synchronous>, transform_indices = @transform_4, window_bounds = array<i64: 1, 32>}, {pipeline_mode = #tpu.pipeline_mode<synchronous>, transform_indices = @transform_5, window_bounds = array<i64: 32, 160>}, {pipeline_mode = #tpu.pipeline_mode<synchronous>, transform_indices = @transform_6, window_bounds = array<i64: 1, 160>}, {pipeline_mode = #tpu.pipeline_mode<synchronous>, transform_indices = @transform_7, window_bounds = array<i64: 160, 32>}, {pipeline_mode = #tpu.pipeline_mode<synchronous>, transform_indices = @transform_8, window_bounds = array<i64: 1, 32>}, {pipeline_mode = #tpu.pipeline_mode<synchronous>, transform_indices = @transform_9, window_bounds = array<i64: 1, 32>}, {pipeline_mode = #tpu.pipeline_mode<synchronous>, transform_indices = @transform_10, window_bounds = array<i64: 1, 32>}, {transform_indices = @transform_11, window_bounds = array<i64: 1, 8, 32>}]} {
    %c0 = arith.constant 0 : index
    %c0_0 = arith.constant 0 : index
    %c0_1 = arith.constant 0 : index
    %0 = vector.load %arg1[%c0, %c0_0, %c0_1] : memref<1x8x32xf32, #tpu.memory_space<vmem>>, vector<1x8x32xf32>
    %1 = vector.shape_cast %0 : vector<1x8x32xf32> to vector<8x32xf32>
    %c0_2 = arith.constant 0 : index
    %c0_3 = arith.constant 0 : index
    %2 = vector.load %arg2[%c0_2, %c0_3] : memref<32x864xf32, #tpu.memory_space<vmem>>, vector<32x864xf32>
    %cst = arith.constant dense<0.000000e+00> : vector<8x864xf32>
    %3 = tpu.matmul %1, %2, %cst {dimension_numbers = #tpu.dot_dimension_numbers<[1], [0], [0], [1], [0, 0, 1, 1], [], []>} : vector<8x32xf32>, vector<32x864xf32>, vector<8x864xf32> -> vector<8x864xf32>
    %4 = vector.extract_strided_slice %3 {offsets = [0, 0], sizes = [8, 32], strides = [1, 1]} : vector<8x864xf32> to vector<8x32xf32>
    %5 = vector.extract_strided_slice %3 {offsets = [0, 288], sizes = [8, 32], strides = [1, 1]} : vector<8x864xf32> to vector<8x32xf32>
    %6 = vector.extract_strided_slice %3 {offsets = [0, 576], sizes = [8, 32], strides = [1, 1]} : vector<8x864xf32> to vector<8x32xf32>
    %cst_4 = arith.constant dense<0.000000e+00> : vector<8x8xf32>
    %7 = tpu.matmul %4, %5, %cst_4 {dimension_numbers = #tpu.dot_dimension_numbers<[1], [1], [0], [0], [0, 0, 1, 0], [], []>} : vector<8x32xf32>, vector<8x32xf32>, vector<8x8xf32> -> vector<8x8xf32>
    %cst_5 = arith.constant dense<0xFF800000> : vector<8xf32>
    %8 = vector.multi_reduction <maximumf>, %7, %cst_5 [1] : vector<8x8xf32> to vector<8xf32>
    %9 = vector.shape_cast %8 : vector<8xf32> to vector<8x1xf32>
    %10 = vector.broadcast %9 : vector<8x1xf32> to vector<8x8xf32>
    %11 = arith.subf %7, %10 : vector<8x8xf32>
    %12 = math.exp %11 : vector<8x8xf32>
    %cst_6 = arith.constant dense<0.000000e+00> : vector<8xf32>
    %13 = vector.multi_reduction <add>, %12, %cst_6 [1] : vector<8x8xf32> to vector<8xf32>
    %14 = vector.shape_cast %13 : vector<8xf32> to vector<8x1xf32>
    %15 = tpu.reciprocal %14 {approx = true} : vector<8x1xf32> -> vector<8x1xf32>
    %16 = vector.broadcast %15 : vector<8x1xf32> to vector<8x8xf32>
    %17 = arith.mulf %12, %16 : vector<8x8xf32>
    %cst_7 = arith.constant dense<0.000000e+00> : vector<8x32xf32>
    %18 = tpu.matmul %17, %6, %cst_7 {dimension_numbers = #tpu.dot_dimension_numbers<[1], [0], [0], [1], [0, 0, 1, 1], [], []>} : vector<8x8xf32>, vector<8x32xf32>, vector<8x32xf32> -> vector<8x32xf32>
    %19 = vector.extract_strided_slice %3 {offsets = [0, 32], sizes = [8, 32], strides = [1, 1]} : vector<8x864xf32> to vector<8x32xf32>
    %20 = vector.extract_strided_slice %3 {offsets = [0, 320], sizes = [8, 32], strides = [1, 1]} : vector<8x864xf32> to vector<8x32xf32>
    %21 = vector.extract_strided_slice %3 {offsets = [0, 608], sizes = [8, 32], strides = [1, 1]} : vector<8x864xf32> to vector<8x32xf32>
    %cst_8 = arith.constant dense<0.000000e+00> : vector<8x8xf32>
    %22 = tpu.matmul %19, %20, %cst_8 {dimension_numbers = #tpu.dot_dimension_numbers<[1], [1], [0], [0], [0, 0, 1, 0], [], []>} : vector<8x32xf32>, vector<8x32xf32>, vector<8x8xf32> -> vector<8x8xf32>
    %cst_9 = arith.constant dense<0xFF800000> : vector<8xf32>
    %23 = vector.multi_reduction <maximumf>, %22, %cst_9 [1] : vector<8x8xf32> to vector<8xf32>
    %24 = vector.shape_cast %23 : vector<8xf32> to vector<8x1xf32>
    %25 = vector.broadcast %24 : vector<8x1xf32> to vector<8x8xf32>
    %26 = arith.subf %22, %25 : vector<8x8xf32>
    %27 = math.exp %26 : vector<8x8xf32>
    %cst_10 = arith.constant dense<0.000000e+00> : vector<8xf32>
    %28 = vector.multi_reduction <add>, %27, %cst_10 [1] : vector<8x8xf32> to vector<8xf32>
    %29 = vector.shape_cast %28 : vector<8xf32> to vector<8x1xf32>
    %30 = tpu.reciprocal %29 {approx = true} : vector<8x1xf32> -> vector<8x1xf32>
    %31 = vector.broadcast %30 : vector<8x1xf32> to vector<8x8xf32>
    %32 = arith.mulf %27, %31 : vector<8x8xf32>
    %cst_11 = arith.constant dense<0.000000e+00> : vector<8x32xf32>
    %33 = tpu.matmul %32, %21, %cst_11 {dimension_numbers = #tpu.dot_dimension_numbers<[1], [0], [0], [1], [0, 0, 1, 1], [], []>} : vector<8x8xf32>, vector<8x32xf32>, vector<8x32xf32> -> vector<8x32xf32>
    %34 = vector.extract_strided_slice %3 {offsets = [0, 64], sizes = [8, 32], strides = [1, 1]} : vector<8x864xf32> to vector<8x32xf32>
    %35 = vector.extract_strided_slice %3 {offsets = [0, 352], sizes = [8, 32], strides = [1, 1]} : vector<8x864xf32> to vector<8x32xf32>
    %36 = vector.extract_strided_slice %3 {offsets = [0, 640], sizes = [8, 32], strides = [1, 1]} : vector<8x864xf32> to vector<8x32xf32>
    %cst_12 = arith.constant dense<0.000000e+00> : vector<8x8xf32>
    %37 = tpu.matmul %34, %35, %cst_12 {dimension_numbers = #tpu.dot_dimension_numbers<[1], [1], [0], [0], [0, 0, 1, 0], [], []>} : vector<8x32xf32>, vector<8x32xf32>, vector<8x8xf32> -> vector<8x8xf32>
    %cst_13 = arith.constant dense<0xFF800000> : vector<8xf32>
    %38 = vector.multi_reduction <maximumf>, %37, %cst_13 [1] : vector<8x8xf32> to vector<8xf32>
    %39 = vector.shape_cast %38 : vector<8xf32> to vector<8x1xf32>
    %40 = vector.broadcast %39 : vector<8x1xf32> to vector<8x8xf32>
    %41 = arith.subf %37, %40 : vector<8x8xf32>
    %42 = math.exp %41 : vector<8x8xf32>
    %cst_14 = arith.constant dense<0.000000e+00> : vector<8xf32>
    %43 = vector.multi_reduction <add>, %42, %cst_14 [1] : vector<8x8xf32> to vector<8xf32>
    %44 = vector.shape_cast %43 : vector<8xf32> to vector<8x1xf32>
    %45 = tpu.reciprocal %44 {approx = true} : vector<8x1xf32> -> vector<8x1xf32>
    %46 = vector.broadcast %45 : vector<8x1xf32> to vector<8x8xf32>
    %47 = arith.mulf %42, %46 : vector<8x8xf32>
    %cst_15 = arith.constant dense<0.000000e+00> : vector<8x32xf32>
    %48 = tpu.matmul %47, %36, %cst_15 {dimension_numbers = #tpu.dot_dimension_numbers<[1], [0], [0], [1], [0, 0, 1, 1], [], []>} : vector<8x8xf32>, vector<8x32xf32>, vector<8x32xf32> -> vector<8x32xf32>
    %49 = vector.extract_strided_slice %3 {offsets = [0, 96], sizes = [8, 32], strides = [1, 1]} : vector<8x864xf32> to vector<8x32xf32>
    %50 = vector.extract_strided_slice %3 {offsets = [0, 384], sizes = [8, 32], strides = [1, 1]} : vector<8x864xf32> to vector<8x32xf32>
    %51 = vector.extract_strided_slice %3 {offsets = [0, 672], sizes = [8, 32], strides = [1, 1]} : vector<8x864xf32> to vector<8x32xf32>
    %cst_16 = arith.constant dense<0.000000e+00> : vector<8x8xf32>
    %52 = tpu.matmul %49, %50, %cst_16 {dimension_numbers = #tpu.dot_dimension_numbers<[1], [1], [0], [0], [0, 0, 1, 0], [], []>} : vector<8x32xf32>, vector<8x32xf32>, vector<8x8xf32> -> vector<8x8xf32>
    %cst_17 = arith.constant dense<0xFF800000> : vector<8xf32>
    %53 = vector.multi_reduction <maximumf>, %52, %cst_17 [1] : vector<8x8xf32> to vector<8xf32>
    %54 = vector.shape_cast %53 : vector<8xf32> to vector<8x1xf32>
    %55 = vector.broadcast %54 : vector<8x1xf32> to vector<8x8xf32>
    %56 = arith.subf %52, %55 : vector<8x8xf32>
    %57 = math.exp %56 : vector<8x8xf32>
    %cst_18 = arith.constant dense<0.000000e+00> : vector<8xf32>
    %58 = vector.multi_reduction <add>, %57, %cst_18 [1] : vector<8x8xf32> to vector<8xf32>
    %59 = vector.shape_cast %58 : vector<8xf32> to vector<8x1xf32>
    %60 = tpu.reciprocal %59 {approx = true} : vector<8x1xf32> -> vector<8x1xf32>
    %61 = vector.broadcast %60 : vector<8x1xf32> to vector<8x8xf32>
    %62 = arith.mulf %57, %61 : vector<8x8xf32>
    %cst_19 = arith.constant dense<0.000000e+00> : vector<8x32xf32>
    %63 = tpu.matmul %62, %51, %cst_19 {dimension_numbers = #tpu.dot_dimension_numbers<[1], [0], [0], [1], [0, 0, 1, 1], [], []>} : vector<8x8xf32>, vector<8x32xf32>, vector<8x32xf32> -> vector<8x32xf32>
    %64 = vector.extract_strided_slice %3 {offsets = [0, 128], sizes = [8, 32], strides = [1, 1]} : vector<8x864xf32> to vector<8x32xf32>
    %65 = vector.extract_strided_slice %3 {offsets = [0, 416], sizes = [8, 32], strides = [1, 1]} : vector<8x864xf32> to vector<8x32xf32>
    %66 = vector.extract_strided_slice %3 {offsets = [0, 704], sizes = [8, 32], strides = [1, 1]} : vector<8x864xf32> to vector<8x32xf32>
    %cst_20 = arith.constant dense<0.000000e+00> : vector<8x8xf32>
    %67 = tpu.matmul %64, %65, %cst_20 {dimension_numbers = #tpu.dot_dimension_numbers<[1], [1], [0], [0], [0, 0, 1, 0], [], []>} : vector<8x32xf32>, vector<8x32xf32>, vector<8x8xf32> -> vector<8x8xf32>
    %cst_21 = arith.constant dense<0xFF800000> : vector<8xf32>
    %68 = vector.multi_reduction <maximumf>, %67, %cst_21 [1] : vector<8x8xf32> to vector<8xf32>
    %69 = vector.shape_cast %68 : vector<8xf32> to vector<8x1xf32>
    %70 = vector.broadcast %69 : vector<8x1xf32> to vector<8x8xf32>
    %71 = arith.subf %67, %70 : vector<8x8xf32>
    %72 = math.exp %71 : vector<8x8xf32>
    %cst_22 = arith.constant dense<0.000000e+00> : vector<8xf32>
    %73 = vector.multi_reduction <add>, %72, %cst_22 [1] : vector<8x8xf32> to vector<8xf32>
    %74 = vector.shape_cast %73 : vector<8xf32> to vector<8x1xf32>
    %75 = tpu.reciprocal %74 {approx = true} : vector<8x1xf32> -> vector<8x1xf32>
    %76 = vector.broadcast %75 : vector<8x1xf32> to vector<8x8xf32>
    %77 = arith.mulf %72, %76 : vector<8x8xf32>
    %cst_23 = arith.constant dense<0.000000e+00> : vector<8x32xf32>
    %78 = tpu.matmul %77, %66, %cst_23 {dimension_numbers = #tpu.dot_dimension_numbers<[1], [0], [0], [1], [0, 0, 1, 1], [], []>} : vector<8x8xf32>, vector<8x32xf32>, vector<8x32xf32> -> vector<8x32xf32>
    %79 = vector.extract_strided_slice %3 {offsets = [0, 160], sizes = [8, 32], strides = [1, 1]} : vector<8x864xf32> to vector<8x32xf32>
    %80 = vector.extract_strided_slice %3 {offsets = [0, 448], sizes = [8, 32], strides = [1, 1]} : vector<8x864xf32> to vector<8x32xf32>
    %81 = vector.extract_strided_slice %3 {offsets = [0, 736], sizes = [8, 32], strides = [1, 1]} : vector<8x864xf32> to vector<8x32xf32>
    %cst_24 = arith.constant dense<0.000000e+00> : vector<8x8xf32>
    %82 = tpu.matmul %79, %80, %cst_24 {dimension_numbers = #tpu.dot_dimension_numbers<[1], [1], [0], [0], [0, 0, 1, 0], [], []>} : vector<8x32xf32>, vector<8x32xf32>, vector<8x8xf32> -> vector<8x8xf32>
    %cst_25 = arith.constant dense<0xFF800000> : vector<8xf32>
    %83 = vector.multi_reduction <maximumf>, %82, %cst_25 [1] : vector<8x8xf32> to vector<8xf32>
    %84 = vector.shape_cast %83 : vector<8xf32> to vector<8x1xf32>
    %85 = vector.broadcast %84 : vector<8x1xf32> to vector<8x8xf32>
    %86 = arith.subf %82, %85 : vector<8x8xf32>
    %87 = math.exp %86 : vector<8x8xf32>
    %cst_26 = arith.constant dense<0.000000e+00> : vector<8xf32>
    %88 = vector.multi_reduction <add>, %87, %cst_26 [1] : vector<8x8xf32> to vector<8xf32>
    %89 = vector.shape_cast %88 : vector<8xf32> to vector<8x1xf32>
    %90 = tpu.reciprocal %89 {approx = true} : vector<8x1xf32> -> vector<8x1xf32>
    %91 = vector.broadcast %90 : vector<8x1xf32> to vector<8x8xf32>
    %92 = arith.mulf %87, %91 : vector<8x8xf32>
    %cst_27 = arith.constant dense<0.000000e+00> : vector<8x32xf32>
    %93 = tpu.matmul %92, %81, %cst_27 {dimension_numbers = #tpu.dot_dimension_numbers<[1], [0], [0], [1], [0, 0, 1, 1], [], []>} : vector<8x8xf32>, vector<8x32xf32>, vector<8x32xf32> -> vector<8x32xf32>
    %94 = vector.extract_strided_slice %3 {offsets = [0, 192], sizes = [8, 32], strides = [1, 1]} : vector<8x864xf32> to vector<8x32xf32>
    %95 = vector.extract_strided_slice %3 {offsets = [0, 480], sizes = [8, 32], strides = [1, 1]} : vector<8x864xf32> to vector<8x32xf32>
    %96 = vector.extract_strided_slice %3 {offsets = [0, 768], sizes = [8, 32], strides = [1, 1]} : vector<8x864xf32> to vector<8x32xf32>
    %cst_28 = arith.constant dense<0.000000e+00> : vector<8x8xf32>
    %97 = tpu.matmul %94, %95, %cst_28 {dimension_numbers = #tpu.dot_dimension_numbers<[1], [1], [0], [0], [0, 0, 1, 0], [], []>} : vector<8x32xf32>, vector<8x32xf32>, vector<8x8xf32> -> vector<8x8xf32>
    %cst_29 = arith.constant dense<0xFF800000> : vector<8xf32>
    %98 = vector.multi_reduction <maximumf>, %97, %cst_29 [1] : vector<8x8xf32> to vector<8xf32>
    %99 = vector.shape_cast %98 : vector<8xf32> to vector<8x1xf32>
    %100 = vector.broadcast %99 : vector<8x1xf32> to vector<8x8xf32>
    %101 = arith.subf %97, %100 : vector<8x8xf32>
    %102 = math.exp %101 : vector<8x8xf32>
    %cst_30 = arith.constant dense<0.000000e+00> : vector<8xf32>
    %103 = vector.multi_reduction <add>, %102, %cst_30 [1] : vector<8x8xf32> to vector<8xf32>
    %104 = vector.shape_cast %103 : vector<8xf32> to vector<8x1xf32>
    %105 = tpu.reciprocal %104 {approx = true} : vector<8x1xf32> -> vector<8x1xf32>
    %106 = vector.broadcast %105 : vector<8x1xf32> to vector<8x8xf32>
    %107 = arith.mulf %102, %106 : vector<8x8xf32>
    %cst_31 = arith.constant dense<0.000000e+00> : vector<8x32xf32>
    %108 = tpu.matmul %107, %96, %cst_31 {dimension_numbers = #tpu.dot_dimension_numbers<[1], [0], [0], [1], [0, 0, 1, 1], [], []>} : vector<8x8xf32>, vector<8x32xf32>, vector<8x32xf32> -> vector<8x32xf32>
    %109 = vector.extract_strided_slice %3 {offsets = [0, 224], sizes = [8, 32], strides = [1, 1]} : vector<8x864xf32> to vector<8x32xf32>
    %110 = vector.extract_strided_slice %3 {offsets = [0, 512], sizes = [8, 32], strides = [1, 1]} : vector<8x864xf32> to vector<8x32xf32>
    %111 = vector.extract_strided_slice %3 {offsets = [0, 800], sizes = [8, 32], strides = [1, 1]} : vector<8x864xf32> to vector<8x32xf32>
    %cst_32 = arith.constant dense<0.000000e+00> : vector<8x8xf32>
    %112 = tpu.matmul %109, %110, %cst_32 {dimension_numbers = #tpu.dot_dimension_numbers<[1], [1], [0], [0], [0, 0, 1, 0], [], []>} : vector<8x32xf32>, vector<8x32xf32>, vector<8x8xf32> -> vector<8x8xf32>
    %cst_33 = arith.constant dense<0xFF800000> : vector<8xf32>
    %113 = vector.multi_reduction <maximumf>, %112, %cst_33 [1] : vector<8x8xf32> to vector<8xf32>
    %114 = vector.shape_cast %113 : vector<8xf32> to vector<8x1xf32>
    %115 = vector.broadcast %114 : vector<8x1xf32> to vector<8x8xf32>
    %116 = arith.subf %112, %115 : vector<8x8xf32>
    %117 = math.exp %116 : vector<8x8xf32>
    %cst_34 = arith.constant dense<0.000000e+00> : vector<8xf32>
    %118 = vector.multi_reduction <add>, %117, %cst_34 [1] : vector<8x8xf32> to vector<8xf32>
    %119 = vector.shape_cast %118 : vector<8xf32> to vector<8x1xf32>
    %120 = tpu.reciprocal %119 {approx = true} : vector<8x1xf32> -> vector<8x1xf32>
    %121 = vector.broadcast %120 : vector<8x1xf32> to vector<8x8xf32>
    %122 = arith.mulf %117, %121 : vector<8x8xf32>
    %cst_35 = arith.constant dense<0.000000e+00> : vector<8x32xf32>
    %123 = tpu.matmul %122, %111, %cst_35 {dimension_numbers = #tpu.dot_dimension_numbers<[1], [0], [0], [1], [0, 0, 1, 1], [], []>} : vector<8x8xf32>, vector<8x32xf32>, vector<8x32xf32> -> vector<8x32xf32>
    %124 = vector.extract_strided_slice %3 {offsets = [0, 256], sizes = [8, 32], strides = [1, 1]} : vector<8x864xf32> to vector<8x32xf32>
    %125 = vector.extract_strided_slice %3 {offsets = [0, 544], sizes = [8, 32], strides = [1, 1]} : vector<8x864xf32> to vector<8x32xf32>
    %126 = vector.extract_strided_slice %3 {offsets = [0, 832], sizes = [8, 32], strides = [1, 1]} : vector<8x864xf32> to vector<8x32xf32>
    %cst_36 = arith.constant dense<0.000000e+00> : vector<8x8xf32>
    %127 = tpu.matmul %124, %125, %cst_36 {dimension_numbers = #tpu.dot_dimension_numbers<[1], [1], [0], [0], [0, 0, 1, 0], [], []>} : vector<8x32xf32>, vector<8x32xf32>, vector<8x8xf32> -> vector<8x8xf32>
    %cst_37 = arith.constant dense<0xFF800000> : vector<8xf32>
    %128 = vector.multi_reduction <maximumf>, %127, %cst_37 [1] : vector<8x8xf32> to vector<8xf32>
    %129 = vector.shape_cast %128 : vector<8xf32> to vector<8x1xf32>
    %130 = vector.broadcast %129 : vector<8x1xf32> to vector<8x8xf32>
    %131 = arith.subf %127, %130 : vector<8x8xf32>
    %132 = math.exp %131 : vector<8x8xf32>
    %cst_38 = arith.constant dense<0.000000e+00> : vector<8xf32>
    %133 = vector.multi_reduction <add>, %132, %cst_38 [1] : vector<8x8xf32> to vector<8xf32>
    %134 = vector.shape_cast %133 : vector<8xf32> to vector<8x1xf32>
    %135 = tpu.reciprocal %134 {approx = true} : vector<8x1xf32> -> vector<8x1xf32>
    %136 = vector.broadcast %135 : vector<8x1xf32> to vector<8x8xf32>
    %137 = arith.mulf %132, %136 : vector<8x8xf32>
    %cst_39 = arith.constant dense<0.000000e+00> : vector<8x32xf32>
    %138 = tpu.matmul %137, %126, %cst_39 {dimension_numbers = #tpu.dot_dimension_numbers<[1], [0], [0], [1], [0, 0, 1, 1], [], []>} : vector<8x8xf32>, vector<8x32xf32>, vector<8x32xf32> -> vector<8x32xf32>
    %139 = tpu.concatenate %18, %33, %48, %63, %78, %93, %108, %123, %138 in 1 : vector<8x32xf32>, vector<8x32xf32>, vector<8x32xf32>, vector<8x32xf32>, vector<8x32xf32>, vector<8x32xf32>, vector<8x32xf32>, vector<8x32xf32>, vector<8x32xf32> -> vector<8x288xf32>
    %c0_40 = arith.constant 0 : index
    %c0_41 = arith.constant 0 : index
    %140 = vector.load %arg3[%c0_40, %c0_41] : memref<288x32xf32, #tpu.memory_space<vmem>>, vector<288x32xf32>
    %cst_42 = arith.constant dense<0.000000e+00> : vector<8x32xf32>
    %141 = tpu.matmul %139, %140, %cst_42 {dimension_numbers = #tpu.dot_dimension_numbers<[1], [0], [0], [1], [0, 0, 1, 1], [], []>} : vector<8x288xf32>, vector<288x32xf32>, vector<8x32xf32> -> vector<8x32xf32>
    %142 = arith.addf %141, %1 : vector<8x32xf32>
    %cst_43 = arith.constant dense<0.000000e+00> : vector<8xf32>
    %143 = vector.multi_reduction <add>, %142, %cst_43 [1] : vector<8x32xf32> to vector<8xf32>
    %144 = vector.shape_cast %143 : vector<8xf32> to vector<8x1xf32>
    %cst_44 = arith.constant 3.200000e+01 : f32
    %145 = vector.broadcast %cst_44 : f32 to vector<8x1xf32>
    %146 = arith.divf %144, %145 : vector<8x1xf32>
    %147 = vector.broadcast %146 : vector<8x1xf32> to vector<8x32xf32>
    %148 = arith.subf %142, %147 : vector<8x32xf32>
    %149 = arith.mulf %148, %148 : vector<8x32xf32>
    %cst_45 = arith.constant dense<0.000000e+00> : vector<8xf32>
    %150 = vector.multi_reduction <add>, %149, %cst_45 [1] : vector<8x32xf32> to vector<8xf32>
    %151 = vector.shape_cast %150 : vector<8xf32> to vector<8x1xf32>
    %cst_46 = arith.constant 3.200000e+01 : f32
    %152 = vector.broadcast %cst_46 : f32 to vector<8x1xf32>
    %153 = arith.divf %151, %152 : vector<8x1xf32>
    %cst_47 = arith.constant 9.99999974E-6 : f32
    %154 = vector.broadcast %cst_47 : f32 to vector<8x1xf32>
    %155 = arith.addf %153, %154 : vector<8x1xf32>
    %156 = math.rsqrt %155 : vector<8x1xf32>
    %157 = vector.broadcast %156 : vector<8x1xf32> to vector<8x32xf32>
    %158 = arith.mulf %148, %157 : vector<8x32xf32>
    %c0_48 = arith.constant 0 : index
    %c0_49 = arith.constant 0 : index
    %159 = vector.load %arg4[%c0_48, %c0_49] : memref<1x32xf32, #tpu.memory_space<vmem>>, vector<1x32xf32>
    %160 = vector.broadcast %159 : vector<1x32xf32> to vector<8x32xf32>
    %161 = arith.mulf %158, %160 : vector<8x32xf32>
    %c0_50 = arith.constant 0 : index
    %c0_51 = arith.constant 0 : index
    %162 = vector.load %arg5[%c0_50, %c0_51] : memref<1x32xf32, #tpu.memory_space<vmem>>, vector<1x32xf32>
    %163 = vector.broadcast %162 : vector<1x32xf32> to vector<8x32xf32>
    %164 = arith.addf %161, %163 : vector<8x32xf32>
    %c0_52 = arith.constant 0 : index
    %c0_53 = arith.constant 0 : index
    %165 = vector.load %arg6[%c0_52, %c0_53] : memref<32x160xf32, #tpu.memory_space<vmem>>, vector<32x160xf32>
    %cst_54 = arith.constant dense<0.000000e+00> : vector<8x160xf32>
    %166 = tpu.matmul %164, %165, %cst_54 {dimension_numbers = #tpu.dot_dimension_numbers<[1], [0], [0], [1], [0, 0, 1, 1], [], []>} : vector<8x32xf32>, vector<32x160xf32>, vector<8x160xf32> -> vector<8x160xf32>
    %c0_55 = arith.constant 0 : index
    %c0_56 = arith.constant 0 : index
    %167 = vector.load %arg7[%c0_55, %c0_56] : memref<1x160xf32, #tpu.memory_space<vmem>>, vector<1x160xf32>
    %168 = vector.broadcast %167 : vector<1x160xf32> to vector<8x160xf32>
    %169 = arith.addf %166, %168 : vector<8x160xf32>
    %cst_57 = arith.constant 0.000000e+00 : f32
    %170 = vector.broadcast %cst_57 : f32 to vector<8x160xf32>
    %171 = arith.maximumf %169, %170 : vector<8x160xf32>
    %c0_58 = arith.constant 0 : index
    %c0_59 = arith.constant 0 : index
    %172 = vector.load %arg8[%c0_58, %c0_59] : memref<160x32xf32, #tpu.memory_space<vmem>>, vector<160x32xf32>
    %cst_60 = arith.constant dense<0.000000e+00> : vector<8x32xf32>
    %173 = tpu.matmul %171, %172, %cst_60 {dimension_numbers = #tpu.dot_dimension_numbers<[1], [0], [0], [1], [0, 0, 1, 1], [], []>} : vector<8x160xf32>, vector<160x32xf32>, vector<8x32xf32> -> vector<8x32xf32>
    %c0_61 = arith.constant 0 : index
    %c0_62 = arith.constant 0 : index
    %174 = vector.load %arg9[%c0_61, %c0_62] : memref<1x32xf32, #tpu.memory_space<vmem>>, vector<1x32xf32>
    %175 = vector.broadcast %174 : vector<1x32xf32> to vector<8x32xf32>
    %176 = arith.addf %173, %175 : vector<8x32xf32>
    %177 = arith.addf %176, %164 : vector<8x32xf32>
    %cst_63 = arith.constant dense<0.000000e+00> : vector<8xf32>
    %178 = vector.multi_reduction <add>, %177, %cst_63 [1] : vector<8x32xf32> to vector<8xf32>
    %179 = vector.shape_cast %178 : vector<8xf32> to vector<8x1xf32>
    %cst_64 = arith.constant 3.200000e+01 : f32
    %180 = vector.broadcast %cst_64 : f32 to vector<8x1xf32>
    %181 = arith.divf %179, %180 : vector<8x1xf32>
    %182 = vector.broadcast %181 : vector<8x1xf32> to vector<8x32xf32>
    %183 = arith.subf %177, %182 : vector<8x32xf32>
    %184 = arith.mulf %183, %183 : vector<8x32xf32>
    %cst_65 = arith.constant dense<0.000000e+00> : vector<8xf32>
    %185 = vector.multi_reduction <add>, %184, %cst_65 [1] : vector<8x32xf32> to vector<8xf32>
    %186 = vector.shape_cast %185 : vector<8xf32> to vector<8x1xf32>
    %cst_66 = arith.constant 3.200000e+01 : f32
    %187 = vector.broadcast %cst_66 : f32 to vector<8x1xf32>
    %188 = arith.divf %186, %187 : vector<8x1xf32>
    %cst_67 = arith.constant 9.99999974E-6 : f32
    %189 = vector.broadcast %cst_67 : f32 to vector<8x1xf32>
    %190 = arith.addf %188, %189 : vector<8x1xf32>
    %191 = math.rsqrt %190 : vector<8x1xf32>
    %192 = vector.broadcast %191 : vector<8x1xf32> to vector<8x32xf32>
    %193 = arith.mulf %183, %192 : vector<8x32xf32>
    %c0_68 = arith.constant 0 : index
    %c0_69 = arith.constant 0 : index
    %194 = vector.load %arg10[%c0_68, %c0_69] : memref<1x32xf32, #tpu.memory_space<vmem>>, vector<1x32xf32>
    %195 = vector.broadcast %194 : vector<1x32xf32> to vector<8x32xf32>
    %196 = arith.mulf %193, %195 : vector<8x32xf32>
    %c0_70 = arith.constant 0 : index
    %c0_71 = arith.constant 0 : index
    %197 = vector.load %arg11[%c0_70, %c0_71] : memref<1x32xf32, #tpu.memory_space<vmem>>, vector<1x32xf32>
    %198 = vector.broadcast %197 : vector<1x32xf32> to vector<8x32xf32>
    %199 = arith.addf %196, %198 : vector<8x32xf32>
    %c0_72 = arith.constant 0 : index
    %c0_73 = arith.constant 0 : index
    %c0_74 = arith.constant 0 : index
    %200 = vector.load %arg12[%c0_72, %c0_73, %c0_74] : memref<1x8x32xf32, #tpu.memory_space<vmem>>, vector<1x8x32xf32>
    %201 = vector.shape_cast %200 : vector<1x8x32xf32> to vector<8x32xf32>
    %202 = vector.shape_cast %199 : vector<8x32xf32> to vector<1x8x32xf32>
    tpu.vector_store %arg12[%c0_72, %c0_73, %c0_74], %202 {strides = array<i32>} : memref<1x8x32xf32, #tpu.memory_space<vmem>>, vector<1x8x32xf32>,
    return
  }
  func.func @transform_0(%arg0: i32) -> (i32, i32, i32) {
    %c0_i32 = arith.constant 0 : i32
    %c0_i32_0 = arith.constant 0 : i32
    %c0_i32_1 = arith.constant 0 : i32
    return %arg0, %c0_i32, %c0_i32_0 : i32, i32, i32
  }
  func.func @transform_1(%arg0: i32) -> (i32, i32) {
    %c0_i32 = arith.constant 0 : i32
    %c0_i32_0 = arith.constant 0 : i32
    %c0_i32_1 = arith.constant 0 : i32
    return %c0_i32, %c0_i32_0 : i32, i32
  }
  func.func @transform_2(%arg0: i32) -> (i32, i32) {
    %c0_i32 = arith.constant 0 : i32
    %c0_i32_0 = arith.constant 0 : i32
    %c0_i32_1 = arith.constant 0 : i32
    return %c0_i32, %c0_i32_0 : i32, i32
  }
  func.func @transform_3(%arg0: i32) -> (i32, i32) {
    %c0_i32 = arith.constant 0 : i32
    %c0_i32_0 = arith.constant 0 : i32
    %c0_i32_1 = arith.constant 0 : i32
    return %c0_i32, %c0_i32_0 : i32, i32
  }
  func.func @transform_4(%arg0: i32) -> (i32, i32) {
    %c0_i32 = arith.constant 0 : i32
    %c0_i32_0 = arith.constant 0 : i32
    %c0_i32_1 = arith.constant 0 : i32
    return %c0_i32, %c0_i32_0 : i32, i32
  }
  func.func @transform_5(%arg0: i32) -> (i32, i32) {
    %c0_i32 = arith.constant 0 : i32
    %c0_i32_0 = arith.constant 0 : i32
    %c0_i32_1 = arith.constant 0 : i32
    return %c0_i32, %c0_i32_0 : i32, i32
  }
  func.func @transform_6(%arg0: i32) -> (i32, i32) {
    %c0_i32 = arith.constant 0 : i32
    %c0_i32_0 = arith.constant 0 : i32
    %c0_i32_1 = arith.constant 0 : i32
    return %c0_i32, %c0_i32_0 : i32, i32
  }
  func.func @transform_7(%arg0: i32) -> (i32, i32) {
    %c0_i32 = arith.constant 0 : i32
    %c0_i32_0 = arith.constant 0 : i32
    %c0_i32_1 = arith.constant 0 : i32
    return %c0_i32, %c0_i32_0 : i32, i32
  }
  func.func @transform_8(%arg0: i32) -> (i32, i32) {
    %c0_i32 = arith.constant 0 : i32
    %c0_i32_0 = arith.constant 0 : i32
    %c0_i32_1 = arith.constant 0 : i32
    return %c0_i32, %c0_i32_0 : i32, i32
  }
  func.func @transform_9(%arg0: i32) -> (i32, i32) {
    %c0_i32 = arith.constant 0 : i32
    %c0_i32_0 = arith.constant 0 : i32
    %c0_i32_1 = arith.constant 0 : i32
    return %c0_i32, %c0_i32_0 : i32, i32
  }
  func.func @transform_10(%arg0: i32) -> (i32, i32) {
    %c0_i32 = arith.constant 0 : i32
    %c0_i32_0 = arith.constant 0 : i32
    %c0_i32_1 = arith.constant 0 : i32
    return %c0_i32, %c0_i32_0 : i32, i32
  }
  func.func @transform_11(%arg0: i32) -> (i32, i32, i32) {
    %c0_i32 = arith.constant 0 : i32
    %c0_i32_0 = arith.constant 0 : i32
    %c0_i32_1 = arith.constant 0 : i32
    return %arg0, %c0_i32, %c0_i32_0 : i32, i32, i32
  }
}

</mosaic_0001>

<llo_original>
// kernel: tpu_custom_call.1
$region0: #{tpu_custom_call.1}
  #allocation0 [shape = 'u32[]', space=smem, size = 0x4, offset = 0x4, fixed_abs, tag = 'smem constant byte address 0x4 - core index']
  #allocation1 [shape = 'u32[144,128]{1,0:T(1,128)}', space=vmem, size = 0x12000, scoped, tag = 'internal scratch']
  %s0 = inlined_call_operand.vmem [shape: f32[2,8,32], index: 0, kind: input, shape index: {}]
  %s1 = inlined_call_operand.vmem [shape: f32[32,864], index: 1, kind: input, shape index: {}]
  %s2 = inlined_call_operand.vmem [shape: f32[288,32], index: 2, kind: input, shape index: {}]
  %s3 = inlined_call_operand.vmem [shape: f32[1,32], index: 3, kind: input, shape index: {}]
  %s4 = inlined_call_operand.vmem [shape: f32[1,32], index: 4, kind: input, shape index: {}]
  %s5 = inlined_call_operand.vmem [shape: f32[32,160], index: 5, kind: input, shape index: {}]
  %s6 = inlined_call_operand.vmem [shape: f32[1,160], index: 6, kind: input, shape index: {}]
  %s7 = inlined_call_operand.vmem [shape: f32[160,32], index: 7, kind: input, shape index: {}]
  %s8 = inlined_call_operand.vmem [shape: f32[1,32], index: 8, kind: input, shape index: {}]
  %s9 = inlined_call_operand.vmem [shape: f32[1,32], index: 9, kind: input, shape index: {}]
  %s10 = inlined_call_operand.vmem [shape: f32[1,32], index: 10, kind: input, shape index: {}]
  %s11 = inlined_call_operand.hbm [shape: f32[2,8,32], index: 11, kind: output, shape index: {}]
  %s12 = sld [smem:[#allocation0]]
  $region77: #{tpu_custom_call.1} parent=0
    _
  %s14 = ssub.s32 1, %s12
  %s15 = scalar_select 0, %s14, %s12
  $region1: #{tpu_custom_call.1} parent=0
    #allocation2 [shape = 'u8[8192]{0}', space=vmem, size = 0x2000, scoped, tag = 'output window, operand 0']
    #allocation3 [shape = 's32[2]{0}', space=sflag, size = 0x8, scoped, tag = 'scoped memory for tpu_custom_call.1']
    %16 = vsyncpa [#allocation3], 0
    %s17 = scalar_lea.sflag [#allocation3], 1
    %18 = vsyncpa %s17, 0
    loop: start=0, step=1, limit=4
    $region2: #{tpu_custom_call.1} parent=1 // loop_pre_header
      _
    $region3: #{tpu_custom_call.1} parent=1 // loop_header
      %s20 = sphi 0, %s24
      %p21 = scmp.ge.s32.totalorder %s20, 4
      %s30 = sphi 0, %s32
      %s33 = sphi 0, %s30
      %s34 = sphi 0, %s33
      %s50 = sphi 0, %s34
      %s54 = sphi 0, %s54
      %s56 = sphi 0, %s54
      %s57 = sphi 0, %s56
      %s71 = sphi 0, %s57
      %s75 = sphi 0, %s75
      %s77 = sphi 0, %s75
      %s78 = sphi 0, %s77
      %s92 = sphi 0, %s78
      %s96 = sphi 0, %s96
      %s98 = sphi 0, %s96
      %s99 = sphi 0, %s98
      %s113 = sphi 0, %s99
      %s117 = sphi 0, %s117
      %s119 = sphi 0, %s117
      %s120 = sphi 0, %s119
      %s134 = sphi 0, %s120
      %s138 = sphi 0, %s138
      %s140 = sphi 0, %s138
      %s141 = sphi 0, %s140
      %s155 = sphi 0, %s141
      %s159 = sphi 0, %s159
      %s161 = sphi 0, %s159
      %s162 = sphi 0, %s161
      %s176 = sphi 0, %s162
      %s180 = sphi 0, %s180
      %s182 = sphi 0, %s180
      %s183 = sphi 0, %s182
      %s197 = sphi 0, %s183
      %s201 = sphi 0, %s201
      %s203 = sphi 0, %s201
      %s204 = sphi 0, %s203
      %s218 = sphi 0, %s204
      %s222 = sphi 0, %s222
      %s224 = sphi 0, %s222
      %s225 = sphi 0, %s224
      %s239 = sphi 0, %s225
      %s243 = sphi 0, %s243
      %s245 = sphi 0, %s243
      %s246 = sphi 0, %s245
      %s260 = sphi 0, %s246
      %s266 = sphi 0, %s268
      %s269 = sphi 0, %s266
      %s270 = sphi 0, %s269
      %s286 = sphi 0, %s270
    $region4: #{tpu_custom_call.1} parent=1 // loop_header_branch
      %23 = sbr.rel (%p21) target = $region8
    $region5: #{tpu_custom_call.1} parent=1 // loop_body
      %s25 = ssub.s32 %s20, 1
      %s26 = ssub.s32 %s20, 2
      %s27 = sadd.s32 %s20, 1
      %s28 = ssub.s32 %s20, %s27
      %p29 = scmp.eq.s32.totalorder %s28, 0
      %s31 = sadd.s32 %s30, 1
      %s32 = scalar_select %p29, %s30, %s31
      %p35 = pneg %p29
      %p36 = scmp.eq.s32.totalorder %s20, 1
      %p37 = por %p35, %p36
      %p38 = scmp.ne.s32.totalorder %s30, %s33
      %p39 = scmp.eq.s32.totalorder %s20, 0
      %p40 = por %p38, %p39
      %p41 = scmp.ne.s32.totalorder %s30, %s33
      %p42 = scmp.eq.s32.totalorder %s25, 1
      %p43 = por %p41, %p42
      %p44 = scmp.ne.s32.totalorder %s33, %s34
      %p45 = scmp.eq.s32.totalorder %s25, 0
      %p46 = por %p44, %p45
      %p47 = scmp.ne.s32.totalorder %s33, %s34
      %p48 = scmp.eq.s32.totalorder %s26, 1
      %p49 = por %p47, %p48
      %p51 = scmp.ne.s32.totalorder %s34, %s50
      %p52 = scmp.eq.s32.totalorder %s26, 0
      %p53 = por %p51, %p52
      %s55 = sadd.s32 %s54, 1
      %p58 = scmp.eq.s32.totalorder %s20, 1
      %p59 = scmp.ne.s32.totalorder %s54, %s56
      %p60 = scmp.eq.s32.totalorder %s20, 0
      %p61 = por %p59, %p60
      %p62 = scmp.ne.s32.totalorder %s54, %s56
      %p63 = scmp.eq.s32.totalorder %s25, 1
      %p64 = por %p62, %p63
      %p65 = scmp.ne.s32.totalorder %s56, %s57
      %p66 = scmp.eq.s32.totalorder %s25, 0
      %p67 = por %p65, %p66
      %p68 = scmp.ne.s32.totalorder %s56, %s57
      %p69 = scmp.eq.s32.totalorder %s26, 1
      %p70 = por %p68, %p69
      %p72 = scmp.ne.s32.totalorder %s57, %s71
      %p73 = scmp.eq.s32.totalorder %s26, 0
      %p74 = por %p72, %p73
      %s76 = sadd.s32 %s75, 1
      %p79 = scmp.eq.s32.totalorder %s20, 1
      %p80 = scmp.ne.s32.totalorder %s75, %s77
      %p81 = scmp.eq.s32.totalorder %s20, 0
      %p82 = por %p80, %p81
      %p83 = scmp.ne.s32.totalorder %s75, %s77
      %p84 = scmp.eq.s32.totalorder %s25, 1
      %p85 = por %p83, %p84
      %p86 = scmp.ne.s32.totalorder %s77, %s78
      %p87 = scmp.eq.s32.totalorder %s25, 0
      %p88 = por %p86, %p87
      %p89 = scmp.ne.s32.totalorder %s77, %s78
      %p90 = scmp.eq.s32.totalorder %s26, 1
      %p91 = por %p89, %p90
      %p93 = scmp.ne.s32.totalorder %s78, %s92
      %p94 = scmp.eq.s32.totalorder %s26, 0
      %p95 = por %p93, %p94
      %s97 = sadd.s32 %s96, 1
      %p100 = scmp.eq.s32.totalorder %s20, 1
      %p101 = scmp.ne.s32.totalorder %s96, %s98
      %p102 = scmp.eq.s32.totalorder %s20, 0
      %p103 = por %p101, %p102
      %p104 = scmp.ne.s32.totalorder %s96, %s98
      %p105 = scmp.eq.s32.totalorder %s25, 1
      %p106 = por %p104, %p105
      %p107 = scmp.ne.s32.totalorder %s98, %s99
      %p108 = scmp.eq.s32.totalorder %s25, 0
      %p109 = por %p107, %p108
      %p110 = scmp.ne.s32.totalorder %s98, %s99
      %p111 = scmp.eq.s32.totalorder %s26, 1
      %p112 = por %p110, %p111
      %p114 = scmp.ne.s32.totalorder %s99, %s113
      %p115 = scmp.eq.s32.totalorder %s26, 0
      %p116 = por %p114, %p115
      %s118 = sadd.s32 %s117, 1
      %p121 = scmp.eq.s32.totalorder %s20, 1
      %p122 = scmp.ne.s32.totalorder %s117, %s119
      %p123 = scmp.eq.s32.totalorder %s20, 0
      %p124 = por %p122, %p123
      %p125 = scmp.ne.s32.totalorder %s117, %s119
      %p126 = scmp.eq.s32.totalorder %s25, 1
      %p127 = por %p125, %p126
      %p128 = scmp.ne.s32.totalorder %s119, %s120
      %p129 = scmp.eq.s32.totalorder %s25, 0
      %p130 = por %p128, %p129
      %p131 = scmp.ne.s32.totalorder %s119, %s120
      %p132 = scmp.eq.s32.totalorder %s26, 1
      %p133 = por %p131, %p132
      %p135 = scmp.ne.s32.totalorder %s120, %s134
      %p136 = scmp.eq.s32.totalorder %s26, 0
      %p137 = por %p135, %p136
      %s139 = sadd.s32 %s138, 1
      %p142 = scmp.eq.s32.totalorder %s20, 1
      %p143 = scmp.ne.s32.totalorder %s138, %s140
      %p144 = scmp.eq.s32.totalorder %s20, 0
      %p145 = por %p143, %p144
      %p146 = scmp.ne.s32.totalorder %s138, %s140
      %p147 = scmp.eq.s32.totalorder %s25, 1
      %p148 = por %p146, %p147
      %p149 = scmp.ne.s32.totalorder %s140, %s141
      %p150 = scmp.eq.s32.totalorder %s25, 0
      %p151 = por %p149, %p150
      %p152 = scmp.ne.s32.totalorder %s140, %s141
      %p153 = scmp.eq.s32.totalorder %s26, 1
      %p154 = por %p152, %p153
      %p156 = scmp.ne.s32.totalorder %s141, %s155
      %p157 = scmp.eq.s32.totalorder %s26, 0
      %p158 = por %p156, %p157
      %s160 = sadd.s32 %s159, 1
      %p163 = scmp.eq.s32.totalorder %s20, 1
      %p164 = scmp.ne.s32.totalorder %s159, %s161
      %p165 = scmp.eq.s32.totalorder %s20, 0
      %p166 = por %p164, %p165
      %p167 = scmp.ne.s32.totalorder %s159, %s161
      %p168 = scmp.eq.s32.totalorder %s25, 1
      %p169 = por %p167, %p168
      %p170 = scmp.ne.s32.totalorder %s161, %s162
      %p171 = scmp.eq.s32.totalorder %s25, 0
      %p172 = por %p170, %p171
      %p173 = scmp.ne.s32.totalorder %s161, %s162
      %p174 = scmp.eq.s32.totalorder %s26, 1
      %p175 = por %p173, %p174
      %p177 = scmp.ne.s32.totalorder %s162, %s176
      %p178 = scmp.eq.s32.totalorder %s26, 0
      %p179 = por %p177, %p178
      %s181 = sadd.s32 %s180, 1
      %p184 = scmp.eq.s32.totalorder %s20, 1
      %p185 = scmp.ne.s32.totalorder %s180, %s182
      %p186 = scmp.eq.s32.totalorder %s20, 0
      %p187 = por %p185, %p186
      %p188 = scmp.ne.s32.totalorder %s180, %s182
      %p189 = scmp.eq.s32.totalorder %s25, 1
      %p190 = por %p188, %p189
      %p191 = scmp.ne.s32.totalorder %s182, %s183
      %p192 = scmp.eq.s32.totalorder %s25, 0
      %p193 = por %p191, %p192
      %p194 = scmp.ne.s32.totalorder %s182, %s183
      %p195 = scmp.eq.s32.totalorder %s26, 1
      %p196 = por %p194, %p195
      %p198 = scmp.ne.s32.totalorder %s183, %s197
      %p199 = scmp.eq.s32.totalorder %s26, 0
      %p200 = por %p198, %p199
      %s202 = sadd.s32 %s201, 1
      %p205 = scmp.eq.s32.totalorder %s20, 1
      %p206 = scmp.ne.s32.totalorder %s201, %s203
      %p207 = scmp.eq.s32.totalorder %s20, 0
      %p208 = por %p206, %p207
      %p209 = scmp.ne.s32.totalorder %s201, %s203
      %p210 = scmp.eq.s32.totalorder %s25, 1
      %p211 = por %p209, %p210
      %p212 = scmp.ne.s32.totalorder %s203, %s204
      %p213 = scmp.eq.s32.totalorder %s25, 0
      %p214 = por %p212, %p213
      %p215 = scmp.ne.s32.totalorder %s203, %s204
      %p216 = scmp.eq.s32.totalorder %s26, 1
      %p217 = por %p215, %p216
      %p219 = scmp.ne.s32.totalorder %s204, %s218
      %p220 = scmp.eq.s32.totalorder %s26, 0
      %p221 = por %p219, %p220
      %s223 = sadd.s32 %s222, 1
      %p226 = scmp.eq.s32.totalorder %s20, 1
      %p227 = scmp.ne.s32.totalorder %s222, %s224
      %p228 = scmp.eq.s32.totalorder %s20, 0
      %p229 = por %p227, %p228
      %p230 = scmp.ne.s32.totalorder %s222, %s224
      %p231 = scmp.eq.s32.totalorder %s25, 1
      %p232 = por %p230, %p231
      %p233 = scmp.ne.s32.totalorder %s224, %s225
      %p234 = scmp.eq.s32.totalorder %s25, 0
      %p235 = por %p233, %p234
      %p236 = scmp.ne.s32.totalorder %s224, %s225
      %p237 = scmp.eq.s32.totalorder %s26, 1
      %p238 = por %p236, %p237
      %p240 = scmp.ne.s32.totalorder %s225, %s239
      %p241 = scmp.eq.s32.totalorder %s26, 0
      %p242 = por %p240, %p241
      %s244 = sadd.s32 %s243, 1
      %p247 = scmp.eq.s32.totalorder %s20, 1
      %p248 = scmp.ne.s32.totalorder %s243, %s245
      %p249 = scmp.eq.s32.totalorder %s20, 0
      %p250 = por %p248, %p249
      %p251 = scmp.ne.s32.totalorder %s243, %s245
      %p252 = scmp.eq.s32.totalorder %s25, 1
      %p253 = por %p251, %p252
      %p254 = scmp.ne.s32.totalorder %s245, %s246
      %p255 = scmp.eq.s32.totalorder %s25, 0
      %p256 = por %p254, %p255
      %p257 = scmp.ne.s32.totalorder %s245, %s246
      %p258 = scmp.eq.s32.totalorder %s26, 1
      %p259 = por %p257, %p258
      %p261 = scmp.ne.s32.totalorder %s246, %s260
      %p262 = scmp.eq.s32.totalorder %s26, 0
      %p263 = por %p261, %p262
      %s264 = ssub.s32 %s20, %s27
      %p265 = scmp.eq.s32.totalorder %s264, 0
      %s267 = sadd.s32 %s266, 1
      %s268 = scalar_select %p265, %s266, %s267
      %p271 = pneg %p265
      %p272 = scmp.eq.s32.totalorder %s20, 1
      %p273 = por %p271, %p272
      %p274 = scmp.ne.s32.totalorder %s266, %s269
      %p275 = scmp.eq.s32.totalorder %s20, 0
      %p276 = por %p274, %p275
      %p277 = scmp.ne.s32.totalorder %s266, %s269
      %p278 = scmp.eq.s32.totalorder %s25, 1
      %p279 = por %p277, %p278
      %p280 = scmp.ne.s32.totalorder %s269, %s270
      %p281 = scmp.eq.s32.totalorder %s25, 0
      %p282 = por %p280, %p281
      %p283 = scmp.ne.s32.totalorder %s269, %s270
      %p284 = scmp.eq.s32.totalorder %s26, 1
      %p285 = por %p283, %p284
      %p287 = scmp.ne.s32.totalorder %s270, %s286
      %p288 = scmp.eq.s32.totalorder %s26, 0
      %p289 = por %p287, %p288
      %p290 = scmp.le.s32.totalorder 1, %s20
      %p291 = scmp.lt.s32.totalorder %s20, 3
      %p292 = pnand %p290, %p291
      %p293 = pneg %p292
      // Predicated region
      $region9: #{tpu_custom_call.1} parent=5 // pred_check
        _
      $region10: #{tpu_custom_call.1} parent=5 // pred_check_branch
        %295 = sbr.rel (%p292) target = $region12
      $region11: #{tpu_custom_call.1} parent=5 // pred_region
        %s296 = ssub.s32 %s20, 1
        // Predicated region
        $region13: #{tpu_custom_call.1} parent=11 // pred_check
          %p297 = pneg %p67
        $region14: #{tpu_custom_call.1} parent=11 // pred_check_branch
          %299 = sbr.rel (%p297) target = $region16
        $region15: #{tpu_custom_call.1} parent=11 // pred_region
          _
        $region16: #{tpu_custom_call.1} parent=11 // pred_fallthru
          _
        // Predicated region
        $region17: #{tpu_custom_call.1} parent=11 // pred_check
          %p300 = pneg %p88
        $region18: #{tpu_custom_call.1} parent=11 // pred_check_branch
          %302 = sbr.rel (%p300) target = $region20
        $region19: #{tpu_custom_call.1} parent=11 // pred_region
          _
        $region20: #{tpu_custom_call.1} parent=11 // pred_fallthru
          _
        // Predicated region
        $region21: #{tpu_custom_call.1} parent=11 // pred_check
          %p303 = pneg %p109
        $region22: #{tpu_custom_call.1} parent=11 // pred_check_branch
          %305 = sbr.rel (%p303) target = $region24
        $region23: #{tpu_custom_call.1} parent=11 // pred_region
          _
        $region24: #{tpu_custom_call.1} parent=11 // pred_fallthru
          _
        // Predicated region
        $region25: #{tpu_custom_call.1} parent=11 // pred_check
          %p306 = pneg %p130
        $region26: #{tpu_custom_call.1} parent=11 // pred_check_branch
          %308 = sbr.rel (%p306) target = $region28
        $region27: #{tpu_custom_call.1} parent=11 // pred_region
          _
        $region28: #{tpu_custom_call.1} parent=11 // pred_fallthru
          _
        // Predicated region
        $region29: #{tpu_custom_call.1} parent=11 // pred_check
          %p309 = pneg %p151
        $region30: #{tpu_custom_call.1} parent=11 // pred_check_branch
          %311 = sbr.rel (%p309) target = $region32
        $region31: #{tpu_custom_call.1} parent=11 // pred_region
          _
        $region32: #{tpu_custom_call.1} parent=11 // pred_fallthru
          _
        // Predicated region
        $region33: #{tpu_custom_call.1} parent=11 // pred_check
          %p312 = pneg %p172
        $region34: #{tpu_custom_call.1} parent=11 // pred_check_branch
          %314 = sbr.rel (%p312) target = $region36
        $region35: #{tpu_custom_call.1} parent=11 // pred_region
          _
        $region36: #{tpu_custom_call.1} parent=11 // pred_fallthru
          _
        // Predicated region
        $region37: #{tpu_custom_call.1} parent=11 // pred_check
          %p315 = pneg %p193
        $region38: #{tpu_custom_call.1} parent=11 // pred_check_branch
          %317 = sbr.rel (%p315) target = $region40
        $region39: #{tpu_custom_call.1} parent=11 // pred_region
          _
        $region40: #{tpu_custom_call.1} parent=11 // pred_fallthru
          _
        // Predicated region
        $region41: #{tpu_custom_call.1} parent=11 // pred_check
          %p318 = pneg %p214
        $region42: #{tpu_custom_call.1} parent=11 // pred_check_branch
          %320 = sbr.rel (%p318) target = $region44
        $region43: #{tpu_custom_call.1} parent=11 // pred_region
          _
        $region44: #{tpu_custom_call.1} parent=11 // pred_fallthru
          _
        // Predicated region
        $region45: #{tpu_custom_call.1} parent=11 // pred_check
          %p321 = pneg %p235
        $region46: #{tpu_custom_call.1} parent=11 // pred_check_branch
          %323 = sbr.rel (%p321) target = $region48
        $region47: #{tpu_custom_call.1} parent=11 // pred_region
          _
        $region48: #{tpu_custom_call.1} parent=11 // pred_fallthru
          _
        // Predicated region
        $region49: #{tpu_custom_call.1} parent=11 // pred_check
          %p324 = pneg %p256
        $region50: #{tpu_custom_call.1} parent=11 // pred_check_branch
          %326 = sbr.rel (%p324) target = $region52
        $region51: #{tpu_custom_call.1} parent=11 // pred_region
          _
        $region52: #{tpu_custom_call.1} parent=11 // pred_fallthru
          _
      $region12: #{tpu_custom_call.1} parent=5 // pred_fallthru
        _
      %p327 = scmp.lt.s32.totalorder %s20, 2
      // Predicated region
      $region53: #{tpu_custom_call.1} parent=5 // pred_check
        %p328 = pneg %p327
      $region54: #{tpu_custom_call.1} parent=5 // pred_check_branch
        %330 = sbr.rel (%p328) target = $region56
      $region55: #{tpu_custom_call.1} parent=5 // pred_region
        // Predicated region
        $region57: #{tpu_custom_call.1} parent=55 // pred_check
          %p331 = pneg %p40
        $region58: #{tpu_custom_call.1} parent=55 // pred_check_branch
          %333 = sbr.rel (%p331) target = $region60
        $region59: #{tpu_custom_call.1} parent=55 // pred_region
          %p334 = scmp.lt.s32.totalorder %s20, 1
          %s335 = scalar_select %p334, %s20, 1
          %s336 = smul.addr %s335, 8
          %s337 = scalar_lea.vmem %s0, %s336
        $region60: #{tpu_custom_call.1} parent=55 // pred_fallthru
          _
      $region56: #{tpu_custom_call.1} parent=5 // pred_fallthru
        _
      %p338 = scmp.le.s32.totalorder 1, %s20
      %p339 = scmp.lt.s32.totalorder %s20, 3
      %p340 = pnand %p338, %p339
      %p341 = pneg %p340
      // Predicated region
      $region61: #{tpu_custom_call.1} parent=5 // pred_check
        _
      $region62: #{tpu_custom_call.1} parent=5 // pred_check_branch
        %343 = sbr.rel (%p340) target = $region64
      $region63: #{tpu_custom_call.1} parent=5 // pred_region
        %s344 = ssub.s32 %s20, 1
        %p345 = scmp.lt.s32.totalorder %s25, 1
        %s346 = scalar_select %p345, %s25, 1
        %s347 = smul.addr %s346, 8
        %s348 = scalar_lea.vmem %s0, %s347
        %p349 = pneg %p46
        %p350 = pneg %p43
        %p351 = pneg %p67
        %p352 = pneg %p64
        %p353 = pneg %p88
        %p354 = pneg %p85
        %p355 = pneg %p109
        %p356 = pneg %p106
        %p357 = pneg %p130
        %p358 = pneg %p127
        %p359 = pneg %p151
        %p360 = pneg %p148
        %p361 = pneg %p172
        %p362 = pneg %p169
        %p363 = pneg %p193
        %p364 = pneg %p190
        %p365 = pneg %p214
        %p366 = pneg %p211
        %p367 = pneg %p235
        %p368 = pneg %p232
        %p369 = pneg %p256
        %p370 = pneg %p253
        %p371 = pneg %p282
        %p372 = pneg %p279
        %s373 = sand.u32 %s269, 1
        %s374 = scalar_lea.sflag [#allocation3], %s373
        %s375 = sand.u32 %s269, 1
        %s376 = smul.addr %s375, 8
        %s377 = scalar_lea.vmem [#allocation2], %s376
        %p378 = scmp.lt.s32.totalorder %s25, 1
        %s379 = scalar_select %p378, %s25, 1
        %s380 = smul.addr %s379, 8
        %s381 = scalar_lea.vmem %s0, %s380
        %v382 = vld [vmem:[%s381] sm:$0xff]
        %v383 = vld [vmem:[%s1] sm:$0xff]
        %v384 = vld [vmem:[%s1 + $0x8] sm:$0xff]
        %v385 = vld [vmem:[%s1 + $0x10] sm:$0xff]
        %v386 = vld [vmem:[%s1 + $0x18] sm:$0xff]
        %v387 = vld [vmem:[%s1 + $0x20] sm:$0xff]
        %v388 = vld [vmem:[%s1 + $0x28] sm:$0xff]
        %v389 = vld [vmem:[%s1 + $0x30] sm:$0xff]
        %v390 = vld [vmem:[%s1 + $0x38] sm:$0xff]
        %v391 = vld [vmem:[%s1 + $0x40] sm:$0xff]
        %v392 = vld [vmem:[%s1 + $0x48] sm:$0xff]
        %v393 = vld [vmem:[%s1 + $0x50] sm:$0xff]
        %v394 = vld [vmem:[%s1 + $0x58] sm:$0xff]
        %v395 = vld [vmem:[%s1 + $0x60] sm:$0xff]
        %v396 = vld [vmem:[%s1 + $0x68] sm:$0xff]
        %v397 = vld [vmem:[%s1 + $0x70] sm:$0xff]
        %v398 = vld [vmem:[%s1 + $0x78] sm:$0xff]
        %v399 = vld [vmem:[%s1 + $0x80] sm:$0xff]
        %v400 = vld [vmem:[%s1 + $0x88] sm:$0xff]
        %v401 = vld [vmem:[%s1 + $0x90] sm:$0xff]
        %v402 = vld [vmem:[%s1 + $0x98] sm:$0xff]
        %v403 = vld [vmem:[%s1 + $0xa0] sm:$0xff]
        %v404 = vld [vmem:[%s1 + $0xa8] sm:$0xff]
        %v405 = vld [vmem:[%s1 + $0xb0] sm:$0xff]
        %v406 = vld [vmem:[%s1 + $0xb8] sm:$0xff]
        %v407 = vld [vmem:[%s1 + $0xc0] sm:$0xff]
        %v408 = vld [vmem:[%s1 + $0xc8] sm:$0xff]
        %v409 = vld [vmem:[%s1 + $0xd0] sm:$0xff]
        %v410 = vld [vmem:[%s1 + $0xd8] sm:$0xff]
        %vm411 = vcmask 261120
        %v413 = vsel %vm411, %v382, 0
        %415 = vmatprep.subr.mxu0 %v384
        %416 = vmatpush1.msra.mxu0 %v383
        %417 = vmatprep.subr.mxu0 %v391
        %418 = vmatpush1.msra.mxu0 %v390
        %419 = vmatprep.subr.mxu0 %v398
        %420 = vmatpush1.msra.mxu0 %v397
        %421 = vmatprep.subr.mxu0 %v405
        %422 = vmatpush1.msra.mxu0 %v404
        %423 = vmatprep.subr.mxu0 0.0
        %424 = vmatpush1.msra.mxu0 0.0
        %425 = vmatprep.subr.mxu0 0.0
        %426 = vmatpush1.msra.mxu0 0.0
        %427 = vmatprep.subr.mxu0 0.0
        %428 = vmatpush1.msra.mxu0 0.0
        %429 = vmatprep.subr.mxu0 0.0
        %430 = vmatpush1.msra.mxu0 0.0
        %431 = vmatprep.subr.mxu0 0.0
        %432 = vmatpush1.msra.mxu0 0.0
        %433 = vmatprep.subr.mxu0 0.0
        %434 = vmatpush1.msra.mxu0 0.0
        %435 = vmatprep.subr.mxu0 0.0
        %436 = vmatpush1.msra.mxu0 0.0
        %437 = vmatprep.subr.mxu0 0.0
        %438 = vmatpush1.msra.mxu0 0.0
        %439 = vmatprep.subr.mxu0 0.0
        %440 = vmatpush1.msra.mxu0 0.0
        %441 = vmatprep.subr.mxu0 0.0
        %442 = vmatpush1.msra.mxu0 0.0
        %443 = vmatprep.subr.mxu0 0.0
        %444 = vmatpush1.msra.mxu0 0.0
        %445 = vmatprep.subr.mxu0 0.0
        %446 = vmatpush1.msra.mxu0 0.0
        %447 = vmatprep.subr.mxu0 0.0
        %448 = vmatpush1.msra.mxu0 0.0
        %449 = vmatprep.subr.mxu0 0.0
        %450 = vmatpush1.msra.mxu0 0.0
        %451 = vmatprep.subr.mxu0 0.0
        %452 = vmatpush1.msra.mxu0 0.0
        %453 = vmatprep.subr.mxu0 0.0
        %454 = vmatpush1.msra.mxu0 0.0
        %455 = vmatprep.subr.mxu0 0.0
        %456 = vmatpush1.msra.mxu0 0.0
        %457 = vmatprep.subr.mxu0 0.0
        %458 = vmatpush1.msra.mxu0 0.0
        %459 = vmatprep.subr.mxu0 0.0
        %460 = vmatpush1.msra.mxu0 0.0
        %461 = vmatprep.subr.mxu0 0.0
        %462 = vmatpush1.msra.mxu0 0.0
        %463 = vmatprep.subr.mxu0 0.0
        %464 = vmatpush1.msra.mxu0 0.0
        %465 = vmatprep.subr.mxu0 0.0
        %466 = vmatpush1.msra.mxu0 0.0
        %467 = vmatprep.subr.mxu0 0.0
        %468 = vmatpush1.msra.mxu0 0.0
        %469 = vmatprep.subr.mxu0 0.0
        %470 = vmatpush1.msra.mxu0 0.0
        %471 = vmatprep.subr.mxu0 0.0
        %472 = vmatpush1.msra.mxu0 0.0
        %473 = vmatprep.subr.mxu0 0.0
        %474 = vmatpush1.msra.mxu0 0.0
        %475 = vmatprep.subr.mxu0 0.0
        %476 = vmatpush1.msra.mxu0 0.0
        %477 = vmatprep.subr.mxu0 0.0
        %478 = vmatpush1.msra.mxu0 0.0
        %479 = vmatprep.mubr.f32.mxu0 0.0
        %480 = vmatmul.mubr.f32.gmra.mrb[0].mxu0 %v413
        %v481 = vpop.f32.mrb[0].mxu0
        %v482 = vadd.f32 0.0, %v481
        %v483 = vpop.f32.mrb[0].mxu0
        %v484 = vadd.f32 0.0, %v483
        %485 = vdwg.mxu0
        %486 = vmatprep.subr.mxu0 %v386
        %487 = vmatpush1.msra.mxu0 %v385
        %488 = vmatprep.subr.mxu0 %v393
        %489 = vmatpush1.msra.mxu0 %v392
        %490 = vmatprep.subr.mxu0 %v400
        %491 = vmatpush1.msra.mxu0 %v399
        %492 = vmatprep.subr.mxu0 %v407
        %493 = vmatpush1.msra.mxu0 %v406
        %494 = vmatprep.subr.mxu0 0.0
        %495 = vmatpush1.msra.mxu0 0.0
        %496 = vmatprep.subr.mxu0 0.0
        %497 = vmatpush1.msra.mxu0 0.0
        %498 = vmatprep.subr.mxu0 0.0
        %499 = vmatpush1.msra.mxu0 0.0
        %500 = vmatprep.subr.mxu0 0.0
        %501 = vmatpush1.msra.mxu0 0.0
        %502 = vmatprep.subr.mxu0 0.0
        %503 = vmatpush1.msra.mxu0 0.0
        %504 = vmatprep.subr.mxu0 0.0
        %505 = vmatpush1.msra.mxu0 0.0
        %506 = vmatprep.subr.mxu0 0.0
        %507 = vmatpush1.msra.mxu0 0.0
        %508 = vmatprep.subr.mxu0 0.0
        %509 = vmatpush1.msra.mxu0 0.0
        %510 = vmatprep.subr.mxu0 0.0
        %511 = vmatpush1.msra.mxu0 0.0
        %512 = vmatprep.subr.mxu0 0.0
        %513 = vmatpush1.msra.mxu0 0.0
        %514 = vmatprep.subr.mxu0 0.0
        %515 = vmatpush1.msra.mxu0 0.0
        %516 = vmatprep.subr.mxu0 0.0
        %517 = vmatpush1.msra.mxu0 0.0
        %518 = vmatprep.subr.mxu0 0.0
        %519 = vmatpush1.msra.mxu0 0.0
        %520 = vmatprep.subr.mxu0 0.0
        %521 = vmatpush1.msra.mxu0 0.0
        %522 = vmatprep.subr.mxu0 0.0
        %523 = vmatpush1.msra.mxu0 0.0
        %524 = vmatprep.subr.mxu0 0.0
        %525 = vmatpush1.msra.mxu0 0.0
        %526 = vmatprep.subr.mxu0 0.0
        %527 = vmatpush1.msra.mxu0 0.0
        %528 = vmatprep.subr.mxu0 0.0
        %529 = vmatpush1.msra.mxu0 0.0
        %530 = vmatprep.subr.mxu0 0.0
        %531 = vmatpush1.msra.mxu0 0.0
        %532 = vmatprep.subr.mxu0 0.0
        %533 = vmatpush1.msra.mxu0 0.0
        %534 = vmatprep.subr.mxu0 0.0
        %535 = vmatpush1.msra.mxu0 0.0
        %536 = vmatprep.subr.mxu0 0.0
        %537 = vmatpush1.msra.mxu0 0.0
        %538 = vmatprep.subr.mxu0 0.0
        %539 = vmatpush1.msra.mxu0 0.0
        %540 = vmatprep.subr.mxu0 0.0
        %541 = vmatpush1.msra.mxu0 0.0
        %542 = vmatprep.subr.mxu0 0.0
        %543 = vmatpush1.msra.mxu0 0.0
        %544 = vmatprep.subr.mxu0 0.0
        %545 = vmatpush1.msra.mxu0 0.0
        %546 = vmatprep.subr.mxu0 0.0
        %547 = vmatpush1.msra.mxu0 0.0
        %548 = vmatprep.subr.mxu0 0.0
        %549 = vmatpush1.msra.mxu0 0.0
        %550 = vmatprep.mubr.f32.mxu0 0.0
        %551 = vmatmul.mubr.f32.gmra.mrb[0].mxu0 %v413
        %v552 = vpop.f32.mrb[0].mxu0
        %v553 = vadd.f32 0.0, %v552
        %v554 = vpop.f32.mrb[0].mxu0
        %v555 = vadd.f32 0.0, %v554
        %556 = vdwg.mxu0
        %557 = vmatprep.subr.mxu0 %v388
        %558 = vmatpush1.msra.mxu0 %v387
        %559 = vmatprep.subr.mxu0 %v395
        %560 = vmatpush1.msra.mxu0 %v394
        %561 = vmatprep.subr.mxu0 %v402
        %562 = vmatpush1.msra.mxu0 %v401
        %563 = vmatprep.subr.mxu0 %v409
        %564 = vmatpush1.msra.mxu0 %v408
        %565 = vmatprep.subr.mxu0 0.0
        %566 = vmatpush1.msra.mxu0 0.0
        %567 = vmatprep.subr.mxu0 0.0
        %568 = vmatpush1.msra.mxu0 0.0
        %569 = vmatprep.subr.mxu0 0.0
        %570 = vmatpush1.msra.mxu0 0.0
        %571 = vmatprep.subr.mxu0 0.0
        %572 = vmatpush1.msra.mxu0 0.0
        %573 = vmatprep.subr.mxu0 0.0
        %574 = vmatpush1.msra.mxu0 0.0
        %575 = vmatprep.subr.mxu0 0.0
        %576 = vmatpush1.msra.mxu0 0.0
        %577 = vmatprep.subr.mxu0 0.0
        %578 = vmatpush1.msra.mxu0 0.0
        %579 = vmatprep.subr.mxu0 0.0
        %580 = vmatpush1.msra.mxu0 0.0
        %581 = vmatprep.subr.mxu0 0.0
        %582 = vmatpush1.msra.mxu0 0.0
        %583 = vmatprep.subr.mxu0 0.0
        %584 = vmatpush1.msra.mxu0 0.0
        %585 = vmatprep.subr.mxu0 0.0
        %586 = vmatpush1.msra.mxu0 0.0
        %587 = vmatprep.subr.mxu0 0.0
        %588 = vmatpush1.msra.mxu0 0.0
        %589 = vmatprep.subr.mxu0 0.0
        %590 = vmatpush1.msra.mxu0 0.0
        %591 = vmatprep.subr.mxu0 0.0
        %592 = vmatpush1.msra.mxu0 0.0
        %593 = vmatprep.subr.mxu0 0.0
        %594 = vmatpush1.msra.mxu0 0.0
        %595 = vmatprep.subr.mxu0 0.0
        %596 = vmatpush1.msra.mxu0 0.0
        %597 = vmatprep.subr.mxu0 0.0
        %598 = vmatpush1.msra.mxu0 0.0
        %599 = vmatprep.subr.mxu0 0.0
        %600 = vmatpush1.msra.mxu0 0.0
        %601 = vmatprep.subr.mxu0 0.0
        %602 = vmatpush1.msra.mxu0 0.0
        %603 = vmatprep.subr.mxu0 0.0
        %604 = vmatpush1.msra.mxu0 0.0
        %605 = vmatprep.subr.mxu0 0.0
        %606 = vmatpush1.msra.mxu0 0.0
        %607 = vmatprep.subr.mxu0 0.0
        %608 = vmatpush1.msra.mxu0 0.0
        %609 = vmatprep.subr.mxu0 0.0
        %610 = vmatpush1.msra.mxu0 0.0
        %611 = vmatprep.subr.mxu0 0.0
        %612 = vmatpush1.msra.mxu0 0.0
        %613 = vmatprep.subr.mxu0 0.0
        %614 = vmatpush1.msra.mxu0 0.0
        %615 = vmatprep.subr.mxu0 0.0
        %616 = vmatpush1.msra.mxu0 0.0
        %617 = vmatprep.subr.mxu0 0.0
        %618 = vmatpush1.msra.mxu0 0.0
        %619 = vmatprep.subr.mxu0 0.0
        %620 = vmatpush1.msra.mxu0 0.0
        %621 = vmatprep.mubr.f32.mxu0 0.0
        %622 = vmatmul.mubr.f32.gmra.mrb[0].mxu0 %v413
        %v623 = vpop.f32.mrb[0].mxu0
        %v624 = vadd.f32 0.0, %v623
        %v625 = vpop.f32.mrb[0].mxu0
        %v626 = vadd.f32 0.0, %v625
        %627 = vdwg.mxu0
        %628 = vmatprep.subr.mxu0 0.0
        %629 = vmatpush1.msra.mxu0 %v389
        %630 = vmatprep.subr.mxu0 0.0
        %631 = vmatpush1.msra.mxu0 %v396
        %632 = vmatprep.subr.mxu0 0.0
        %633 = vmatpush1.msra.mxu0 %v403
        %634 = vmatprep.subr.mxu0 0.0
        %635 = vmatpush1.msra.mxu0 %v410
        %636 = vmatprep.subr.mxu0 0.0
        %637 = vmatpush1.msra.mxu0 0.0
        %638 = vmatprep.subr.mxu0 0.0
        %639 = vmatpush1.msra.mxu0 0.0
        %640 = vmatprep.subr.mxu0 0.0
        %641 = vmatpush1.msra.mxu0 0.0
        %642 = vmatprep.subr.mxu0 0.0
        %643 = vmatpush1.msra.mxu0 0.0
        %644 = vmatprep.subr.mxu0 0.0
        %645 = vmatpush1.msra.mxu0 0.0
        %646 = vmatprep.subr.mxu0 0.0
        %647 = vmatpush1.msra.mxu0 0.0
        %648 = vmatprep.subr.mxu0 0.0
        %649 = vmatpush1.msra.mxu0 0.0
        %650 = vmatprep.subr.mxu0 0.0
        %651 = vmatpush1.msra.mxu0 0.0
        %652 = vmatprep.subr.mxu0 0.0
        %653 = vmatpush1.msra.mxu0 0.0
        %654 = vmatprep.subr.mxu0 0.0
        %655 = vmatpush1.msra.mxu0 0.0
        %656 = vmatprep.subr.mxu0 0.0
        %657 = vmatpush1.msra.mxu0 0.0
        %658 = vmatprep.subr.mxu0 0.0
        %659 = vmatpush1.msra.mxu0 0.0
        %660 = vmatprep.subr.mxu0 0.0
        %661 = vmatpush1.msra.mxu0 0.0
        %662 = vmatprep.subr.mxu0 0.0
        %663 = vmatpush1.msra.mxu0 0.0
        %664 = vmatprep.subr.mxu0 0.0
        %665 = vmatpush1.msra.mxu0 0.0
        %666 = vmatprep.subr.mxu0 0.0
        %667 = vmatpush1.msra.mxu0 0.0
        %668 = vmatprep.subr.mxu0 0.0
        %669 = vmatpush1.msra.mxu0 0.0
        %670 = vmatprep.subr.mxu0 0.0
        %671 = vmatpush1.msra.mxu0 0.0
        %672 = vmatprep.subr.mxu0 0.0
        %673 = vmatpush1.msra.mxu0 0.0
        %674 = vmatprep.subr.mxu0 0.0
        %675 = vmatpush1.msra.mxu0 0.0
        %676 = vmatprep.subr.mxu0 0.0
        %677 = vmatpush1.msra.mxu0 0.0
        %678 = vmatprep.subr.mxu0 0.0
        %679 = vmatpush1.msra.mxu0 0.0
        %680 = vmatprep.subr.mxu0 0.0
        %681 = vmatpush1.msra.mxu0 0.0
        %682 = vmatprep.subr.mxu0 0.0
        %683 = vmatpush1.msra.mxu0 0.0
        %684 = vmatprep.subr.mxu0 0.0
        %685 = vmatpush1.msra.mxu0 0.0
        %686 = vmatprep.subr.mxu0 0.0
        %687 = vmatpush1.msra.mxu0 0.0
        %688 = vmatprep.subr.mxu0 0.0
        %689 = vmatpush1.msra.mxu0 0.0
        %690 = vmatprep.subr.mxu0 0.0
        %691 = vmatpush1.msra.mxu0 0.0
        %692 = vmatprep.mubr.f32.mxu0 0.0
        %693 = vmatmul.mubr.f32.gmra.mrb[0].mxu0 %v413
        %v694 = vpop.f32.mrb[0].mxu0
        %v695 = vadd.f32 0.0, %v694
        %v696 = vpop.f32.mrb[0].mxu0
        %697 = vdwg.mxu0
        %699 = vrot.lane.b32.xlu0 %v553, 96
        %v700 = vpop.permute.xlu0 %699
        %v702 = vsel %vm411, %v482, 0
        %v704 = vsel %vm411, %v700, 0
        %706 = vmatprep.subr.mxu0 0.0
        %707 = vmatpush1.xpose.msra.mxu0 %v704
        %708 = vmatprep.subr.mxu0 0.0
        %709 = vmatpush1.xpose.msra.mxu0 0.0
        %710 = vmatprep.subr.mxu0 0.0
        %711 = vmatpush1.xpose.msra.mxu0 0.0
        %712 = vmatprep.subr.mxu0 0.0
        %713 = vmatpush1.xpose.msra.mxu0 0.0
        %714 = vmatprep.subr.mxu0 0.0
        %715 = vmatpush1.xpose.msra.mxu0 0.0
        %716 = vmatprep.subr.mxu0 0.0
        %717 = vmatpush1.xpose.msra.mxu0 0.0
        %718 = vmatprep.subr.mxu0 0.0
        %719 = vmatpush1.xpose.msra.mxu0 0.0
        %720 = vmatprep.subr.mxu0 0.0
        %721 = vmatpush1.xpose.msra.mxu0 0.0
        %722 = vmatprep.subr.mxu0 0.0
        %723 = vmatpush1.xpose.msra.mxu0 0.0
        %724 = vmatprep.subr.mxu0 0.0
        %725 = vmatpush1.xpose.msra.mxu0 0.0
        %726 = vmatprep.subr.mxu0 0.0
        %727 = vmatpush1.xpose.msra.mxu0 0.0
        %728 = vmatprep.subr.mxu0 0.0
        %729 = vmatpush1.xpose.msra.mxu0 0.0
        %730 = vmatprep.subr.mxu0 0.0
        %731 = vmatpush1.xpose.msra.mxu0 0.0
        %732 = vmatprep.subr.mxu0 0.0
        %733 = vmatpush1.xpose.msra.mxu0 0.0
        %734 = vmatprep.subr.mxu0 0.0
        %735 = vmatpush1.xpose.msra.mxu0 0.0
        %736 = vmatprep.subr.mxu0 0.0
        %737 = vmatpush1.xpose.msra.mxu0 0.0
        %738 = vmatprep.subr.mxu0 0.0
        %739 = vmatpush1.xpose.msra.mxu0 0.0
        %740 = vmatprep.subr.mxu0 0.0
        %741 = vmatpush1.xpose.msra.mxu0 0.0
        %742 = vmatprep.subr.mxu0 0.0
        %743 = vmatpush1.xpose.msra.mxu0 0.0
        %744 = vmatprep.subr.mxu0 0.0
        %745 = vmatpush1.xpose.msra.mxu0 0.0
        %746 = vmatprep.subr.mxu0 0.0
        %747 = vmatpush1.xpose.msra.mxu0 0.0
        %748 = vmatprep.subr.mxu0 0.0
        %749 = vmatpush1.xpose.msra.mxu0 0.0
        %750 = vmatprep.subr.mxu0 0.0
        %751 = vmatpush1.xpose.msra.mxu0 0.0
        %752 = vmatprep.subr.mxu0 0.0
        %753 = vmatpush1.xpose.msra.mxu0 0.0
        %754 = vmatprep.subr.mxu0 0.0
        %755 = vmatpush1.xpose.msra.mxu0 0.0
        %756 = vmatprep.subr.mxu0 0.0
        %757 = vmatpush1.xpose.msra.mxu0 0.0
        %758 = vmatprep.subr.mxu0 0.0
        %759 = vmatpush1.xpose.msra.mxu0 0.0
        %760 = vmatprep.subr.mxu0 0.0
        %761 = vmatpush1.xpose.msra.mxu0 0.0
        %762 = vmatprep.subr.mxu0 0.0
        %763 = vmatpush1.xpose.msra.mxu0 0.0
        %764 = vmatprep.subr.mxu0 0.0
        %765 = vmatpush1.xpose.msra.mxu0 0.0
        %766 = vmatprep.subr.mxu0 0.0
        %767 = vmatpush1.xpose.msra.mxu0 0.0
        %768 = vmatprep.subr.mxu0 0.0
        %769 = vmatpush1.xpose.msra.mxu0 0.0
        %770 = vmatprep.mubr.f32.mxu0 0.0
        %771 = vmatmul.mubr.f32.gmra.mrb[0].mxu0 %v702
        %v772 = vpop.f32.mrb[0].mxu0
        %v773 = vadd.f32 0.0, %v772
        %v774 = vpop.f32.mrb[0].mxu0
        %775 = vdwg.mxu0
        %vm776 = vcmask 64512
        %v777 = vsel %vm776, %v773, -inf
        %778 = vmax.xlane.f32.xlu0 %v777
        %v779 = vpop.xlane.xlu0 %778
        %v780 = vsub.f32 %v773, %v779
        %v781 = vmul.f32 %v780, 1.442695
        %v782 = vpow.pop %v781
        %v783 = vsel %vm776, %v782, 0.0
        %784 = vadd.xlane.f32.xlu0 %v783
        %v785 = vpop.xlane.xlu0 %784
        %v786 = vrcp.pop %v785
        %v787 = vmul.f32 %v782, %v786
        %789 = vrot.lane.b32.xlu0 %v624, 64
        %v790 = vpop.permute.xlu0 %789
        %v793 = vsel %vm776, %v787, 0
        %795 = vmatprep.subr.mxu0 0.0
        %796 = vmatpush1.msra.mxu0 %v790
        %797 = vmatprep.subr.mxu0 0.0
        %798 = vmatpush1.msra.mxu0 0.0
        %799 = vmatprep.subr.mxu0 0.0
        %800 = vmatpush1.msra.mxu0 0.0
        %801 = vmatprep.subr.mxu0 0.0
        %802 = vmatpush1.msra.mxu0 0.0
        %803 = vmatprep.subr.mxu0 0.0
        %804 = vmatpush1.msra.mxu0 0.0
        %805 = vmatprep.subr.mxu0 0.0
        %806 = vmatpush1.msra.mxu0 0.0
        %807 = vmatprep.subr.mxu0 0.0
        %808 = vmatpush1.msra.mxu0 0.0
        %809 = vmatprep.subr.mxu0 0.0
        %810 = vmatpush1.msra.mxu0 0.0
        %811 = vmatprep.subr.mxu0 0.0
        %812 = vmatpush1.msra.mxu0 0.0
        %813 = vmatprep.subr.mxu0 0.0
        %814 = vmatpush1.msra.mxu0 0.0
        %815 = vmatprep.subr.mxu0 0.0
        %816 = vmatpush1.msra.mxu0 0.0
        %817 = vmatprep.subr.mxu0 0.0
        %818 = vmatpush1.msra.mxu0 0.0
        %819 = vmatprep.subr.mxu0 0.0
        %820 = vmatpush1.msra.mxu0 0.0
        %821 = vmatprep.subr.mxu0 0.0
        %822 = vmatpush1.msra.mxu0 0.0
        %823 = vmatprep.subr.mxu0 0.0
        %824 = vmatpush1.msra.mxu0 0.0
        %825 = vmatprep.subr.mxu0 0.0
        %826 = vmatpush1.msra.mxu0 0.0
        %827 = vmatprep.subr.mxu0 0.0
        %828 = vmatpush1.msra.mxu0 0.0
        %829 = vmatprep.subr.mxu0 0.0
        %830 = vmatpush1.msra.mxu0 0.0
        %831 = vmatprep.subr.mxu0 0.0
        %832 = vmatpush1.msra.mxu0 0.0
        %833 = vmatprep.subr.mxu0 0.0
        %834 = vmatpush1.msra.mxu0 0.0
        %835 = vmatprep.subr.mxu0 0.0
        %836 = vmatpush1.msra.mxu0 0.0
        %837 = vmatprep.subr.mxu0 0.0
        %838 = vmatpush1.msra.mxu0 0.0
        %839 = vmatprep.subr.mxu0 0.0
        %840 = vmatpush1.msra.mxu0 0.0
        %841 = vmatprep.subr.mxu0 0.0
        %842 = vmatpush1.msra.mxu0 0.0
        %843 = vmatprep.subr.mxu0 0.0
        %844 = vmatpush1.msra.mxu0 0.0
        %845 = vmatprep.subr.mxu0 0.0
        %846 = vmatpush1.msra.mxu0 0.0
        %847 = vmatprep.subr.mxu0 0.0
        %848 = vmatpush1.msra.mxu0 0.0
        %849 = vmatprep.subr.mxu0 0.0
        %850 = vmatpush1.msra.mxu0 0.0
        %851 = vmatprep.subr.mxu0 0.0
        %852 = vmatpush1.msra.mxu0 0.0
        %853 = vmatprep.subr.mxu0 0.0
        %854 = vmatpush1.msra.mxu0 0.0
        %855 = vmatprep.subr.mxu0 0.0
        %856 = vmatpush1.msra.mxu0 0.0
        %857 = vmatprep.subr.mxu0 0.0
        %858 = vmatpush1.msra.mxu0 0.0
        %859 = vmatprep.mubr.f32.mxu0 0.0
        %860 = vmatmul.mubr.f32.gmra.mrb[0].mxu0 %v793
        %v861 = vpop.f32.mrb[0].mxu0
        %v862 = vadd.f32 0.0, %v861
        %v863 = vpop.f32.mrb[0].mxu0
        %864 = vdwg.mxu0
        %865 = vrot.lane.b32.xlu0 %v482, 96
        %v866 = vpop.permute.xlu0 %865
        %867 = vrot.lane.b32.xlu0 %v553, 64
        %v868 = vpop.permute.xlu0 %867
        %v869 = vsel %vm411, %v866, 0
        %v871 = vsel %vm411, %v868, 0
        %873 = vmatprep.subr.mxu0 0.0
        %874 = vmatpush1.xpose.msra.mxu0 %v871
        %875 = vmatprep.subr.mxu0 0.0
        %876 = vmatpush1.xpose.msra.mxu0 0.0
        %877 = vmatprep.subr.mxu0 0.0
        %878 = vmatpush1.xpose.msra.mxu0 0.0
        %879 = vmatprep.subr.mxu0 0.0
        %880 = vmatpush1.xpose.msra.mxu0 0.0
        %881 = vmatprep.subr.mxu0 0.0
        %882 = vmatpush1.xpose.msra.mxu0 0.0
        %883 = vmatprep.subr.mxu0 0.0
        %884 = vmatpush1.xpose.msra.mxu0 0.0
        %885 = vmatprep.subr.mxu0 0.0
        %886 = vmatpush1.xpose.msra.mxu0 0.0
        %887 = vmatprep.subr.mxu0 0.0
        %888 = vmatpush1.xpose.msra.mxu0 0.0
        %889 = vmatprep.subr.mxu0 0.0
        %890 = vmatpush1.xpose.msra.mxu0 0.0
        %891 = vmatprep.subr.mxu0 0.0
        %892 = vmatpush1.xpose.msra.mxu0 0.0
        %893 = vmatprep.subr.mxu0 0.0
        %894 = vmatpush1.xpose.msra.mxu0 0.0
        %895 = vmatprep.subr.mxu0 0.0
        %896 = vmatpush1.xpose.msra.mxu0 0.0
        %897 = vmatprep.subr.mxu0 0.0
        %898 = vmatpush1.xpose.msra.mxu0 0.0
        %899 = vmatprep.subr.mxu0 0.0
        %900 = vmatpush1.xpose.msra.mxu0 0.0
        %901 = vmatprep.subr.mxu0 0.0
        %902 = vmatpush1.xpose.msra.mxu0 0.0
        %903 = vmatprep.subr.mxu0 0.0
        %904 = vmatpush1.xpose.msra.mxu0 0.0
        %905 = vmatprep.subr.mxu0 0.0
        %906 = vmatpush1.xpose.msra.mxu0 0.0
        %907 = vmatprep.subr.mxu0 0.0
        %908 = vmatpush1.xpose.msra.mxu0 0.0
        %909 = vmatprep.subr.mxu0 0.0
        %910 = vmatpush1.xpose.msra.mxu0 0.0
        %911 = vmatprep.subr.mxu0 0.0
        %912 = vmatpush1.xpose.msra.mxu0 0.0
        %913 = vmatprep.subr.mxu0 0.0
        %914 = vmatpush1.xpose.msra.mxu0 0.0
        %915 = vmatprep.subr.mxu0 0.0
        %916 = vmatpush1.xpose.msra.mxu0 0.0
        %917 = vmatprep.subr.mxu0 0.0
        %918 = vmatpush1.xpose.msra.mxu0 0.0
        %919 = vmatprep.subr.mxu0 0.0
        %920 = vmatpush1.xpose.msra.mxu0 0.0
        %921 = vmatprep.subr.mxu0 0.0
        %922 = vmatpush1.xpose.msra.mxu0 0.0
        %923 = vmatprep.subr.mxu0 0.0
        %924 = vmatpush1.xpose.msra.mxu0 0.0
        %925 = vmatprep.subr.mxu0 0.0
        %926 = vmatpush1.xpose.msra.mxu0 0.0
        %927 = vmatprep.subr.mxu0 0.0
        %928 = vmatpush1.xpose.msra.mxu0 0.0
        %929 = vmatprep.subr.mxu0 0.0
        %930 = vmatpush1.xpose.msra.mxu0 0.0
        %931 = vmatprep.subr.mxu0 0.0
        %932 = vmatpush1.xpose.msra.mxu0 0.0
        %933 = vmatprep.subr.mxu0 0.0
        %934 = vmatpush1.xpose.msra.mxu0 0.0
        %935 = vmatprep.subr.mxu0 0.0
        %936 = vmatpush1.xpose.msra.mxu0 0.0
        %937 = vmatprep.mubr.f32.mxu0 0.0
        %938 = vmatmul.mubr.f32.gmra.mrb[0].mxu0 %v869
        %v939 = vpop.f32.mrb[0].mxu0
        %v940 = vadd.f32 0.0, %v939
        %v941 = vpop.f32.mrb[0].mxu0
        %942 = vdwg.mxu0
        %v943 = vsel %vm776, %v940, -inf
        %944 = vmax.xlane.f32.xlu0 %v943
        %v945 = vpop.xlane.xlu0 %944
        %v946 = vsub.f32 %v940, %v945
        %v947 = vmul.f32 %v946, 1.442695
        %v948 = vpow.pop %v947
        %v949 = vsel %vm776, %v948, 0.0
        %950 = vadd.xlane.f32.xlu0 %v949
        %v951 = vpop.xlane.xlu0 %950
        %v952 = vrcp.pop %v951
        %v953 = vmul.f32 %v948, %v952
        %954 = vrot.lane.b32.xlu0 %v624, 32
        %v955 = vpop.permute.xlu0 %954
        %v958 = vsel %vm776, %v953, 0
        %960 = vmatprep.subr.mxu0 0.0
        %961 = vmatpush1.msra.mxu0 %v955
        %962 = vmatprep.subr.mxu0 0.0
        %963 = vmatpush1.msra.mxu0 0.0
        %964 = vmatprep.subr.mxu0 0.0
        %965 = vmatpush1.msra.mxu0 0.0
        %966 = vmatprep.subr.mxu0 0.0
        %967 = vmatpush1.msra.mxu0 0.0
        %968 = vmatprep.subr.mxu0 0.0
        %969 = vmatpush1.msra.mxu0 0.0
        %970 = vmatprep.subr.mxu0 0.0
        %971 = vmatpush1.msra.mxu0 0.0
        %972 = vmatprep.subr.mxu0 0.0
        %973 = vmatpush1.msra.mxu0 0.0
        %974 = vmatprep.subr.mxu0 0.0
        %975 = vmatpush1.msra.mxu0 0.0
        %976 = vmatprep.subr.mxu0 0.0
        %977 = vmatpush1.msra.mxu0 0.0
        %978 = vmatprep.subr.mxu0 0.0
        %979 = vmatpush1.msra.mxu0 0.0
        %980 = vmatprep.subr.mxu0 0.0
        %981 = vmatpush1.msra.mxu0 0.0
        %982 = vmatprep.subr.mxu0 0.0
        %983 = vmatpush1.msra.mxu0 0.0
        %984 = vmatprep.subr.mxu0 0.0
        %985 = vmatpush1.msra.mxu0 0.0
        %986 = vmatprep.subr.mxu0 0.0
        %987 = vmatpush1.msra.mxu0 0.0
        %988 = vmatprep.subr.mxu0 0.0
        %989 = vmatpush1.msra.mxu0 0.0
        %990 = vmatprep.subr.mxu0 0.0
        %991 = vmatpush1.msra.mxu0 0.0
        %992 = vmatprep.subr.mxu0 0.0
        %993 = vmatpush1.msra.mxu0 0.0
        %994 = vmatprep.subr.mxu0 0.0
        %995 = vmatpush1.msra.mxu0 0.0
        %996 = vmatprep.subr.mxu0 0.0
        %997 = vmatpush1.msra.mxu0 0.0
        %998 = vmatprep.subr.mxu0 0.0
        %999 = vmatpush1.msra.mxu0 0.0
        %1000 = vmatprep.subr.mxu0 0.0
        %1001 = vmatpush1.msra.mxu0 0.0
        %1002 = vmatprep.subr.mxu0 0.0
        %1003 = vmatpush1.msra.mxu0 0.0
        %1004 = vmatprep.subr.mxu0 0.0
        %1005 = vmatpush1.msra.mxu0 0.0
        %1006 = vmatprep.subr.mxu0 0.0
        %1007 = vmatpush1.msra.mxu0 0.0
        %1008 = vmatprep.subr.mxu0 0.0
        %1009 = vmatpush1.msra.mxu0 0.0
        %1010 = vmatprep.subr.mxu0 0.0
        %1011 = vmatpush1.msra.mxu0 0.0
        %1012 = vmatprep.subr.mxu0 0.0
        %1013 = vmatpush1.msra.mxu0 0.0
        %1014 = vmatprep.subr.mxu0 0.0
        %1015 = vmatpush1.msra.mxu0 0.0
        %1016 = vmatprep.subr.mxu0 0.0
        %1017 = vmatpush1.msra.mxu0 0.0
        %1018 = vmatprep.subr.mxu0 0.0
        %1019 = vmatpush1.msra.mxu0 0.0
        %1020 = vmatprep.subr.mxu0 0.0
        %1021 = vmatpush1.msra.mxu0 0.0
        %1022 = vmatprep.subr.mxu0 0.0
        %1023 = vmatpush1.msra.mxu0 0.0
        %1024 = vmatprep.mubr.f32.mxu0 0.0
        %1025 = vmatmul.mubr.f32.gmra.mrb[0].mxu0 %v958
        %v1026 = vpop.f32.mrb[0].mxu0
        %v1027 = vadd.f32 0.0, %v1026
        %v1028 = vpop.f32.mrb[0].mxu0
        %1029 = vdwg.mxu0
        %1030 = vrot.lane.b32.xlu0 %v482, 64
        %v1031 = vpop.permute.xlu0 %1030
        %1032 = vrot.lane.b32.xlu0 %v553, 32
        %v1033 = vpop.permute.xlu0 %1032
        %v1034 = vsel %vm411, %v1031, 0
        %v1036 = vsel %vm411, %v1033, 0
        %1038 = vmatprep.subr.mxu0 0.0
        %1039 = vmatpush1.xpose.msra.mxu0 %v1036
        %1040 = vmatprep.subr.mxu0 0.0
        %1041 = vmatpush1.xpose.msra.mxu0 0.0
        %1042 = vmatprep.subr.mxu0 0.0
        %1043 = vmatpush1.xpose.msra.mxu0 0.0
        %1044 = vmatprep.subr.mxu0 0.0
        %1045 = vmatpush1.xpose.msra.mxu0 0.0
        %1046 = vmatprep.subr.mxu0 0.0
        %1047 = vmatpush1.xpose.msra.mxu0 0.0
        %1048 = vmatprep.subr.mxu0 0.0
        %1049 = vmatpush1.xpose.msra.mxu0 0.0
        %1050 = vmatprep.subr.mxu0 0.0
        %1051 = vmatpush1.xpose.msra.mxu0 0.0
        %1052 = vmatprep.subr.mxu0 0.0
        %1053 = vmatpush1.xpose.msra.mxu0 0.0
        %1054 = vmatprep.subr.mxu0 0.0
        %1055 = vmatpush1.xpose.msra.mxu0 0.0
        %1056 = vmatprep.subr.mxu0 0.0
        %1057 = vmatpush1.xpose.msra.mxu0 0.0
        %1058 = vmatprep.subr.mxu0 0.0
        %1059 = vmatpush1.xpose.msra.mxu0 0.0
        %1060 = vmatprep.subr.mxu0 0.0
        %1061 = vmatpush1.xpose.msra.mxu0 0.0
        %1062 = vmatprep.subr.mxu0 0.0
        %1063 = vmatpush1.xpose.msra.mxu0 0.0
        %1064 = vmatprep.subr.mxu0 0.0
        %1065 = vmatpush1.xpose.msra.mxu0 0.0
        %1066 = vmatprep.subr.mxu0 0.0
        %1067 = vmatpush1.xpose.msra.mxu0 0.0
        %1068 = vmatprep.subr.mxu0 0.0
        %1069 = vmatpush1.xpose.msra.mxu0 0.0
        %1070 = vmatprep.subr.mxu0 0.0
        %1071 = vmatpush1.xpose.msra.mxu0 0.0
        %1072 = vmatprep.subr.mxu0 0.0
        %1073 = vmatpush1.xpose.msra.mxu0 0.0
        %1074 = vmatprep.subr.mxu0 0.0
        %1075 = vmatpush1.xpose.msra.mxu0 0.0
        %1076 = vmatprep.subr.mxu0 0.0
        %1077 = vmatpush1.xpose.msra.mxu0 0.0
        %1078 = vmatprep.subr.mxu0 0.0
        %1079 = vmatpush1.xpose.msra.mxu0 0.0
        %1080 = vmatprep.subr.mxu0 0.0
        %1081 = vmatpush1.xpose.msra.mxu0 0.0
        %1082 = vmatprep.subr.mxu0 0.0
        %1083 = vmatpush1.xpose.msra.mxu0 0.0
        %1084 = vmatprep.subr.mxu0 0.0
        %1085 = vmatpush1.xpose.msra.mxu0 0.0
        %1086 = vmatprep.subr.mxu0 0.0
        %1087 = vmatpush1.xpose.msra.mxu0 0.0
        %1088 = vmatprep.subr.mxu0 0.0
        %1089 = vmatpush1.xpose.msra.mxu0 0.0
        %1090 = vmatprep.subr.mxu0 0.0
        %1091 = vmatpush1.xpose.msra.mxu0 0.0
        %1092 = vmatprep.subr.mxu0 0.0
        %1093 = vmatpush1.xpose.msra.mxu0 0.0
        %1094 = vmatprep.subr.mxu0 0.0
        %1095 = vmatpush1.xpose.msra.mxu0 0.0
        %1096 = vmatprep.subr.mxu0 0.0
        %1097 = vmatpush1.xpose.msra.mxu0 0.0
        %1098 = vmatprep.subr.mxu0 0.0
        %1099 = vmatpush1.xpose.msra.mxu0 0.0
        %1100 = vmatprep.subr.mxu0 0.0
        %1101 = vmatpush1.xpose.msra.mxu0 0.0
        %1102 = vmatprep.mubr.f32.mxu0 0.0
        %1103 = vmatmul.mubr.f32.gmra.mrb[0].mxu0 %v1034
        %v1104 = vpop.f32.mrb[0].mxu0
        %v1105 = vadd.f32 0.0, %v1104
        %v1106 = vpop.f32.mrb[0].mxu0
        %1107 = vdwg.mxu0
        %v1108 = vsel %vm776, %v1105, -inf
        %1109 = vmax.xlane.f32.xlu0 %v1108
        %v1110 = vpop.xlane.xlu0 %1109
        %v1111 = vsub.f32 %v1105, %v1110
        %v1112 = vmul.f32 %v1111, 1.442695
        %v1113 = vpow.pop %v1112
        %v1114 = vsel %vm776, %v1113, 0.0
        %1115 = vadd.xlane.f32.xlu0 %v1114
        %v1116 = vpop.xlane.xlu0 %1115
        %v1117 = vrcp.pop %v1116
        %v1118 = vmul.f32 %v1113, %v1117
        %v1120 = vsel %vm776, %v1118, 0
        %1122 = vmatprep.subr.mxu0 0.0
        %1123 = vmatpush1.msra.mxu0 %v626
        %1124 = vmatprep.subr.mxu0 0.0
        %1125 = vmatpush1.msra.mxu0 0.0
        %1126 = vmatprep.subr.mxu0 0.0
        %1127 = vmatpush1.msra.mxu0 0.0
        %1128 = vmatprep.subr.mxu0 0.0
        %1129 = vmatpush1.msra.mxu0 0.0
        %1130 = vmatprep.subr.mxu0 0.0
        %1131 = vmatpush1.msra.mxu0 0.0
        %1132 = vmatprep.subr.mxu0 0.0
        %1133 = vmatpush1.msra.mxu0 0.0
        %1134 = vmatprep.subr.mxu0 0.0
        %1135 = vmatpush1.msra.mxu0 0.0
        %1136 = vmatprep.subr.mxu0 0.0
        %1137 = vmatpush1.msra.mxu0 0.0
        %1138 = vmatprep.subr.mxu0 0.0
        %1139 = vmatpush1.msra.mxu0 0.0
        %1140 = vmatprep.subr.mxu0 0.0
        %1141 = vmatpush1.msra.mxu0 0.0
        %1142 = vmatprep.subr.mxu0 0.0
        %1143 = vmatpush1.msra.mxu0 0.0
        %1144 = vmatprep.subr.mxu0 0.0
        %1145 = vmatpush1.msra.mxu0 0.0
        %1146 = vmatprep.subr.mxu0 0.0
        %1147 = vmatpush1.msra.mxu0 0.0
        %1148 = vmatprep.subr.mxu0 0.0
        %1149 = vmatpush1.msra.mxu0 0.0
        %1150 = vmatprep.subr.mxu0 0.0
        %1151 = vmatpush1.msra.mxu0 0.0
        %1152 = vmatprep.subr.mxu0 0.0
        %1153 = vmatpush1.msra.mxu0 0.0
        %1154 = vmatprep.subr.mxu0 0.0
        %1155 = vmatpush1.msra.mxu0 0.0
        %1156 = vmatprep.subr.mxu0 0.0
        %1157 = vmatpush1.msra.mxu0 0.0
        %1158 = vmatprep.subr.mxu0 0.0
        %1159 = vmatpush1.msra.mxu0 0.0
        %1160 = vmatprep.subr.mxu0 0.0
        %1161 = vmatpush1.msra.mxu0 0.0
        %1162 = vmatprep.subr.mxu0 0.0
        %1163 = vmatpush1.msra.mxu0 0.0
        %1164 = vmatprep.subr.mxu0 0.0
        %1165 = vmatpush1.msra.mxu0 0.0
        %1166 = vmatprep.subr.mxu0 0.0
        %1167 = vmatpush1.msra.mxu0 0.0
        %1168 = vmatprep.subr.mxu0 0.0
        %1169 = vmatpush1.msra.mxu0 0.0
        %1170 = vmatprep.subr.mxu0 0.0
        %1171 = vmatpush1.msra.mxu0 0.0
        %1172 = vmatprep.subr.mxu0 0.0
        %1173 = vmatpush1.msra.mxu0 0.0
        %1174 = vmatprep.subr.mxu0 0.0
        %1175 = vmatpush1.msra.mxu0 0.0
        %1176 = vmatprep.subr.mxu0 0.0
        %1177 = vmatpush1.msra.mxu0 0.0
        %1178 = vmatprep.subr.mxu0 0.0
        %1179 = vmatpush1.msra.mxu0 0.0
        %1180 = vmatprep.subr.mxu0 0.0
        %1181 = vmatpush1.msra.mxu0 0.0
        %1182 = vmatprep.subr.mxu0 0.0
        %1183 = vmatpush1.msra.mxu0 0.0
        %1184 = vmatprep.subr.mxu0 0.0
        %1185 = vmatpush1.msra.mxu0 0.0
        %1186 = vmatprep.mubr.f32.mxu0 0.0
        %1187 = vmatmul.mubr.f32.gmra.mrb[0].mxu0 %v1120
        %v1188 = vpop.f32.mrb[0].mxu0
        %v1189 = vadd.f32 0.0, %v1188
        %v1190 = vpop.f32.mrb[0].mxu0
        %1191 = vdwg.mxu0
        %1192 = vrot.lane.b32.xlu0 %v482, 32
        %v1193 = vpop.permute.xlu0 %1192
        %v1194 = vsel %vm411, %v1193, 0
        %v1197 = vsel %vm411, %v555, 0
        %1199 = vmatprep.subr.mxu0 0.0
        %1200 = vmatpush1.xpose.msra.mxu0 %v1197
        %1201 = vmatprep.subr.mxu0 0.0
        %1202 = vmatpush1.xpose.msra.mxu0 0.0
        %1203 = vmatprep.subr.mxu0 0.0
        %1204 = vmatpush1.xpose.msra.mxu0 0.0
        %1205 = vmatprep.subr.mxu0 0.0
        %1206 = vmatpush1.xpose.msra.mxu0 0.0
        %1207 = vmatprep.subr.mxu0 0.0
        %1208 = vmatpush1.xpose.msra.mxu0 0.0
        %1209 = vmatprep.subr.mxu0 0.0
        %1210 = vmatpush1.xpose.msra.mxu0 0.0
        %1211 = vmatprep.subr.mxu0 0.0
        %1212 = vmatpush1.xpose.msra.mxu0 0.0
        %1213 = vmatprep.subr.mxu0 0.0
        %1214 = vmatpush1.xpose.msra.mxu0 0.0
        %1215 = vmatprep.subr.mxu0 0.0
        %1216 = vmatpush1.xpose.msra.mxu0 0.0
        %1217 = vmatprep.subr.mxu0 0.0
        %1218 = vmatpush1.xpose.msra.mxu0 0.0
        %1219 = vmatprep.subr.mxu0 0.0
        %1220 = vmatpush1.xpose.msra.mxu0 0.0
        %1221 = vmatprep.subr.mxu0 0.0
        %1222 = vmatpush1.xpose.msra.mxu0 0.0
        %1223 = vmatprep.subr.mxu0 0.0
        %1224 = vmatpush1.xpose.msra.mxu0 0.0
        %1225 = vmatprep.subr.mxu0 0.0
        %1226 = vmatpush1.xpose.msra.mxu0 0.0
        %1227 = vmatprep.subr.mxu0 0.0
        %1228 = vmatpush1.xpose.msra.mxu0 0.0
        %1229 = vmatprep.subr.mxu0 0.0
        %1230 = vmatpush1.xpose.msra.mxu0 0.0
        %1231 = vmatprep.subr.mxu0 0.0
        %1232 = vmatpush1.xpose.msra.mxu0 0.0
        %1233 = vmatprep.subr.mxu0 0.0
        %1234 = vmatpush1.xpose.msra.mxu0 0.0
        %1235 = vmatprep.subr.mxu0 0.0
        %1236 = vmatpush1.xpose.msra.mxu0 0.0
        %1237 = vmatprep.subr.mxu0 0.0
        %1238 = vmatpush1.xpose.msra.mxu0 0.0
        %1239 = vmatprep.subr.mxu0 0.0
        %1240 = vmatpush1.xpose.msra.mxu0 0.0
        %1241 = vmatprep.subr.mxu0 0.0
        %1242 = vmatpush1.xpose.msra.mxu0 0.0
        %1243 = vmatprep.subr.mxu0 0.0
        %1244 = vmatpush1.xpose.msra.mxu0 0.0
        %1245 = vmatprep.subr.mxu0 0.0
        %1246 = vmatpush1.xpose.msra.mxu0 0.0
        %1247 = vmatprep.subr.mxu0 0.0
        %1248 = vmatpush1.xpose.msra.mxu0 0.0
        %1249 = vmatprep.subr.mxu0 0.0
        %1250 = vmatpush1.xpose.msra.mxu0 0.0
        %1251 = vmatprep.subr.mxu0 0.0
        %1252 = vmatpush1.xpose.msra.mxu0 0.0
        %1253 = vmatprep.subr.mxu0 0.0
        %1254 = vmatpush1.xpose.msra.mxu0 0.0
        %1255 = vmatprep.subr.mxu0 0.0
        %1256 = vmatpush1.xpose.msra.mxu0 0.0
        %1257 = vmatprep.subr.mxu0 0.0
        %1258 = vmatpush1.xpose.msra.mxu0 0.0
        %1259 = vmatprep.subr.mxu0 0.0
        %1260 = vmatpush1.xpose.msra.mxu0 0.0
        %1261 = vmatprep.subr.mxu0 0.0
        %1262 = vmatpush1.xpose.msra.mxu0 0.0
        %1263 = vmatprep.mubr.f32.mxu0 0.0
        %1264 = vmatmul.mubr.f32.gmra.mrb[0].mxu0 %v1194
        %v1265 = vpop.f32.mrb[0].mxu0
        %v1266 = vadd.f32 0.0, %v1265
        %v1267 = vpop.f32.mrb[0].mxu0
        %1268 = vdwg.mxu0
        %v1269 = vsel %vm776, %v1266, -inf
        %1270 = vmax.xlane.f32.xlu0 %v1269
        %v1271 = vpop.xlane.xlu0 %1270
        %v1272 = vsub.f32 %v1266, %v1271
        %v1273 = vmul.f32 %v1272, 1.442695
        %v1274 = vpow.pop %v1273
        %v1275 = vsel %vm776, %v1274, 0.0
        %1276 = vadd.xlane.f32.xlu0 %v1275
        %v1277 = vpop.xlane.xlu0 %1276
        %v1278 = vrcp.pop %v1277
        %v1279 = vmul.f32 %v1274, %v1278
        %1281 = vrot.lane.b32.xlu0 %v626, 96
        %v1282 = vpop.permute.xlu0 %1281
        %v1285 = vsel %vm776, %v1279, 0
        %1287 = vmatprep.subr.mxu0 0.0
        %1288 = vmatpush1.msra.mxu0 %v1282
        %1289 = vmatprep.subr.mxu0 0.0
        %1290 = vmatpush1.msra.mxu0 0.0
        %1291 = vmatprep.subr.mxu0 0.0
        %1292 = vmatpush1.msra.mxu0 0.0
        %1293 = vmatprep.subr.mxu0 0.0
        %1294 = vmatpush1.msra.mxu0 0.0
        %1295 = vmatprep.subr.mxu0 0.0
        %1296 = vmatpush1.msra.mxu0 0.0
        %1297 = vmatprep.subr.mxu0 0.0
        %1298 = vmatpush1.msra.mxu0 0.0
        %1299 = vmatprep.subr.mxu0 0.0
        %1300 = vmatpush1.msra.mxu0 0.0
        %1301 = vmatprep.subr.mxu0 0.0
        %1302 = vmatpush1.msra.mxu0 0.0
        %1303 = vmatprep.subr.mxu0 0.0
        %1304 = vmatpush1.msra.mxu0 0.0
        %1305 = vmatprep.subr.mxu0 0.0
        %1306 = vmatpush1.msra.mxu0 0.0
        %1307 = vmatprep.subr.mxu0 0.0
        %1308 = vmatpush1.msra.mxu0 0.0
        %1309 = vmatprep.subr.mxu0 0.0
        %1310 = vmatpush1.msra.mxu0 0.0
        %1311 = vmatprep.subr.mxu0 0.0
        %1312 = vmatpush1.msra.mxu0 0.0
        %1313 = vmatprep.subr.mxu0 0.0
        %1314 = vmatpush1.msra.mxu0 0.0
        %1315 = vmatprep.subr.mxu0 0.0
        %1316 = vmatpush1.msra.mxu0 0.0
        %1317 = vmatprep.subr.mxu0 0.0
        %1318 = vmatpush1.msra.mxu0 0.0
        %1319 = vmatprep.subr.mxu0 0.0
        %1320 = vmatpush1.msra.mxu0 0.0
        %1321 = vmatprep.subr.mxu0 0.0
        %1322 = vmatpush1.msra.mxu0 0.0
        %1323 = vmatprep.subr.mxu0 0.0
        %1324 = vmatpush1.msra.mxu0 0.0
        %1325 = vmatprep.subr.mxu0 0.0
        %1326 = vmatpush1.msra.mxu0 0.0
        %1327 = vmatprep.subr.mxu0 0.0
        %1328 = vmatpush1.msra.mxu0 0.0
        %1329 = vmatprep.subr.mxu0 0.0
        %1330 = vmatpush1.msra.mxu0 0.0
        %1331 = vmatprep.subr.mxu0 0.0
        %1332 = vmatpush1.msra.mxu0 0.0
        %1333 = vmatprep.subr.mxu0 0.0
        %1334 = vmatpush1.msra.mxu0 0.0
        %1335 = vmatprep.subr.mxu0 0.0
        %1336 = vmatpush1.msra.mxu0 0.0
        %1337 = vmatprep.subr.mxu0 0.0
        %1338 = vmatpush1.msra.mxu0 0.0
        %1339 = vmatprep.subr.mxu0 0.0
        %1340 = vmatpush1.msra.mxu0 0.0
        %1341 = vmatprep.subr.mxu0 0.0
        %1342 = vmatpush1.msra.mxu0 0.0
        %1343 = vmatprep.subr.mxu0 0.0
        %1344 = vmatpush1.msra.mxu0 0.0
        %1345 = vmatprep.subr.mxu0 0.0
        %1346 = vmatpush1.msra.mxu0 0.0
        %1347 = vmatprep.subr.mxu0 0.0
        %1348 = vmatpush1.msra.mxu0 0.0
        %1349 = vmatprep.subr.mxu0 0.0
        %1350 = vmatpush1.msra.mxu0 0.0
        %1351 = vmatprep.mubr.f32.mxu0 0.0
        %1352 = vmatmul.mubr.f32.gmra.mrb[0].mxu0 %v1285
        %v1353 = vpop.f32.mrb[0].mxu0
        %v1354 = vadd.f32 0.0, %v1353
        %v1355 = vpop.f32.mrb[0].mxu0
        %1356 = vdwg.mxu0
        %1357 = vrot.lane.b32.xlu0 %v555, 96
        %v1358 = vpop.permute.xlu0 %1357
        %v1360 = vsel %vm411, %v484, 0
        %v1362 = vsel %vm411, %v1358, 0
        %1364 = vmatprep.subr.mxu0 0.0
        %1365 = vmatpush1.xpose.msra.mxu0 %v1362
        %1366 = vmatprep.subr.mxu0 0.0
        %1367 = vmatpush1.xpose.msra.mxu0 0.0
        %1368 = vmatprep.subr.mxu0 0.0
        %1369 = vmatpush1.xpose.msra.mxu0 0.0
        %1370 = vmatprep.subr.mxu0 0.0
        %1371 = vmatpush1.xpose.msra.mxu0 0.0
        %1372 = vmatprep.subr.mxu0 0.0
        %1373 = vmatpush1.xpose.msra.mxu0 0.0
        %1374 = vmatprep.subr.mxu0 0.0
        %1375 = vmatpush1.xpose.msra.mxu0 0.0
        %1376 = vmatprep.subr.mxu0 0.0
        %1377 = vmatpush1.xpose.msra.mxu0 0.0
        %1378 = vmatprep.subr.mxu0 0.0
        %1379 = vmatpush1.xpose.msra.mxu0 0.0
        %1380 = vmatprep.subr.mxu0 0.0
        %1381 = vmatpush1.xpose.msra.mxu0 0.0
        %1382 = vmatprep.subr.mxu0 0.0
        %1383 = vmatpush1.xpose.msra.mxu0 0.0
        %1384 = vmatprep.subr.mxu0 0.0
        %1385 = vmatpush1.xpose.msra.mxu0 0.0
        %1386 = vmatprep.subr.mxu0 0.0
        %1387 = vmatpush1.xpose.msra.mxu0 0.0
        %1388 = vmatprep.subr.mxu0 0.0
        %1389 = vmatpush1.xpose.msra.mxu0 0.0
        %1390 = vmatprep.subr.mxu0 0.0
        %1391 = vmatpush1.xpose.msra.mxu0 0.0
        %1392 = vmatprep.subr.mxu0 0.0
        %1393 = vmatpush1.xpose.msra.mxu0 0.0
        %1394 = vmatprep.subr.mxu0 0.0
        %1395 = vmatpush1.xpose.msra.mxu0 0.0
        %1396 = vmatprep.subr.mxu0 0.0
        %1397 = vmatpush1.xpose.msra.mxu0 0.0
        %1398 = vmatprep.subr.mxu0 0.0
        %1399 = vmatpush1.xpose.msra.mxu0 0.0
        %1400 = vmatprep.subr.mxu0 0.0
        %1401 = vmatpush1.xpose.msra.mxu0 0.0
        %1402 = vmatprep.subr.mxu0 0.0
        %1403 = vmatpush1.xpose.msra.mxu0 0.0
        %1404 = vmatprep.subr.mxu0 0.0
        %1405 = vmatpush1.xpose.msra.mxu0 0.0
        %1406 = vmatprep.subr.mxu0 0.0
        %1407 = vmatpush1.xpose.msra.mxu0 0.0
        %1408 = vmatprep.subr.mxu0 0.0
        %1409 = vmatpush1.xpose.msra.mxu0 0.0
        %1410 = vmatprep.subr.mxu0 0.0
        %1411 = vmatpush1.xpose.msra.mxu0 0.0
        %1412 = vmatprep.subr.mxu0 0.0
        %1413 = vmatpush1.xpose.msra.mxu0 0.0
        %1414 = vmatprep.subr.mxu0 0.0
        %1415 = vmatpush1.xpose.msra.mxu0 0.0
        %1416 = vmatprep.subr.mxu0 0.0
        %1417 = vmatpush1.xpose.msra.mxu0 0.0
        %1418 = vmatprep.subr.mxu0 0.0
        %1419 = vmatpush1.xpose.msra.mxu0 0.0
        %1420 = vmatprep.subr.mxu0 0.0
        %1421 = vmatpush1.xpose.msra.mxu0 0.0
        %1422 = vmatprep.subr.mxu0 0.0
        %1423 = vmatpush1.xpose.msra.mxu0 0.0
        %1424 = vmatprep.subr.mxu0 0.0
        %1425 = vmatpush1.xpose.msra.mxu0 0.0
        %1426 = vmatprep.subr.mxu0 0.0
        %1427 = vmatpush1.xpose.msra.mxu0 0.0
        %1428 = vmatprep.mubr.f32.mxu0 0.0
        %1429 = vmatmul.mubr.f32.gmra.mrb[0].mxu0 %v1360
        %v1430 = vpop.f32.mrb[0].mxu0
        %v1431 = vadd.f32 0.0, %v1430
        %v1432 = vpop.f32.mrb[0].mxu0
        %1433 = vdwg.mxu0
        %v1434 = vsel %vm776, %v1431, -inf
        %1435 = vmax.xlane.f32.xlu0 %v1434
        %v1436 = vpop.xlane.xlu0 %1435
        %v1437 = vsub.f32 %v1431, %v1436
        %v1438 = vmul.f32 %v1437, 1.442695
        %v1439 = vpow.pop %v1438
        %v1440 = vsel %vm776, %v1439, 0.0
        %1441 = vadd.xlane.f32.xlu0 %v1440
        %v1442 = vpop.xlane.xlu0 %1441
        %v1443 = vrcp.pop %v1442
        %v1444 = vmul.f32 %v1439, %v1443
        %1445 = vrot.lane.b32.xlu0 %v626, 64
        %v1446 = vpop.permute.xlu0 %1445
        %v1449 = vsel %vm776, %v1444, 0
        %1451 = vmatprep.subr.mxu0 0.0
        %1452 = vmatpush1.msra.mxu0 %v1446
        %1453 = vmatprep.subr.mxu0 0.0
        %1454 = vmatpush1.msra.mxu0 0.0
        %1455 = vmatprep.subr.mxu0 0.0
        %1456 = vmatpush1.msra.mxu0 0.0
        %1457 = vmatprep.subr.mxu0 0.0
        %1458 = vmatpush1.msra.mxu0 0.0
        %1459 = vmatprep.subr.mxu0 0.0
        %1460 = vmatpush1.msra.mxu0 0.0
        %1461 = vmatprep.subr.mxu0 0.0
        %1462 = vmatpush1.msra.mxu0 0.0
        %1463 = vmatprep.subr.mxu0 0.0
        %1464 = vmatpush1.msra.mxu0 0.0
        %1465 = vmatprep.subr.mxu0 0.0
        %1466 = vmatpush1.msra.mxu0 0.0
        %1467 = vmatprep.subr.mxu0 0.0
        %1468 = vmatpush1.msra.mxu0 0.0
        %1469 = vmatprep.subr.mxu0 0.0
        %1470 = vmatpush1.msra.mxu0 0.0
        %1471 = vmatprep.subr.mxu0 0.0
        %1472 = vmatpush1.msra.mxu0 0.0
        %1473 = vmatprep.subr.mxu0 0.0
        %1474 = vmatpush1.msra.mxu0 0.0
        %1475 = vmatprep.subr.mxu0 0.0
        %1476 = vmatpush1.msra.mxu0 0.0
        %1477 = vmatprep.subr.mxu0 0.0
        %1478 = vmatpush1.msra.mxu0 0.0
        %1479 = vmatprep.subr.mxu0 0.0
        %1480 = vmatpush1.msra.mxu0 0.0
        %1481 = vmatprep.subr.mxu0 0.0
        %1482 = vmatpush1.msra.mxu0 0.0
        %1483 = vmatprep.subr.mxu0 0.0
        %1484 = vmatpush1.msra.mxu0 0.0
        %1485 = vmatprep.subr.mxu0 0.0
        %1486 = vmatpush1.msra.mxu0 0.0
        %1487 = vmatprep.subr.mxu0 0.0
        %1488 = vmatpush1.msra.mxu0 0.0
        %1489 = vmatprep.subr.mxu0 0.0
        %1490 = vmatpush1.msra.mxu0 0.0
        %1491 = vmatprep.subr.mxu0 0.0
        %1492 = vmatpush1.msra.mxu0 0.0
        %1493 = vmatprep.subr.mxu0 0.0
        %1494 = vmatpush1.msra.mxu0 0.0
        %1495 = vmatprep.subr.mxu0 0.0
        %1496 = vmatpush1.msra.mxu0 0.0
        %1497 = vmatprep.subr.mxu0 0.0
        %1498 = vmatpush1.msra.mxu0 0.0
        %1499 = vmatprep.subr.mxu0 0.0
        %1500 = vmatpush1.msra.mxu0 0.0
        %1501 = vmatprep.subr.mxu0 0.0
        %1502 = vmatpush1.msra.mxu0 0.0
        %1503 = vmatprep.subr.mxu0 0.0
        %1504 = vmatpush1.msra.mxu0 0.0
        %1505 = vmatprep.subr.mxu0 0.0
        %1506 = vmatpush1.msra.mxu0 0.0
        %1507 = vmatprep.subr.mxu0 0.0
        %1508 = vmatpush1.msra.mxu0 0.0
        %1509 = vmatprep.subr.mxu0 0.0
        %1510 = vmatpush1.msra.mxu0 0.0
        %1511 = vmatprep.subr.mxu0 0.0
        %1512 = vmatpush1.msra.mxu0 0.0
        %1513 = vmatprep.subr.mxu0 0.0
        %1514 = vmatpush1.msra.mxu0 0.0
        %1515 = vmatprep.mubr.f32.mxu0 0.0
        %1516 = vmatmul.mubr.f32.gmra.mrb[0].mxu0 %v1449
        %v1517 = vpop.f32.mrb[0].mxu0
        %v1518 = vadd.f32 0.0, %v1517
        %v1519 = vpop.f32.mrb[0].mxu0
        %1520 = vdwg.mxu0
        %1521 = vrot.lane.b32.xlu0 %v484, 96
        %v1522 = vpop.permute.xlu0 %1521
        %1523 = vrot.lane.b32.xlu0 %v555, 64
        %v1524 = vpop.permute.xlu0 %1523
        %v1525 = vsel %vm411, %v1522, 0
        %v1527 = vsel %vm411, %v1524, 0
        %1529 = vmatprep.subr.mxu0 0.0
        %1530 = vmatpush1.xpose.msra.mxu0 %v1527
        %1531 = vmatprep.subr.mxu0 0.0
        %1532 = vmatpush1.xpose.msra.mxu0 0.0
        %1533 = vmatprep.subr.mxu0 0.0
        %1534 = vmatpush1.xpose.msra.mxu0 0.0
        %1535 = vmatprep.subr.mxu0 0.0
        %1536 = vmatpush1.xpose.msra.mxu0 0.0
        %1537 = vmatprep.subr.mxu0 0.0
        %1538 = vmatpush1.xpose.msra.mxu0 0.0
        %1539 = vmatprep.subr.mxu0 0.0
        %1540 = vmatpush1.xpose.msra.mxu0 0.0
        %1541 = vmatprep.subr.mxu0 0.0
        %1542 = vmatpush1.xpose.msra.mxu0 0.0
        %1543 = vmatprep.subr.mxu0 0.0
        %1544 = vmatpush1.xpose.msra.mxu0 0.0
        %1545 = vmatprep.subr.mxu0 0.0
        %1546 = vmatpush1.xpose.msra.mxu0 0.0
        %1547 = vmatprep.subr.mxu0 0.0
        %1548 = vmatpush1.xpose.msra.mxu0 0.0
        %1549 = vmatprep.subr.mxu0 0.0
        %1550 = vmatpush1.xpose.msra.mxu0 0.0
        %1551 = vmatprep.subr.mxu0 0.0
        %1552 = vmatpush1.xpose.msra.mxu0 0.0
        %1553 = vmatprep.subr.mxu0 0.0
        %1554 = vmatpush1.xpose.msra.mxu0 0.0
        %1555 = vmatprep.subr.mxu0 0.0
        %1556 = vmatpush1.xpose.msra.mxu0 0.0
        %1557 = vmatprep.subr.mxu0 0.0
        %1558 = vmatpush1.xpose.msra.mxu0 0.0
        %1559 = vmatprep.subr.mxu0 0.0
        %1560 = vmatpush1.xpose.msra.mxu0 0.0
        %1561 = vmatprep.subr.mxu0 0.0
        %1562 = vmatpush1.xpose.msra.mxu0 0.0
        %1563 = vmatprep.subr.mxu0 0.0
        %1564 = vmatpush1.xpose.msra.mxu0 0.0
        %1565 = vmatprep.subr.mxu0 0.0
        %1566 = vmatpush1.xpose.msra.mxu0 0.0
        %1567 = vmatprep.subr.mxu0 0.0
        %1568 = vmatpush1.xpose.msra.mxu0 0.0
        %1569 = vmatprep.subr.mxu0 0.0
        %1570 = vmatpush1.xpose.msra.mxu0 0.0
        %1571 = vmatprep.subr.mxu0 0.0
        %1572 = vmatpush1.xpose.msra.mxu0 0.0
        %1573 = vmatprep.subr.mxu0 0.0
        %1574 = vmatpush1.xpose.msra.mxu0 0.0
        %1575 = vmatprep.subr.mxu0 0.0
        %1576 = vmatpush1.xpose.msra.mxu0 0.0
        %1577 = vmatprep.subr.mxu0 0.0
        %1578 = vmatpush1.xpose.msra.mxu0 0.0
        %1579 = vmatprep.subr.mxu0 0.0
        %1580 = vmatpush1.xpose.msra.mxu0 0.0
        %1581 = vmatprep.subr.mxu0 0.0
        %1582 = vmatpush1.xpose.msra.mxu0 0.0
        %1583 = vmatprep.subr.mxu0 0.0
        %1584 = vmatpush1.xpose.msra.mxu0 0.0
        %1585 = vmatprep.subr.mxu0 0.0
        %1586 = vmatpush1.xpose.msra.mxu0 0.0
        %1587 = vmatprep.subr.mxu0 0.0
        %1588 = vmatpush1.xpose.msra.mxu0 0.0
        %1589 = vmatprep.subr.mxu0 0.0
        %1590 = vmatpush1.xpose.msra.mxu0 0.0
        %1591 = vmatprep.subr.mxu0 0.0
        %1592 = vmatpush1.xpose.msra.mxu0 0.0
        %1593 = vmatprep.mubr.f32.mxu0 0.0
        %1594 = vmatmul.mubr.f32.gmra.mrb[0].mxu0 %v1525
        %v1595 = vpop.f32.mrb[0].mxu0
        %v1596 = vadd.f32 0.0, %v1595
        %v1597 = vpop.f32.mrb[0].mxu0
        %1598 = vdwg.mxu0
        %v1599 = vsel %vm776, %v1596, -inf
        %1600 = vmax.xlane.f32.xlu0 %v1599
        %v1601 = vpop.xlane.xlu0 %1600
        %v1602 = vsub.f32 %v1596, %v1601
        %v1603 = vmul.f32 %v1602, 1.442695
        %v1604 = vpow.pop %v1603
        %v1605 = vsel %vm776, %v1604, 0.0
        %1606 = vadd.xlane.f32.xlu0 %v1605
        %v1607 = vpop.xlane.xlu0 %1606
        %v1608 = vrcp.pop %v1607
        %v1609 = vmul.f32 %v1604, %v1608
        %1610 = vrot.lane.b32.xlu0 %v626, 32
        %v1611 = vpop.permute.xlu0 %1610
        %v1614 = vsel %vm776, %v1609, 0
        %1616 = vmatprep.subr.mxu0 0.0
        %1617 = vmatpush1.msra.mxu0 %v1611
        %1618 = vmatprep.subr.mxu0 0.0
        %1619 = vmatpush1.msra.mxu0 0.0
        %1620 = vmatprep.subr.mxu0 0.0
        %1621 = vmatpush1.msra.mxu0 0.0
        %1622 = vmatprep.subr.mxu0 0.0
        %1623 = vmatpush1.msra.mxu0 0.0
        %1624 = vmatprep.subr.mxu0 0.0
        %1625 = vmatpush1.msra.mxu0 0.0
        %1626 = vmatprep.subr.mxu0 0.0
        %1627 = vmatpush1.msra.mxu0 0.0
        %1628 = vmatprep.subr.mxu0 0.0
        %1629 = vmatpush1.msra.mxu0 0.0
        %1630 = vmatprep.subr.mxu0 0.0
        %1631 = vmatpush1.msra.mxu0 0.0
        %1632 = vmatprep.subr.mxu0 0.0
        %1633 = vmatpush1.msra.mxu0 0.0
        %1634 = vmatprep.subr.mxu0 0.0
        %1635 = vmatpush1.msra.mxu0 0.0
        %1636 = vmatprep.subr.mxu0 0.0
        %1637 = vmatpush1.msra.mxu0 0.0
        %1638 = vmatprep.subr.mxu0 0.0
        %1639 = vmatpush1.msra.mxu0 0.0
        %1640 = vmatprep.subr.mxu0 0.0
        %1641 = vmatpush1.msra.mxu0 0.0
        %1642 = vmatprep.subr.mxu0 0.0
        %1643 = vmatpush1.msra.mxu0 0.0
        %1644 = vmatprep.subr.mxu0 0.0
        %1645 = vmatpush1.msra.mxu0 0.0
        %1646 = vmatprep.subr.mxu0 0.0
        %1647 = vmatpush1.msra.mxu0 0.0
        %1648 = vmatprep.subr.mxu0 0.0
        %1649 = vmatpush1.msra.mxu0 0.0
        %1650 = vmatprep.subr.mxu0 0.0
        %1651 = vmatpush1.msra.mxu0 0.0
        %1652 = vmatprep.subr.mxu0 0.0
        %1653 = vmatpush1.msra.mxu0 0.0
        %1654 = vmatprep.subr.mxu0 0.0
        %1655 = vmatpush1.msra.mxu0 0.0
        %1656 = vmatprep.subr.mxu0 0.0
        %1657 = vmatpush1.msra.mxu0 0.0
        %1658 = vmatprep.subr.mxu0 0.0
        %1659 = vmatpush1.msra.mxu0 0.0
        %1660 = vmatprep.subr.mxu0 0.0
        %1661 = vmatpush1.msra.mxu0 0.0
        %1662 = vmatprep.subr.mxu0 0.0
        %1663 = vmatpush1.msra.mxu0 0.0
        %1664 = vmatprep.subr.mxu0 0.0
        %1665 = vmatpush1.msra.mxu0 0.0
        %1666 = vmatprep.subr.mxu0 0.0
        %1667 = vmatpush1.msra.mxu0 0.0
        %1668 = vmatprep.subr.mxu0 0.0
        %1669 = vmatpush1.msra.mxu0 0.0
        %1670 = vmatprep.subr.mxu0 0.0
        %1671 = vmatpush1.msra.mxu0 0.0
        %1672 = vmatprep.subr.mxu0 0.0
        %1673 = vmatpush1.msra.mxu0 0.0
        %1674 = vmatprep.subr.mxu0 0.0
        %1675 = vmatpush1.msra.mxu0 0.0
        %1676 = vmatprep.subr.mxu0 0.0
        %1677 = vmatpush1.msra.mxu0 0.0
        %1678 = vmatprep.subr.mxu0 0.0
        %1679 = vmatpush1.msra.mxu0 0.0
        %1680 = vmatprep.mubr.f32.mxu0 0.0
        %1681 = vmatmul.mubr.f32.gmra.mrb[0].mxu0 %v1614
        %v1682 = vpop.f32.mrb[0].mxu0
        %v1683 = vadd.f32 0.0, %v1682
        %v1684 = vpop.f32.mrb[0].mxu0
        %1685 = vdwg.mxu0
        %1686 = vrot.lane.b32.xlu0 %v484, 64
        %v1687 = vpop.permute.xlu0 %1686
        %1688 = vrot.lane.b32.xlu0 %v555, 32
        %v1689 = vpop.permute.xlu0 %1688
        %v1690 = vsel %vm411, %v1687, 0
        %v1692 = vsel %vm411, %v1689, 0
        %1694 = vmatprep.subr.mxu0 0.0
        %1695 = vmatpush1.xpose.msra.mxu0 %v1692
        %1696 = vmatprep.subr.mxu0 0.0
        %1697 = vmatpush1.xpose.msra.mxu0 0.0
        %1698 = vmatprep.subr.mxu0 0.0
        %1699 = vmatpush1.xpose.msra.mxu0 0.0
        %1700 = vmatprep.subr.mxu0 0.0
        %1701 = vmatpush1.xpose.msra.mxu0 0.0
        %1702 = vmatprep.subr.mxu0 0.0
        %1703 = vmatpush1.xpose.msra.mxu0 0.0
        %1704 = vmatprep.subr.mxu0 0.0
        %1705 = vmatpush1.xpose.msra.mxu0 0.0
        %1706 = vmatprep.subr.mxu0 0.0
        %1707 = vmatpush1.xpose.msra.mxu0 0.0
        %1708 = vmatprep.subr.mxu0 0.0
        %1709 = vmatpush1.xpose.msra.mxu0 0.0
        %1710 = vmatprep.subr.mxu0 0.0
        %1711 = vmatpush1.xpose.msra.mxu0 0.0
        %1712 = vmatprep.subr.mxu0 0.0
        %1713 = vmatpush1.xpose.msra.mxu0 0.0
        %1714 = vmatprep.subr.mxu0 0.0
        %1715 = vmatpush1.xpose.msra.mxu0 0.0
        %1716 = vmatprep.subr.mxu0 0.0
        %1717 = vmatpush1.xpose.msra.mxu0 0.0
        %1718 = vmatprep.subr.mxu0 0.0
        %1719 = vmatpush1.xpose.msra.mxu0 0.0
        %1720 = vmatprep.subr.mxu0 0.0
        %1721 = vmatpush1.xpose.msra.mxu0 0.0
        %1722 = vmatprep.subr.mxu0 0.0
        %1723 = vmatpush1.xpose.msra.mxu0 0.0
        %1724 = vmatprep.subr.mxu0 0.0
        %1725 = vmatpush1.xpose.msra.mxu0 0.0
        %1726 = vmatprep.subr.mxu0 0.0
        %1727 = vmatpush1.xpose.msra.mxu0 0.0
        %1728 = vmatprep.subr.mxu0 0.0
        %1729 = vmatpush1.xpose.msra.mxu0 0.0
        %1730 = vmatprep.subr.mxu0 0.0
        %1731 = vmatpush1.xpose.msra.mxu0 0.0
        %1732 = vmatprep.subr.mxu0 0.0
        %1733 = vmatpush1.xpose.msra.mxu0 0.0
        %1734 = vmatprep.subr.mxu0 0.0
        %1735 = vmatpush1.xpose.msra.mxu0 0.0
        %1736 = vmatprep.subr.mxu0 0.0
        %1737 = vmatpush1.xpose.msra.mxu0 0.0
        %1738 = vmatprep.subr.mxu0 0.0
        %1739 = vmatpush1.xpose.msra.mxu0 0.0
        %1740 = vmatprep.subr.mxu0 0.0
        %1741 = vmatpush1.xpose.msra.mxu0 0.0
        %1742 = vmatprep.subr.mxu0 0.0
        %1743 = vmatpush1.xpose.msra.mxu0 0.0
        %1744 = vmatprep.subr.mxu0 0.0
        %1745 = vmatpush1.xpose.msra.mxu0 0.0
        %1746 = vmatprep.subr.mxu0 0.0
        %1747 = vmatpush1.xpose.msra.mxu0 0.0
        %1748 = vmatprep.subr.mxu0 0.0
        %1749 = vmatpush1.xpose.msra.mxu0 0.0
        %1750 = vmatprep.subr.mxu0 0.0
        %1751 = vmatpush1.xpose.msra.mxu0 0.0
        %1752 = vmatprep.subr.mxu0 0.0
        %1753 = vmatpush1.xpose.msra.mxu0 0.0
        %1754 = vmatprep.subr.mxu0 0.0
        %1755 = vmatpush1.xpose.msra.mxu0 0.0
        %1756 = vmatprep.subr.mxu0 0.0
        %1757 = vmatpush1.xpose.msra.mxu0 0.0
        %1758 = vmatprep.mubr.f32.mxu0 0.0
        %1759 = vmatmul.mubr.f32.gmra.mrb[0].mxu0 %v1690
        %v1760 = vpop.f32.mrb[0].mxu0
        %v1761 = vadd.f32 0.0, %v1760
        %v1762 = vpop.f32.mrb[0].mxu0
        %1763 = vdwg.mxu0
        %v1764 = vsel %vm776, %v1761, -inf
        %1765 = vmax.xlane.f32.xlu0 %v1764
        %v1766 = vpop.xlane.xlu0 %1765
        %v1767 = vsub.f32 %v1761, %v1766
        %v1768 = vmul.f32 %v1767, 1.442695
        %v1769 = vpow.pop %v1768
        %v1770 = vsel %vm776, %v1769, 0.0
        %1771 = vadd.xlane.f32.xlu0 %v1770
        %v1772 = vpop.xlane.xlu0 %1771
        %v1773 = vrcp.pop %v1772
        %v1774 = vmul.f32 %v1769, %v1773
        %v1776 = vsel %vm776, %v1774, 0
        %1778 = vmatprep.subr.mxu0 0.0
        %1779 = vmatpush1.msra.mxu0 %v695
        %1780 = vmatprep.subr.mxu0 0.0
        %1781 = vmatpush1.msra.mxu0 0.0
        %1782 = vmatprep.subr.mxu0 0.0
        %1783 = vmatpush1.msra.mxu0 0.0
        %1784 = vmatprep.subr.mxu0 0.0
        %1785 = vmatpush1.msra.mxu0 0.0
        %1786 = vmatprep.subr.mxu0 0.0
        %1787 = vmatpush1.msra.mxu0 0.0
        %1788 = vmatprep.subr.mxu0 0.0
        %1789 = vmatpush1.msra.mxu0 0.0
        %1790 = vmatprep.subr.mxu0 0.0
        %1791 = vmatpush1.msra.mxu0 0.0
        %1792 = vmatprep.subr.mxu0 0.0
        %1793 = vmatpush1.msra.mxu0 0.0
        %1794 = vmatprep.subr.mxu0 0.0
        %1795 = vmatpush1.msra.mxu0 0.0
        %1796 = vmatprep.subr.mxu0 0.0
        %1797 = vmatpush1.msra.mxu0 0.0
        %1798 = vmatprep.subr.mxu0 0.0
        %1799 = vmatpush1.msra.mxu0 0.0
        %1800 = vmatprep.subr.mxu0 0.0
        %1801 = vmatpush1.msra.mxu0 0.0
        %1802 = vmatprep.subr.mxu0 0.0
        %1803 = vmatpush1.msra.mxu0 0.0
        %1804 = vmatprep.subr.mxu0 0.0
        %1805 = vmatpush1.msra.mxu0 0.0
        %1806 = vmatprep.subr.mxu0 0.0
        %1807 = vmatpush1.msra.mxu0 0.0
        %1808 = vmatprep.subr.mxu0 0.0
        %1809 = vmatpush1.msra.mxu0 0.0
        %1810 = vmatprep.subr.mxu0 0.0
        %1811 = vmatpush1.msra.mxu0 0.0
        %1812 = vmatprep.subr.mxu0 0.0
        %1813 = vmatpush1.msra.mxu0 0.0
        %1814 = vmatprep.subr.mxu0 0.0
        %1815 = vmatpush1.msra.mxu0 0.0
        %1816 = vmatprep.subr.mxu0 0.0
        %1817 = vmatpush1.msra.mxu0 0.0
        %1818 = vmatprep.subr.mxu0 0.0
        %1819 = vmatpush1.msra.mxu0 0.0
        %1820 = vmatprep.subr.mxu0 0.0
        %1821 = vmatpush1.msra.mxu0 0.0
        %1822 = vmatprep.subr.mxu0 0.0
        %1823 = vmatpush1.msra.mxu0 0.0
        %1824 = vmatprep.subr.mxu0 0.0
        %1825 = vmatpush1.msra.mxu0 0.0
        %1826 = vmatprep.subr.mxu0 0.0
        %1827 = vmatpush1.msra.mxu0 0.0
        %1828 = vmatprep.subr.mxu0 0.0
        %1829 = vmatpush1.msra.mxu0 0.0
        %1830 = vmatprep.subr.mxu0 0.0
        %1831 = vmatpush1.msra.mxu0 0.0
        %1832 = vmatprep.subr.mxu0 0.0
        %1833 = vmatpush1.msra.mxu0 0.0
        %1834 = vmatprep.subr.mxu0 0.0
        %1835 = vmatpush1.msra.mxu0 0.0
        %1836 = vmatprep.subr.mxu0 0.0
        %1837 = vmatpush1.msra.mxu0 0.0
        %1838 = vmatprep.subr.mxu0 0.0
        %1839 = vmatpush1.msra.mxu0 0.0
        %1840 = vmatprep.subr.mxu0 0.0
        %1841 = vmatpush1.msra.mxu0 0.0
        %1842 = vmatprep.mubr.f32.mxu0 0.0
        %1843 = vmatmul.mubr.f32.gmra.mrb[0].mxu0 %v1776
        %v1844 = vpop.f32.mrb[0].mxu0
        %v1845 = vadd.f32 0.0, %v1844
        %v1846 = vpop.f32.mrb[0].mxu0
        %1847 = vdwg.mxu0
        %1848 = vrot.lane.b32.xlu0 %v484, 32
        %v1849 = vpop.permute.xlu0 %1848
        %v1850 = vsel %vm411, %v1849, 0
        %v1852 = vsel %vm411, %v624, 0
        %1854 = vmatprep.subr.mxu0 0.0
        %1855 = vmatpush1.xpose.msra.mxu0 %v1852
        %1856 = vmatprep.subr.mxu0 0.0
        %1857 = vmatpush1.xpose.msra.mxu0 0.0
        %1858 = vmatprep.subr.mxu0 0.0
        %1859 = vmatpush1.xpose.msra.mxu0 0.0
        %1860 = vmatprep.subr.mxu0 0.0
        %1861 = vmatpush1.xpose.msra.mxu0 0.0
        %1862 = vmatprep.subr.mxu0 0.0
        %1863 = vmatpush1.xpose.msra.mxu0 0.0
        %1864 = vmatprep.subr.mxu0 0.0
        %1865 = vmatpush1.xpose.msra.mxu0 0.0
        %1866 = vmatprep.subr.mxu0 0.0
        %1867 = vmatpush1.xpose.msra.mxu0 0.0
        %1868 = vmatprep.subr.mxu0 0.0
        %1869 = vmatpush1.xpose.msra.mxu0 0.0
        %1870 = vmatprep.subr.mxu0 0.0
        %1871 = vmatpush1.xpose.msra.mxu0 0.0
        %1872 = vmatprep.subr.mxu0 0.0
        %1873 = vmatpush1.xpose.msra.mxu0 0.0
        %1874 = vmatprep.subr.mxu0 0.0
        %1875 = vmatpush1.xpose.msra.mxu0 0.0
        %1876 = vmatprep.subr.mxu0 0.0
        %1877 = vmatpush1.xpose.msra.mxu0 0.0
        %1878 = vmatprep.subr.mxu0 0.0
        %1879 = vmatpush1.xpose.msra.mxu0 0.0
        %1880 = vmatprep.subr.mxu0 0.0
        %1881 = vmatpush1.xpose.msra.mxu0 0.0
        %1882 = vmatprep.subr.mxu0 0.0
        %1883 = vmatpush1.xpose.msra.mxu0 0.0
        %1884 = vmatprep.subr.mxu0 0.0
        %1885 = vmatpush1.xpose.msra.mxu0 0.0
        %1886 = vmatprep.subr.mxu0 0.0
        %1887 = vmatpush1.xpose.msra.mxu0 0.0
        %1888 = vmatprep.subr.mxu0 0.0
        %1889 = vmatpush1.xpose.msra.mxu0 0.0
        %1890 = vmatprep.subr.mxu0 0.0
        %1891 = vmatpush1.xpose.msra.mxu0 0.0
        %1892 = vmatprep.subr.mxu0 0.0
        %1893 = vmatpush1.xpose.msra.mxu0 0.0
        %1894 = vmatprep.subr.mxu0 0.0
        %1895 = vmatpush1.xpose.msra.mxu0 0.0
        %1896 = vmatprep.subr.mxu0 0.0
        %1897 = vmatpush1.xpose.msra.mxu0 0.0
        %1898 = vmatprep.subr.mxu0 0.0
        %1899 = vmatpush1.xpose.msra.mxu0 0.0
        %1900 = vmatprep.subr.mxu0 0.0
        %1901 = vmatpush1.xpose.msra.mxu0 0.0
        %1902 = vmatprep.subr.mxu0 0.0
        %1903 = vmatpush1.xpose.msra.mxu0 0.0
        %1904 = vmatprep.subr.mxu0 0.0
        %1905 = vmatpush1.xpose.msra.mxu0 0.0
        %1906 = vmatprep.subr.mxu0 0.0
        %1907 = vmatpush1.xpose.msra.mxu0 0.0
        %1908 = vmatprep.subr.mxu0 0.0
        %1909 = vmatpush1.xpose.msra.mxu0 0.0
        %1910 = vmatprep.subr.mxu0 0.0
        %1911 = vmatpush1.xpose.msra.mxu0 0.0
        %1912 = vmatprep.subr.mxu0 0.0
        %1913 = vmatpush1.xpose.msra.mxu0 0.0
        %1914 = vmatprep.subr.mxu0 0.0
        %1915 = vmatpush1.xpose.msra.mxu0 0.0
        %1916 = vmatprep.subr.mxu0 0.0
        %1917 = vmatpush1.xpose.msra.mxu0 0.0
        %1918 = vmatprep.mubr.f32.mxu0 0.0
        %1919 = vmatmul.mubr.f32.gmra.mrb[0].mxu0 %v1850
        %v1920 = vpop.f32.mrb[0].mxu0
        %v1921 = vadd.f32 0.0, %v1920
        %v1922 = vpop.f32.mrb[0].mxu0
        %1923 = vdwg.mxu0
        %v1924 = vsel %vm776, %v1921, -inf
        %1925 = vmax.xlane.f32.xlu0 %v1924
        %v1926 = vpop.xlane.xlu0 %1925
        %v1927 = vsub.f32 %v1921, %v1926
        %v1928 = vmul.f32 %v1927, 1.442695
        %v1929 = vpow.pop %v1928
        %v1930 = vsel %vm776, %v1929, 0.0
        %1931 = vadd.xlane.f32.xlu0 %v1930
        %v1932 = vpop.xlane.xlu0 %1931
        %v1933 = vrcp.pop %v1932
        %v1934 = vmul.f32 %v1929, %v1933
        %1936 = vrot.lane.b32.xlu0 %v695, 96
        %v1937 = vpop.permute.xlu0 %1936
        %v1940 = vsel %vm776, %v1934, 0
        %1942 = vmatprep.subr.mxu0 0.0
        %1943 = vmatpush1.msra.mxu0 %v1937
        %1944 = vmatprep.subr.mxu0 0.0
        %1945 = vmatpush1.msra.mxu0 0.0
        %1946 = vmatprep.subr.mxu0 0.0
        %1947 = vmatpush1.msra.mxu0 0.0
        %1948 = vmatprep.subr.mxu0 0.0
        %1949 = vmatpush1.msra.mxu0 0.0
        %1950 = vmatprep.subr.mxu0 0.0
        %1951 = vmatpush1.msra.mxu0 0.0
        %1952 = vmatprep.subr.mxu0 0.0
        %1953 = vmatpush1.msra.mxu0 0.0
        %1954 = vmatprep.subr.mxu0 0.0
        %1955 = vmatpush1.msra.mxu0 0.0
        %1956 = vmatprep.subr.mxu0 0.0
        %1957 = vmatpush1.msra.mxu0 0.0
        %1958 = vmatprep.subr.mxu0 0.0
        %1959 = vmatpush1.msra.mxu0 0.0
        %1960 = vmatprep.subr.mxu0 0.0
        %1961 = vmatpush1.msra.mxu0 0.0
        %1962 = vmatprep.subr.mxu0 0.0
        %1963 = vmatpush1.msra.mxu0 0.0
        %1964 = vmatprep.subr.mxu0 0.0
        %1965 = vmatpush1.msra.mxu0 0.0
        %1966 = vmatprep.subr.mxu0 0.0
        %1967 = vmatpush1.msra.mxu0 0.0
        %1968 = vmatprep.subr.mxu0 0.0
        %1969 = vmatpush1.msra.mxu0 0.0
        %1970 = vmatprep.subr.mxu0 0.0
        %1971 = vmatpush1.msra.mxu0 0.0
        %1972 = vmatprep.subr.mxu0 0.0
        %1973 = vmatpush1.msra.mxu0 0.0
        %1974 = vmatprep.subr.mxu0 0.0
        %1975 = vmatpush1.msra.mxu0 0.0
        %1976 = vmatprep.subr.mxu0 0.0
        %1977 = vmatpush1.msra.mxu0 0.0
        %1978 = vmatprep.subr.mxu0 0.0
        %1979 = vmatpush1.msra.mxu0 0.0
        %1980 = vmatprep.subr.mxu0 0.0
        %1981 = vmatpush1.msra.mxu0 0.0
        %1982 = vmatprep.subr.mxu0 0.0
        %1983 = vmatpush1.msra.mxu0 0.0
        %1984 = vmatprep.subr.mxu0 0.0
        %1985 = vmatpush1.msra.mxu0 0.0
        %1986 = vmatprep.subr.mxu0 0.0
        %1987 = vmatpush1.msra.mxu0 0.0
        %1988 = vmatprep.subr.mxu0 0.0
        %1989 = vmatpush1.msra.mxu0 0.0
        %1990 = vmatprep.subr.mxu0 0.0
        %1991 = vmatpush1.msra.mxu0 0.0
        %1992 = vmatprep.subr.mxu0 0.0
        %1993 = vmatpush1.msra.mxu0 0.0
        %1994 = vmatprep.subr.mxu0 0.0
        %1995 = vmatpush1.msra.mxu0 0.0
        %1996 = vmatprep.subr.mxu0 0.0
        %1997 = vmatpush1.msra.mxu0 0.0
        %1998 = vmatprep.subr.mxu0 0.0
        %1999 = vmatpush1.msra.mxu0 0.0
        %2000 = vmatprep.subr.mxu0 0.0
        %2001 = vmatpush1.msra.mxu0 0.0
        %2002 = vmatprep.subr.mxu0 0.0
        %2003 = vmatpush1.msra.mxu0 0.0
        %2004 = vmatprep.subr.mxu0 0.0
        %2005 = vmatpush1.msra.mxu0 0.0
        %2006 = vmatprep.mubr.f32.mxu0 0.0
        %2007 = vmatmul.mubr.f32.gmra.mrb[0].mxu0 %v1940
        %v2008 = vpop.f32.mrb[0].mxu0
        %v2009 = vadd.f32 0.0, %v2008
        %v2010 = vpop.f32.mrb[0].mxu0
        %2011 = vdwg.mxu0
        %2012 = vrot.lane.b32.xlu0 %v624, 96
        %v2013 = vpop.permute.xlu0 %2012
        %v2014 = vsel %vm411, %v553, 0
        %v2016 = vsel %vm411, %v2013, 0
        %2018 = vmatprep.subr.mxu0 0.0
        %2019 = vmatpush1.xpose.msra.mxu0 %v2016
        %2020 = vmatprep.subr.mxu0 0.0
        %2021 = vmatpush1.xpose.msra.mxu0 0.0
        %2022 = vmatprep.subr.mxu0 0.0
        %2023 = vmatpush1.xpose.msra.mxu0 0.0
        %2024 = vmatprep.subr.mxu0 0.0
        %2025 = vmatpush1.xpose.msra.mxu0 0.0
        %2026 = vmatprep.subr.mxu0 0.0
        %2027 = vmatpush1.xpose.msra.mxu0 0.0
        %2028 = vmatprep.subr.mxu0 0.0
        %2029 = vmatpush1.xpose.msra.mxu0 0.0
        %2030 = vmatprep.subr.mxu0 0.0
        %2031 = vmatpush1.xpose.msra.mxu0 0.0
        %2032 = vmatprep.subr.mxu0 0.0
        %2033 = vmatpush1.xpose.msra.mxu0 0.0
        %2034 = vmatprep.subr.mxu0 0.0
        %2035 = vmatpush1.xpose.msra.mxu0 0.0
        %2036 = vmatprep.subr.mxu0 0.0
        %2037 = vmatpush1.xpose.msra.mxu0 0.0
        %2038 = vmatprep.subr.mxu0 0.0
        %2039 = vmatpush1.xpose.msra.mxu0 0.0
        %2040 = vmatprep.subr.mxu0 0.0
        %2041 = vmatpush1.xpose.msra.mxu0 0.0
        %2042 = vmatprep.subr.mxu0 0.0
        %2043 = vmatpush1.xpose.msra.mxu0 0.0
        %2044 = vmatprep.subr.mxu0 0.0
        %2045 = vmatpush1.xpose.msra.mxu0 0.0
        %2046 = vmatprep.subr.mxu0 0.0
        %2047 = vmatpush1.xpose.msra.mxu0 0.0
        %2048 = vmatprep.subr.mxu0 0.0
        %2049 = vmatpush1.xpose.msra.mxu0 0.0
        %2050 = vmatprep.subr.mxu0 0.0
        %2051 = vmatpush1.xpose.msra.mxu0 0.0
        %2052 = vmatprep.subr.mxu0 0.0
        %2053 = vmatpush1.xpose.msra.mxu0 0.0
        %2054 = vmatprep.subr.mxu0 0.0
        %2055 = vmatpush1.xpose.msra.mxu0 0.0
        %2056 = vmatprep.subr.mxu0 0.0
        %2057 = vmatpush1.xpose.msra.mxu0 0.0
        %2058 = vmatprep.subr.mxu0 0.0
        %2059 = vmatpush1.xpose.msra.mxu0 0.0
        %2060 = vmatprep.subr.mxu0 0.0
        %2061 = vmatpush1.xpose.msra.mxu0 0.0
        %2062 = vmatprep.subr.mxu0 0.0
        %2063 = vmatpush1.xpose.msra.mxu0 0.0
        %2064 = vmatprep.subr.mxu0 0.0
        %2065 = vmatpush1.xpose.msra.mxu0 0.0
        %2066 = vmatprep.subr.mxu0 0.0
        %2067 = vmatpush1.xpose.msra.mxu0 0.0
        %2068 = vmatprep.subr.mxu0 0.0
        %2069 = vmatpush1.xpose.msra.mxu0 0.0
        %2070 = vmatprep.subr.mxu0 0.0
        %2071 = vmatpush1.xpose.msra.mxu0 0.0
        %2072 = vmatprep.subr.mxu0 0.0
        %2073 = vmatpush1.xpose.msra.mxu0 0.0
        %2074 = vmatprep.subr.mxu0 0.0
        %2075 = vmatpush1.xpose.msra.mxu0 0.0
        %2076 = vmatprep.subr.mxu0 0.0
        %2077 = vmatpush1.xpose.msra.mxu0 0.0
        %2078 = vmatprep.subr.mxu0 0.0
        %2079 = vmatpush1.xpose.msra.mxu0 0.0
        %2080 = vmatprep.subr.mxu0 0.0
        %2081 = vmatpush1.xpose.msra.mxu0 0.0
        %2082 = vmatprep.mubr.f32.mxu0 0.0
        %2083 = vmatmul.mubr.f32.gmra.mrb[0].mxu0 %v2014
        %v2084 = vpop.f32.mrb[0].mxu0
        %v2085 = vadd.f32 0.0, %v2084
        %v2086 = vpop.f32.mrb[0].mxu0
        %2087 = vdwg.mxu0
        %v2088 = vsel %vm776, %v2085, -inf
        %2089 = vmax.xlane.f32.xlu0 %v2088
        %v2090 = vpop.xlane.xlu0 %2089
        %v2091 = vsub.f32 %v2085, %v2090
        %v2092 = vmul.f32 %v2091, 1.442695
        %v2093 = vpow.pop %v2092
        %v2094 = vsel %vm776, %v2093, 0.0
        %2095 = vadd.xlane.f32.xlu0 %v2094
        %v2096 = vpop.xlane.xlu0 %2095
        %v2097 = vrcp.pop %v2096
        %v2098 = vmul.f32 %v2093, %v2097
        %2099 = vrot.lane.b32.xlu0 %v695, 64
        %v2100 = vpop.permute.xlu0 %2099
        %v2103 = vsel %vm776, %v2098, 0
        %2105 = vmatprep.subr.mxu0 0.0
        %2106 = vmatpush1.msra.mxu0 %v2100
        %2107 = vmatprep.subr.mxu0 0.0
        %2108 = vmatpush1.msra.mxu0 0.0
        %2109 = vmatprep.subr.mxu0 0.0
        %2110 = vmatpush1.msra.mxu0 0.0
        %2111 = vmatprep.subr.mxu0 0.0
        %2112 = vmatpush1.msra.mxu0 0.0
        %2113 = vmatprep.subr.mxu0 0.0
        %2114 = vmatpush1.msra.mxu0 0.0
        %2115 = vmatprep.subr.mxu0 0.0
        %2116 = vmatpush1.msra.mxu0 0.0
        %2117 = vmatprep.subr.mxu0 0.0
        %2118 = vmatpush1.msra.mxu0 0.0
        %2119 = vmatprep.subr.mxu0 0.0
        %2120 = vmatpush1.msra.mxu0 0.0
        %2121 = vmatprep.subr.mxu0 0.0
        %2122 = vmatpush1.msra.mxu0 0.0
        %2123 = vmatprep.subr.mxu0 0.0
        %2124 = vmatpush1.msra.mxu0 0.0
        %2125 = vmatprep.subr.mxu0 0.0
        %2126 = vmatpush1.msra.mxu0 0.0
        %2127 = vmatprep.subr.mxu0 0.0
        %2128 = vmatpush1.msra.mxu0 0.0
        %2129 = vmatprep.subr.mxu0 0.0
        %2130 = vmatpush1.msra.mxu0 0.0
        %2131 = vmatprep.subr.mxu0 0.0
        %2132 = vmatpush1.msra.mxu0 0.0
        %2133 = vmatprep.subr.mxu0 0.0
        %2134 = vmatpush1.msra.mxu0 0.0
        %2135 = vmatprep.subr.mxu0 0.0
        %2136 = vmatpush1.msra.mxu0 0.0
        %2137 = vmatprep.subr.mxu0 0.0
        %2138 = vmatpush1.msra.mxu0 0.0
        %2139 = vmatprep.subr.mxu0 0.0
        %2140 = vmatpush1.msra.mxu0 0.0
        %2141 = vmatprep.subr.mxu0 0.0
        %2142 = vmatpush1.msra.mxu0 0.0
        %2143 = vmatprep.subr.mxu0 0.0
        %2144 = vmatpush1.msra.mxu0 0.0
        %2145 = vmatprep.subr.mxu0 0.0
        %2146 = vmatpush1.msra.mxu0 0.0
        %2147 = vmatprep.subr.mxu0 0.0
        %2148 = vmatpush1.msra.mxu0 0.0
        %2149 = vmatprep.subr.mxu0 0.0
        %2150 = vmatpush1.msra.mxu0 0.0
        %2151 = vmatprep.subr.mxu0 0.0
        %2152 = vmatpush1.msra.mxu0 0.0
        %2153 = vmatprep.subr.mxu0 0.0
        %2154 = vmatpush1.msra.mxu0 0.0
        %2155 = vmatprep.subr.mxu0 0.0
        %2156 = vmatpush1.msra.mxu0 0.0
        %2157 = vmatprep.subr.mxu0 0.0
        %2158 = vmatpush1.msra.mxu0 0.0
        %2159 = vmatprep.subr.mxu0 0.0
        %2160 = vmatpush1.msra.mxu0 0.0
        %2161 = vmatprep.subr.mxu0 0.0
        %2162 = vmatpush1.msra.mxu0 0.0
        %2163 = vmatprep.subr.mxu0 0.0
        %2164 = vmatpush1.msra.mxu0 0.0
        %2165 = vmatprep.subr.mxu0 0.0
        %2166 = vmatpush1.msra.mxu0 0.0
        %2167 = vmatprep.subr.mxu0 0.0
        %2168 = vmatpush1.msra.mxu0 0.0
        %2169 = vmatprep.mubr.f32.mxu0 0.0
        %2170 = vmatmul.mubr.f32.gmra.mrb[0].mxu0 %v2103
        %v2171 = vpop.f32.mrb[0].mxu0
        %v2172 = vadd.f32 0.0, %v2171
        %v2173 = vpop.f32.mrb[0].mxu0
        %2174 = vdwg.mxu0
        %2176 = vrot.lane.b32.xlu0 %v1027, 32
        %v2177 = vpop.permute.xlu0 %2176
        %2180 = vrot.lane.b32.xlu0 %v1189, 64
        %v2181 = vpop.permute.xlu0 %2180
        %2184 = vrot.lane.b32.xlu0 %v1354, 96
        %v2185 = vpop.permute.xlu0 %2184
        %2188 = vrot.lane.b32.xlu0 %v1683, 32
        %v2189 = vpop.permute.xlu0 %2188
        %2192 = vrot.lane.b32.xlu0 %v1845, 64
        %v2193 = vpop.permute.xlu0 %2192
        %2196 = vrot.lane.b32.xlu0 %v2009, 96
        %v2197 = vpop.permute.xlu0 %2196
        %v2199 = vsel %vm411, %v862, %v2177
        %vm2200 = vcmask 523264
        %v2201 = vsel %vm2200, %v2199, %v2181
        %vm2202 = vcmask 785408
        %v2203 = vsel %vm2202, %v2201, %v2185
        %v2204 = vsel %vm411, %v1518, %v2189
        %v2205 = vsel %vm2200, %v2204, %v2193
        %v2206 = vsel %vm2202, %v2205, %v2197
        %v2207 = vld [vmem:[%s2] sm:$0xff]
        %v2208 = vld [vmem:[%s2 + $0x8] sm:$0xff]
        %v2209 = vld [vmem:[%s2 + $0x10] sm:$0xff]
        %v2210 = vld [vmem:[%s2 + $0x18] sm:$0xff]
        %v2211 = vld [vmem:[%s2 + $0x20] sm:$0xff]
        %v2212 = vld [vmem:[%s2 + $0x28] sm:$0xff]
        %v2213 = vld [vmem:[%s2 + $0x30] sm:$0xff]
        %v2214 = vld [vmem:[%s2 + $0x38] sm:$0xff]
        %v2215 = vld [vmem:[%s2 + $0x40] sm:$0xff]
        %v2216 = vld [vmem:[%s2 + $0x48] sm:$0xff]
        %v2217 = vld [vmem:[%s2 + $0x50] sm:$0xff]
        %v2218 = vld [vmem:[%s2 + $0x58] sm:$0xff]
        %v2219 = vld [vmem:[%s2 + $0x60] sm:$0xff]
        %v2220 = vld [vmem:[%s2 + $0x68] sm:$0xff]
        %v2221 = vld [vmem:[%s2 + $0x70] sm:$0xff]
        %v2222 = vld [vmem:[%s2 + $0x78] sm:$0xff]
        %v2223 = vld [vmem:[%s2 + $0x80] sm:$0xff]
        %v2224 = vld [vmem:[%s2 + $0x88] sm:$0xff]
        %v2225 = vld [vmem:[%s2 + $0x90] sm:$0xff]
        %v2226 = vld [vmem:[%s2 + $0x98] sm:$0xff]
        %v2227 = vld [vmem:[%s2 + $0xa0] sm:$0xff]
        %v2228 = vld [vmem:[%s2 + $0xa8] sm:$0xff]
        %v2229 = vld [vmem:[%s2 + $0xb0] sm:$0xff]
        %v2230 = vld [vmem:[%s2 + $0xb8] sm:$0xff]
        %v2231 = vld [vmem:[%s2 + $0xc0] sm:$0xff]
        %v2232 = vld [vmem:[%s2 + $0xc8] sm:$0xff]
        %v2233 = vld [vmem:[%s2 + $0xd0] sm:$0xff]
        %v2234 = vld [vmem:[%s2 + $0xd8] sm:$0xff]
        %v2235 = vld [vmem:[%s2 + $0xe0] sm:$0xff]
        %v2236 = vld [vmem:[%s2 + $0xe8] sm:$0xff]
        %v2237 = vld [vmem:[%s2 + $0xf0] sm:$0xff]
        %v2238 = vld [vmem:[%s2 + $0xf8] sm:$0xff]
        %v2239 = vld [vmem:[%s2 + $0x100] sm:$0xff]
        %v2240 = vld [vmem:[%s2 + $0x108] sm:$0xff]
        %v2241 = vld [vmem:[%s2 + $0x110] sm:$0xff]
        %v2242 = vld [vmem:[%s2 + $0x118] sm:$0xff]
        %v2244 = vsel %vm411, %v2172, 0
        %2246 = vmatprep.subr.mxu0 0.0
        %2247 = vmatpush1.msra.mxu0 %v2207
        %2248 = vmatprep.subr.mxu0 0.0
        %2249 = vmatpush1.msra.mxu0 %v2208
        %2250 = vmatprep.subr.mxu0 0.0
        %2251 = vmatpush1.msra.mxu0 %v2209
        %2252 = vmatprep.subr.mxu0 0.0
        %2253 = vmatpush1.msra.mxu0 %v2210
        %2254 = vmatprep.subr.mxu0 0.0
        %2255 = vmatpush1.msra.mxu0 %v2211
        %2256 = vmatprep.subr.mxu0 0.0
        %2257 = vmatpush1.msra.mxu0 %v2212
        %2258 = vmatprep.subr.mxu0 0.0
        %2259 = vmatpush1.msra.mxu0 %v2213
        %2260 = vmatprep.subr.mxu0 0.0
        %2261 = vmatpush1.msra.mxu0 %v2214
        %2262 = vmatprep.subr.mxu0 0.0
        %2263 = vmatpush1.msra.mxu0 %v2215
        %2264 = vmatprep.subr.mxu0 0.0
        %2265 = vmatpush1.msra.mxu0 %v2216
        %2266 = vmatprep.subr.mxu0 0.0
        %2267 = vmatpush1.msra.mxu0 %v2217
        %2268 = vmatprep.subr.mxu0 0.0
        %2269 = vmatpush1.msra.mxu0 %v2218
        %2270 = vmatprep.subr.mxu0 0.0
        %2271 = vmatpush1.msra.mxu0 %v2219
        %2272 = vmatprep.subr.mxu0 0.0
        %2273 = vmatpush1.msra.mxu0 %v2220
        %2274 = vmatprep.subr.mxu0 0.0
        %2275 = vmatpush1.msra.mxu0 %v2221
        %2276 = vmatprep.subr.mxu0 0.0
        %2277 = vmatpush1.msra.mxu0 %v2222
        %2278 = vmatprep.subr.mxu0 0.0
        %2279 = vmatpush1.msra.mxu0 %v2223
        %2280 = vmatprep.subr.mxu0 0.0
        %2281 = vmatpush1.msra.mxu0 %v2224
        %2282 = vmatprep.subr.mxu0 0.0
        %2283 = vmatpush1.msra.mxu0 %v2225
        %2284 = vmatprep.subr.mxu0 0.0
        %2285 = vmatpush1.msra.mxu0 %v2226
        %2286 = vmatprep.subr.mxu0 0.0
        %2287 = vmatpush1.msra.mxu0 %v2227
        %2288 = vmatprep.subr.mxu0 0.0
        %2289 = vmatpush1.msra.mxu0 %v2228
        %2290 = vmatprep.subr.mxu0 0.0
        %2291 = vmatpush1.msra.mxu0 %v2229
        %2292 = vmatprep.subr.mxu0 0.0
        %2293 = vmatpush1.msra.mxu0 %v2230
        %2294 = vmatprep.subr.mxu0 0.0
        %2295 = vmatpush1.msra.mxu0 %v2231
        %2296 = vmatprep.subr.mxu0 0.0
        %2297 = vmatpush1.msra.mxu0 %v2232
        %2298 = vmatprep.subr.mxu0 0.0
        %2299 = vmatpush1.msra.mxu0 %v2233
        %2300 = vmatprep.subr.mxu0 0.0
        %2301 = vmatpush1.msra.mxu0 %v2234
        %2302 = vmatprep.subr.mxu0 0.0
        %2303 = vmatpush1.msra.mxu0 %v2235
        %2304 = vmatprep.subr.mxu0 0.0
        %2305 = vmatpush1.msra.mxu0 %v2236
        %2306 = vmatprep.subr.mxu0 0.0
        %2307 = vmatpush1.msra.mxu0 %v2237
        %2308 = vmatprep.subr.mxu0 0.0
        %2309 = vmatpush1.msra.mxu0 %v2238
        %2310 = vmatprep.mubr.f32.mxu0 %v2206
        %2311 = vmatmul.mubr.f32.gmra.mrb[0].mxu0 %v2203
        %v2312 = vpop.f32.mrb[0].mxu0
        %v2313 = vadd.f32 %v382, %v2312
        %v2314 = vpop.f32.mrb[0].mxu0
        %2315 = vdwg.mxu0
        %2316 = vmatprep.subr.mxu0 0.0
        %2317 = vmatpush1.msra.mxu0 %v2239
        %2318 = vmatprep.subr.mxu0 0.0
        %2319 = vmatpush1.msra.mxu0 %v2240
        %2320 = vmatprep.subr.mxu0 0.0
        %2321 = vmatpush1.msra.mxu0 %v2241
        %2322 = vmatprep.subr.mxu0 0.0
        %2323 = vmatpush1.msra.mxu0 %v2242
        %2324 = vmatprep.subr.mxu0 0.0
        %2325 = vmatpush1.msra.mxu0 0.0
        %2326 = vmatprep.subr.mxu0 0.0
        %2327 = vmatpush1.msra.mxu0 0.0
        %2328 = vmatprep.subr.mxu0 0.0
        %2329 = vmatpush1.msra.mxu0 0.0
        %2330 = vmatprep.subr.mxu0 0.0
        %2331 = vmatpush1.msra.mxu0 0.0
        %2332 = vmatprep.subr.mxu0 0.0
        %2333 = vmatpush1.msra.mxu0 0.0
        %2334 = vmatprep.subr.mxu0 0.0
        %2335 = vmatpush1.msra.mxu0 0.0
        %2336 = vmatprep.subr.mxu0 0.0
        %2337 = vmatpush1.msra.mxu0 0.0
        %2338 = vmatprep.subr.mxu0 0.0
        %2339 = vmatpush1.msra.mxu0 0.0
        %2340 = vmatprep.subr.mxu0 0.0
        %2341 = vmatpush1.msra.mxu0 0.0
        %2342 = vmatprep.subr.mxu0 0.0
        %2343 = vmatpush1.msra.mxu0 0.0
        %2344 = vmatprep.subr.mxu0 0.0
        %2345 = vmatpush1.msra.mxu0 0.0
        %2346 = vmatprep.subr.mxu0 0.0
        %2347 = vmatpush1.msra.mxu0 0.0
        %2348 = vmatprep.subr.mxu0 0.0
        %2349 = vmatpush1.msra.mxu0 0.0
        %2350 = vmatprep.subr.mxu0 0.0
        %2351 = vmatpush1.msra.mxu0 0.0
        %2352 = vmatprep.subr.mxu0 0.0
        %2353 = vmatpush1.msra.mxu0 0.0
        %2354 = vmatprep.subr.mxu0 0.0
        %2355 = vmatpush1.msra.mxu0 0.0
        %2356 = vmatprep.subr.mxu0 0.0
        %2357 = vmatpush1.msra.mxu0 0.0
        %2358 = vmatprep.subr.mxu0 0.0
        %2359 = vmatpush1.msra.mxu0 0.0
        %2360 = vmatprep.subr.mxu0 0.0
        %2361 = vmatpush1.msra.mxu0 0.0
        %2362 = vmatprep.subr.mxu0 0.0
        %2363 = vmatpush1.msra.mxu0 0.0
        %2364 = vmatprep.subr.mxu0 0.0
        %2365 = vmatpush1.msra.mxu0 0.0
        %2366 = vmatprep.subr.mxu0 0.0
        %2367 = vmatpush1.msra.mxu0 0.0
        %2368 = vmatprep.subr.mxu0 0.0
        %2369 = vmatpush1.msra.mxu0 0.0
        %2370 = vmatprep.subr.mxu0 0.0
        %2371 = vmatpush1.msra.mxu0 0.0
        %2372 = vmatprep.subr.mxu0 0.0
        %2373 = vmatpush1.msra.mxu0 0.0
        %2374 = vmatprep.subr.mxu0 0.0
        %2375 = vmatpush1.msra.mxu0 0.0
        %2376 = vmatprep.subr.mxu0 0.0
        %2377 = vmatpush1.msra.mxu0 0.0
        %2378 = vmatprep.subr.mxu0 0.0
        %2379 = vmatpush1.msra.mxu0 0.0
        %2380 = vmatprep.mubr.f32.mxu0 0.0
        %2381 = vmatmul.mubr.f32.gmra.mrb[0].mxu0 %v2244
        %v2382 = vpop.f32.mrb[0].mxu0
        %v2383 = vadd.f32 %v2313, %v2382
        %v2384 = vpop.f32.mrb[0].mxu0
        %2385 = vdwg.mxu0
        %v2386 = vsel %vm411, %v2383, 0.0
        %2387 = vadd.xlane.f32.xlu0 %v2386
        %v2388 = vpop.xlane.xlu0 %2387
        %v2389 = vrcp.pop 32.0
        %v2390 = vmul.f32 %v2388, %v2389
        %v2391 = vsub.f32 %v2383, %v2390
        %v2392 = vmul.f32 %v2391, %v2391
        %v2393 = vsel %vm411, %v2392, 0.0
        %2394 = vadd.xlane.f32.xlu0 %v2393
        %v2395 = vpop.xlane.xlu0 %2394
        %v2396 = vmul.f32 %v2395, %v2389
        %v2397 = vadd.f32 %v2396, 1e-05
        %v2398 = vrsqrt.pop %v2397
        %v2399 = vmul.f32 %v2391, %v2398
        %v2400 = vld [vmem:[%s3] sm:$0x1]
        %v2402 = vlaneseq
        %v2403 = vshrl.u32 %v2402, 7
        %v2404 = vsub.s32 0, %v2403
        %v2405 = vrot.slane %v2400, %v2404
        %v2407 = vmul.f32 %v2399, %v2405
        %v2408 = vld [vmem:[%s4] sm:$0x1]
        %v2410 = vlaneseq
        %v2411 = vshrl.u32 %v2410, 7
        %v2412 = vsub.s32 0, %v2411
        %v2413 = vrot.slane %v2408, %v2412
        %v2415 = vadd.f32 %v2407, %v2413
        %v2416 = vld [vmem:[%s5] sm:$0xff]
        %v2417 = vld [vmem:[%s5 + $0x8] sm:$0xff]
        %v2418 = vld [vmem:[%s5 + $0x10] sm:$0xff]
        %v2419 = vld [vmem:[%s5 + $0x18] sm:$0xff]
        %v2420 = vld [vmem:[%s5 + $0x20] sm:$0xff]
        %v2421 = vld [vmem:[%s5 + $0x28] sm:$0xff]
        %v2422 = vld [vmem:[%s5 + $0x30] sm:$0xff]
        %v2423 = vld [vmem:[%s5 + $0x38] sm:$0xff]
        %v2424 = vld [vmem:[%s6] sm:$0x3]
        %v2426 = vlaneseq
        %v2427 = vshrl.u32 %v2426, 7
        %v2428 = vsub.s32 0, %v2427
        %v2429 = vrot.slane %v2424, %v2428
        %v2430 = vlaneseq
        %v2431 = vshrl.u32 %v2430, 7
        %v2432 = vsub.s32 1, %v2431
        %v2433 = vrot.slane %v2424, %v2432
        %v2437 = vsel %vm411, %v2415, 0
        %2439 = vmatprep.subr.mxu0 %v2417
        %2440 = vmatpush1.msra.mxu0 %v2416
        %2441 = vmatprep.subr.mxu0 %v2419
        %2442 = vmatpush1.msra.mxu0 %v2418
        %2443 = vmatprep.subr.mxu0 %v2421
        %2444 = vmatpush1.msra.mxu0 %v2420
        %2445 = vmatprep.subr.mxu0 %v2423
        %2446 = vmatpush1.msra.mxu0 %v2422
        %2447 = vmatprep.subr.mxu0 0.0
        %2448 = vmatpush1.msra.mxu0 0.0
        %2449 = vmatprep.subr.mxu0 0.0
        %2450 = vmatpush1.msra.mxu0 0.0
        %2451 = vmatprep.subr.mxu0 0.0
        %2452 = vmatpush1.msra.mxu0 0.0
        %2453 = vmatprep.subr.mxu0 0.0
        %2454 = vmatpush1.msra.mxu0 0.0
        %2455 = vmatprep.subr.mxu0 0.0
        %2456 = vmatpush1.msra.mxu0 0.0
        %2457 = vmatprep.subr.mxu0 0.0
        %2458 = vmatpush1.msra.mxu0 0.0
        %2459 = vmatprep.subr.mxu0 0.0
        %2460 = vmatpush1.msra.mxu0 0.0
        %2461 = vmatprep.subr.mxu0 0.0
        %2462 = vmatpush1.msra.mxu0 0.0
        %2463 = vmatprep.subr.mxu0 0.0
        %2464 = vmatpush1.msra.mxu0 0.0
        %2465 = vmatprep.subr.mxu0 0.0
        %2466 = vmatpush1.msra.mxu0 0.0
        %2467 = vmatprep.subr.mxu0 0.0
        %2468 = vmatpush1.msra.mxu0 0.0
        %2469 = vmatprep.subr.mxu0 0.0
        %2470 = vmatpush1.msra.mxu0 0.0
        %2471 = vmatprep.subr.mxu0 0.0
        %2472 = vmatpush1.msra.mxu0 0.0
        %2473 = vmatprep.subr.mxu0 0.0
        %2474 = vmatpush1.msra.mxu0 0.0
        %2475 = vmatprep.subr.mxu0 0.0
        %2476 = vmatpush1.msra.mxu0 0.0
        %2477 = vmatprep.subr.mxu0 0.0
        %2478 = vmatpush1.msra.mxu0 0.0
        %2479 = vmatprep.subr.mxu0 0.0
        %2480 = vmatpush1.msra.mxu0 0.0
        %2481 = vmatprep.subr.mxu0 0.0
        %2482 = vmatpush1.msra.mxu0 0.0
        %2483 = vmatprep.subr.mxu0 0.0
        %2484 = vmatpush1.msra.mxu0 0.0
        %2485 = vmatprep.subr.mxu0 0.0
        %2486 = vmatpush1.msra.mxu0 0.0
        %2487 = vmatprep.subr.mxu0 0.0
        %2488 = vmatpush1.msra.mxu0 0.0
        %2489 = vmatprep.subr.mxu0 0.0
        %2490 = vmatpush1.msra.mxu0 0.0
        %2491 = vmatprep.subr.mxu0 0.0
        %2492 = vmatpush1.msra.mxu0 0.0
        %2493 = vmatprep.subr.mxu0 0.0
        %2494 = vmatpush1.msra.mxu0 0.0
        %2495 = vmatprep.subr.mxu0 0.0
        %2496 = vmatpush1.msra.mxu0 0.0
        %2497 = vmatprep.subr.mxu0 0.0
        %2498 = vmatpush1.msra.mxu0 0.0
        %2499 = vmatprep.subr.mxu0 0.0
        %2500 = vmatpush1.msra.mxu0 0.0
        %2501 = vmatprep.subr.mxu0 0.0
        %2502 = vmatpush1.msra.mxu0 0.0
        %2503 = vmatprep.mubr.f32.mxu0 0.0
        %2504 = vmatmul.mubr.f32.gmra.mrb[0].mxu0 %v2437
        %v2505 = vpop.f32.mrb[0].mxu0
        %v2506 = vadd.f32 %v2429, %v2505
        %v2507 = vpop.f32.mrb[0].mxu0
        %v2508 = vadd.f32 %v2433, %v2507
        %2509 = vdwg.mxu0
        %v2510 = vmax.f32 %v2506, 0.0
        %v2511 = vmax.f32 %v2508, 0.0
        %v2512 = vld [vmem:[%s7] sm:$0xff]
        %v2513 = vld [vmem:[%s7 + $0x8] sm:$0xff]
        %v2514 = vld [vmem:[%s7 + $0x10] sm:$0xff]
        %v2515 = vld [vmem:[%s7 + $0x18] sm:$0xff]
        %v2516 = vld [vmem:[%s7 + $0x20] sm:$0xff]
        %v2517 = vld [vmem:[%s7 + $0x28] sm:$0xff]
        %v2518 = vld [vmem:[%s7 + $0x30] sm:$0xff]
        %v2519 = vld [vmem:[%s7 + $0x38] sm:$0xff]
        %v2520 = vld [vmem:[%s7 + $0x40] sm:$0xff]
        %v2521 = vld [vmem:[%s7 + $0x48] sm:$0xff]
        %v2522 = vld [vmem:[%s7 + $0x50] sm:$0xff]
        %v2523 = vld [vmem:[%s7 + $0x58] sm:$0xff]
        %v2524 = vld [vmem:[%s7 + $0x60] sm:$0xff]
        %v2525 = vld [vmem:[%s7 + $0x68] sm:$0xff]
        %v2526 = vld [vmem:[%s7 + $0x70] sm:$0xff]
        %v2527 = vld [vmem:[%s7 + $0x78] sm:$0xff]
        %v2528 = vld [vmem:[%s7 + $0x80] sm:$0xff]
        %v2529 = vld [vmem:[%s7 + $0x88] sm:$0xff]
        %v2530 = vld [vmem:[%s7 + $0x90] sm:$0xff]
        %v2531 = vld [vmem:[%s7 + $0x98] sm:$0xff]
        %v2532 = vld [vmem:[%s8] sm:$0x1]
        %v2534 = vlaneseq
        %v2535 = vshrl.u32 %v2534, 7
        %v2536 = vsub.s32 0, %v2535
        %v2537 = vrot.slane %v2532, %v2536
        %v2540 = vsel %vm411, %v2511, 0
        %2542 = vmatprep.subr.mxu0 0.0
        %2543 = vmatpush1.msra.mxu0 %v2512
        %2544 = vmatprep.subr.mxu0 0.0
        %2545 = vmatpush1.msra.mxu0 %v2513
        %2546 = vmatprep.subr.mxu0 0.0
        %2547 = vmatpush1.msra.mxu0 %v2514
        %2548 = vmatprep.subr.mxu0 0.0
        %2549 = vmatpush1.msra.mxu0 %v2515
        %2550 = vmatprep.subr.mxu0 0.0
        %2551 = vmatpush1.msra.mxu0 %v2516
        %2552 = vmatprep.subr.mxu0 0.0
        %2553 = vmatpush1.msra.mxu0 %v2517
        %2554 = vmatprep.subr.mxu0 0.0
        %2555 = vmatpush1.msra.mxu0 %v2518
        %2556 = vmatprep.subr.mxu0 0.0
        %2557 = vmatpush1.msra.mxu0 %v2519
        %2558 = vmatprep.subr.mxu0 0.0
        %2559 = vmatpush1.msra.mxu0 %v2520
        %2560 = vmatprep.subr.mxu0 0.0
        %2561 = vmatpush1.msra.mxu0 %v2521
        %2562 = vmatprep.subr.mxu0 0.0
        %2563 = vmatpush1.msra.mxu0 %v2522
        %2564 = vmatprep.subr.mxu0 0.0
        %2565 = vmatpush1.msra.mxu0 %v2523
        %2566 = vmatprep.subr.mxu0 0.0
        %2567 = vmatpush1.msra.mxu0 %v2524
        %2568 = vmatprep.subr.mxu0 0.0
        %2569 = vmatpush1.msra.mxu0 %v2525
        %2570 = vmatprep.subr.mxu0 0.0
        %2571 = vmatpush1.msra.mxu0 %v2526
        %2572 = vmatprep.subr.mxu0 0.0
        %2573 = vmatpush1.msra.mxu0 %v2527
        %2574 = vmatprep.subr.mxu0 0.0
        %2575 = vmatpush1.msra.mxu0 %v2528
        %2576 = vmatprep.subr.mxu0 0.0
        %2577 = vmatpush1.msra.mxu0 %v2529
        %2578 = vmatprep.subr.mxu0 0.0
        %2579 = vmatpush1.msra.mxu0 %v2530
        %2580 = vmatprep.subr.mxu0 0.0
        %2581 = vmatpush1.msra.mxu0 %v2531
        %2582 = vmatprep.subr.mxu0 0.0
        %2583 = vmatpush1.msra.mxu0 0.0
        %2584 = vmatprep.subr.mxu0 0.0
        %2585 = vmatpush1.msra.mxu0 0.0
        %2586 = vmatprep.subr.mxu0 0.0
        %2587 = vmatpush1.msra.mxu0 0.0
        %2588 = vmatprep.subr.mxu0 0.0
        %2589 = vmatpush1.msra.mxu0 0.0
        %2590 = vmatprep.subr.mxu0 0.0
        %2591 = vmatpush1.msra.mxu0 0.0
        %2592 = vmatprep.subr.mxu0 0.0
        %2593 = vmatpush1.msra.mxu0 0.0
        %2594 = vmatprep.subr.mxu0 0.0
        %2595 = vmatpush1.msra.mxu0 0.0
        %2596 = vmatprep.subr.mxu0 0.0
        %2597 = vmatpush1.msra.mxu0 0.0
        %2598 = vmatprep.subr.mxu0 0.0
        %2599 = vmatpush1.msra.mxu0 0.0
        %2600 = vmatprep.subr.mxu0 0.0
        %2601 = vmatpush1.msra.mxu0 0.0
        %2602 = vmatprep.subr.mxu0 0.0
        %2603 = vmatpush1.msra.mxu0 0.0
        %2604 = vmatprep.subr.mxu0 0.0
        %2605 = vmatpush1.msra.mxu0 0.0
        %2606 = vmatprep.mubr.f32.mxu0 %v2540
        %2607 = vmatmul.mubr.f32.gmra.mrb[0].mxu0 %v2510
        %v2608 = vpop.f32.mrb[0].mxu0
        %v2609 = vadd.f32 %v2537, %v2608
        %v2610 = vpop.f32.mrb[0].mxu0
        %2611 = vdwg.mxu0
        %v2612 = vadd.f32 %v2609, %v2415
        %v2613 = vsel %vm411, %v2612, 0.0
        %2614 = vadd.xlane.f32.xlu0 %v2613
        %v2615 = vpop.xlane.xlu0 %2614
        %v2616 = vmul.f32 %v2615, %v2389
        %v2617 = vsub.f32 %v2612, %v2616
        %v2618 = vmul.f32 %v2617, %v2617
        %v2619 = vsel %vm411, %v2618, 0.0
        %2620 = vadd.xlane.f32.xlu0 %v2619
        %v2621 = vpop.xlane.xlu0 %2620
        %v2622 = vmul.f32 %v2621, %v2389
        %v2623 = vadd.f32 %v2622, 1e-05
        %v2624 = vrsqrt.pop %v2623
        %v2625 = vmul.f32 %v2617, %v2624
        %v2626 = vld [vmem:[%s9] sm:$0x1]
        %v2628 = vlaneseq
        %v2629 = vshrl.u32 %v2628, 7
        %v2630 = vsub.s32 0, %v2629
        %v2631 = vrot.slane %v2626, %v2630
        %v2633 = vmul.f32 %v2625, %v2631
        %v2634 = vld [vmem:[%s10] sm:$0x1]
        %v2636 = vlaneseq
        %v2637 = vshrl.u32 %v2636, 7
        %v2638 = vsub.s32 0, %v2637
        %v2639 = vrot.slane %v2634, %v2638
        %v2641 = vadd.f32 %v2633, %v2639
        %2642 = vst.msk [vmem:[%s377] sm:$0xff] %vm411, %v2641
        %s2643 = sand.u32 %s269, 1
        %s2644 = scalar_lea.sflag [#allocation3], %s2643
        %s2645 = sand.u32 %s269, 1
        %s2646 = smul.addr %s2645, 8
        %s2647 = scalar_lea.vmem [#allocation2], %s2646
        // Predicated region
        $region65: #{tpu_custom_call.1} parent=63 // pred_check
          %p2648 = pneg %p279
        $region66: #{tpu_custom_call.1} parent=63 // pred_check_branch
          %2650 = sbr.rel (%p2648) target = $region68
        $region67: #{tpu_custom_call.1} parent=63 // pred_region
          %s2652 = ssub.s32 128, 128
          %2653 = vsyncadd %s2644, %s2652
          %s2654 = smul.addr %s25, 128
          %s2655 = scalar_lea.hbm %s11, %s2654
          %s2657 = sshll.u32 %s2647, 4
          %s2658 = int_to_ptr.vmem [resolvable:$true] %s2657
          %2660 = dma.vmem_to_hbm [thread:$0]  %s2658, 128, %s2655, %s2644
        $region68: #{tpu_custom_call.1} parent=63 // pred_fallthru
          _
      $region64: #{tpu_custom_call.1} parent=5 // pred_fallthru
        _
      %p2661 = scmp.le.s32.totalorder 2, %s20
      // Predicated region
      $region69: #{tpu_custom_call.1} parent=5 // pred_check
        %p2662 = pneg %p2661
      $region70: #{tpu_custom_call.1} parent=5 // pred_check_branch
        %2664 = sbr.rel (%p2662) target = $region72
      $region71: #{tpu_custom_call.1} parent=5 // pred_region
        %s2665 = ssub.s32 %s20, 2
        // Predicated region
        $region73: #{tpu_custom_call.1} parent=71 // pred_check
          %p2666 = pneg %p285
        $region74: #{tpu_custom_call.1} parent=71 // pred_check_branch
          %2668 = sbr.rel (%p2666) target = $region76
        $region75: #{tpu_custom_call.1} parent=71 // pred_region
          %s2669 = sand.u32 %s270, 1
          %s2670 = scalar_lea.sflag [#allocation3], %s2669
          %s2671 = sand.u32 %s270, 1
          %s2672 = smul.addr %s2671, 8
          %s2673 = scalar_lea.vmem [#allocation2], %s2672
          %2674 = dma.done %s2670, 128
        $region76: #{tpu_custom_call.1} parent=71 // pred_fallthru
          _
      $region72: #{tpu_custom_call.1} parent=5 // pred_fallthru
        _
    $region6: #{tpu_custom_call.1} parent=1 // loop_footer
      %s24 = sadd.s32 1, %s20
    $region7: #{tpu_custom_call.1} parent=1 // loop_footer_branch
      %19 = sbr.rel target = $region3
    $region8: #{tpu_custom_call.1} parent=1 // loop_exit
      _
    %2675 = vsyncpa [#allocation3], 1
    %s2676 = scalar_lea.sflag [#allocation3], 1
    %2677 = vsyncpa %s2676, 1

</llo_original>
